<compile_context>
chip_gen: v7x
topology: tpu7x:2x2x1
jax: 0.10.0
libtpu: 0.0.40
codegen_flags: <defaults>
</compile_context>

<pallas_src>
import numpy as np
import jax
import jax.numpy as jnp
from jax.experimental import pallas as pl
from jax.experimental.pallas import tpu as pltpu

WINDOW_SIZE = 11
SIGMA = 1.5
C1 = 0.01 ** 2
C2 = 0.03 ** 2


def gaussian_1d(window_size=WINDOW_SIZE, sigma=SIGMA):
    """Deterministic 1D Gaussian taps (matches create_gaussian_window's gauss)."""
    center = float(window_size // 2)
    x = np.arange(window_size, dtype=np.float32)
    g = np.exp(-((x - center) ** 2) / (2.0 * sigma ** 2)).astype(np.float32)
    g = g / g.sum()
    return g


def band_conv_matrix(n, g):
    """(n, n) banded Toeplitz M with M[i, j] = g[i - j + pad] (zero outside band).

    (x @ M)[j] = sum_k g[k] * x[j + k - pad] with zero extension, i.e. exactly a
    1-D 'same' cross-correlation with zero padding = len(g)//2 (as F.conv3d does).
    """
    win = len(g)
    pad = win // 2
    m = np.zeros((n, n), dtype=np.float32)
    for i in range(n):
        for j in range(n):
            k = i - j + pad
            if 0 <= k < win:
                m[i, j] = g[k]
    return m


def make_ssim_kernel(D):
    def kernel(x1_ref, x2_ref, mhw_ref, td_ref, o_ref):
        x1 = x1_ref[0]          # (D, H*W) f32, lane-dense
        x2 = x2_ref[0]

        # Five signals stacked along sublanes -> one MXU pass per conv stage.
        s = jnp.concatenate([x1, x2, x1 * x1, x2 * x2, x1 * x2], axis=0)  # (5D, HW)

        # HW convolution (kron(Mh, Mw)) and D convolution (kron(I5, Md^T)),
        # both as full-precision f32 MXU matmuls.
        y = jnp.dot(s, mhw_ref[...],
                    precision=jax.lax.Precision.HIGHEST,
                    preferred_element_type=jnp.float32)                   # (5D, HW)
        z = jnp.dot(td_ref[...], y,
                    precision=jax.lax.Precision.HIGHEST,
                    preferred_element_type=jnp.float32)                   # (5D, HW)

        mu1 = z[0 * D:1 * D]
        mu2 = z[1 * D:2 * D]
        e11 = z[2 * D:3 * D]
        e22 = z[3 * D:4 * D]
        e12 = z[4 * D:5 * D]

        mu1_sq = mu1 * mu1
        mu2_sq = mu2 * mu2
        mu1_mu2 = mu1 * mu2
        sigma1_sq = e11 - mu1_sq
        sigma2_sq = e22 - mu2_sq
        sigma12 = e12 - mu1_mu2

        num = (2.0 * mu1_mu2 + C1) * (2.0 * sigma12 + C2)
        den = (mu1_sq + mu2_sq + C1) * (sigma1_sq + sigma2_sq + C2)
        ssim_map = num / den

        total = jnp.sum(ssim_map)  # per-(n,c) partial sum
        # NOTE: a (1,) SMEM scalar output would be marginally leaner; kept as a
        # small VMEM tile for lowering robustness (4 KiB, off the critical path).
        o_ref[...] = jnp.broadcast_to(total, (1, 8, 128)).astype(jnp.float32)

    return kernel


def ssim_loss_3d(img1, img2, window_size=WINDOW_SIZE, channel=1, reduction='mean'):
    N, C, D, H, W = img1.shape
    assert C == channel
    g = gaussian_1d(window_size)

    # Banded conv matrices (zero padding of conv3d is absorbed here).
    Mh = band_conv_matrix(H, g)
    Mw = band_conv_matrix(W, g)
    Md = band_conv_matrix(D, g)
    M_hw = np.kron(Mh, Mw).astype(np.float32)                      # (H*W, H*W)
    T_d5 = np.kron(np.eye(5, dtype=np.float32), Md.T).astype(np.float32)  # (5D, 5D)

    G = N * C
    HW = H * W
    x1 = img1.reshape(G, D, HW).astype(jnp.float32)   # free reshape, no jnp.pad
    x2 = img2.reshape(G, D, HW).astype(jnp.float32)

    kernel = make_ssim_kernel(D)

    partial = pl.pallas_call(
        kernel,
        out_shape=jax.ShapeDtypeStruct((G, 8, 128), jnp.float32),
        grid=(G,),
        in_specs=[
            pl.BlockSpec((1, D, HW), lambda i: (i, 0, 0)),
            pl.BlockSpec((1, D, HW), lambda i: (i, 0, 0)),
            pl.BlockSpec((HW, HW), lambda i: (0, 0)),        # fetched once, resident
            pl.BlockSpec((5 * D, 5 * D), lambda i: (0, 0)),  # fetched once, resident
        ],
        out_specs=pl.BlockSpec((1, 8, 128), lambda i: (i, 0, 0)),
        compiler_params=pltpu.CompilerParams(
            dimension_semantics=("parallel",)),   # let v7x shard N*C across both TCs
    )(x1, x2, jnp.asarray(M_hw), jnp.asarray(T_d5))

    total = jnp.sum(partial[:, 0, 0])
    count = G * D * H * W
    if reduction == 'mean':
        return 1.0 - total / count
    elif reduction == 'sum':
        return 1.0 - total
    else:
        # TODO(synk): reduction='none' (return full 1 - ssim_map) not wired up here.
        raise NotImplementedError("only 'mean' and 'sum' reductions are implemented")


def ssim_loss_3d_ref(img1, img2, window_size=WINDOW_SIZE, channel=1, reduction='mean'):
    """Pure-JAX reference matching F.conv3d(groups=channel, padding=win//2)."""
    pad = window_size // 2
    g = jnp.asarray(gaussian_1d(window_size))
    g3 = jnp.einsum('i,j,k->ijk', g, g, g)
    w = jnp.broadcast_to(g3, (channel, 1) + g3.shape)

    def conv(x):
        return jax.lax.conv_general_dilated(
            x, w, window_strides=(1, 1, 1), padding=[(pad, pad)] * 3,
            dimension_numbers=('NCDHW', 'OIDHW', 'NCDHW'),
            feature_group_count=channel,
            precision=jax.lax.Precision.HIGHEST)

    mu1, mu2 = conv(img1), conv(img2)
    mu1_sq, mu2_sq, mu1_mu2 = mu1 ** 2, mu2 ** 2, mu1 * mu2
    sigma1_sq = conv(img1 ** 2) - mu1_sq
    sigma2_sq = conv(img2 ** 2) - mu2_sq
    sigma12 = conv(img1 * img2) - mu1_mu2
    ssim_map = ((2 * mu1_mu2 + C1) * (2 * sigma12 + C2) /
                ((mu1_sq + mu2_sq + C1) * (sigma1_sq + sigma2_sq + C2)))
    if reduction == 'mean':
        return 1.0 - ssim_map.mean()
    return 1.0 - ssim_map.sum()


if __name__ == "__main__":
    key = jax.random.PRNGKey(0)
    k1, k2 = jax.random.split(key)
    N, C, D, H, W = 2, 1, 16, 16, 16
    img1 = jax.random.uniform(k1, (N, C, D, H, W), dtype=jnp.float32)
    img2 = jax.random.uniform(k2, (N, C, D, H, W), dtype=jnp.float32)

    loss = jax.jit(lambda a, b: ssim_loss_3d(a, b, channel=C))(img1, img2)
    loss = jax.block_until_ready(loss)

    ref = jax.block_until_ready(ssim_loss_3d_ref(img1, img2, channel=C))
    assert jnp.isfinite(loss), "kernel produced non-finite loss"
    assert abs(float(loss) - float(ref)) < 1e-3, (float(loss), float(ref))

    print("KERNEL_OK")
</pallas_src>

<mosaic_0001>
module attributes {stable_mosaic.version = 11 : i64} {
  func.func @kernel(%arg0: i32, %arg1: memref<1x16x256xf32, #tpu.memory_space<vmem>>, %arg2: memref<1x16x256xf32, #tpu.memory_space<vmem>>, %arg3: memref<256x256xf32, #tpu.memory_space<vmem>>, %arg4: memref<80x80xf32, #tpu.memory_space<vmem>>, %arg5: memref<1x8x128xf32, #tpu.memory_space<vmem>>) attributes {dimension_semantics = [#tpu.dimension_semantics<parallel>], iteration_bounds = array<i64: 2>, scalar_prefetch = 0 : i64, scratch_operands = 0 : i64, tpu.core_type = #tpu.core_type<tc>, window_params = [{transform_indices = @transform_0, window_bounds = array<i64: 1, 16, 256>}, {transform_indices = @transform_1, window_bounds = array<i64: 1, 16, 256>}, {pipeline_mode = #tpu.pipeline_mode<synchronous>, transform_indices = @transform_2, window_bounds = array<i64: 256, 256>}, {pipeline_mode = #tpu.pipeline_mode<synchronous>, transform_indices = @transform_3, window_bounds = array<i64: 80, 80>}, {transform_indices = @transform_4, window_bounds = array<i64: 1, 8, 128>}]} {
    %c0 = arith.constant 0 : index
    %c0_0 = arith.constant 0 : index
    %c0_1 = arith.constant 0 : index
    %0 = vector.load %arg1[%c0, %c0_0, %c0_1] : memref<1x16x256xf32, #tpu.memory_space<vmem>>, vector<1x16x256xf32>
    %1 = vector.shape_cast %0 : vector<1x16x256xf32> to vector<16x256xf32>
    %c0_2 = arith.constant 0 : index
    %c0_3 = arith.constant 0 : index
    %c0_4 = arith.constant 0 : index
    %2 = vector.load %arg2[%c0_2, %c0_3, %c0_4] : memref<1x16x256xf32, #tpu.memory_space<vmem>>, vector<1x16x256xf32>
    %3 = vector.shape_cast %2 : vector<1x16x256xf32> to vector<16x256xf32>
    %4 = arith.mulf %1, %1 : vector<16x256xf32>
    %5 = arith.mulf %3, %3 : vector<16x256xf32>
    %6 = arith.mulf %1, %3 : vector<16x256xf32>
    %7 = tpu.concatenate %1, %3, %4, %5, %6 in 0 : vector<16x256xf32>, vector<16x256xf32>, vector<16x256xf32>, vector<16x256xf32>, vector<16x256xf32> -> vector<80x256xf32>
    %c0_5 = arith.constant 0 : index
    %c0_6 = arith.constant 0 : index
    %8 = vector.load %arg3[%c0_5, %c0_6] : memref<256x256xf32, #tpu.memory_space<vmem>>, vector<256x256xf32>
    %cst = arith.constant dense<0.000000e+00> : vector<80x256xf32>
    %9 = tpu.matmul %7, %8, %cst {dimension_numbers = #tpu.dot_dimension_numbers<[1], [0], [0], [1], [0, 0, 1, 1], [], []>, precision = #tpu.contract_precision<fp32>} : vector<80x256xf32>, vector<256x256xf32>, vector<80x256xf32> -> vector<80x256xf32>
    %c0_7 = arith.constant 0 : index
    %c0_8 = arith.constant 0 : index
    %10 = vector.load %arg4[%c0_7, %c0_8] : memref<80x80xf32, #tpu.memory_space<vmem>>, vector<80x80xf32>
    %cst_9 = arith.constant dense<0.000000e+00> : vector<80x256xf32>
    %11 = tpu.matmul %10, %9, %cst_9 {dimension_numbers = #tpu.dot_dimension_numbers<[1], [0], [0], [1], [0, 0, 1, 1], [], []>, precision = #tpu.contract_precision<fp32>} : vector<80x80xf32>, vector<80x256xf32>, vector<80x256xf32> -> vector<80x256xf32>
    %12 = vector.extract_strided_slice %11 {offsets = [0, 0], sizes = [16, 256], strides = [1, 1]} : vector<80x256xf32> to vector<16x256xf32>
    %13 = vector.extract_strided_slice %11 {offsets = [16, 0], sizes = [16, 256], strides = [1, 1]} : vector<80x256xf32> to vector<16x256xf32>
    %14 = vector.extract_strided_slice %11 {offsets = [32, 0], sizes = [16, 256], strides = [1, 1]} : vector<80x256xf32> to vector<16x256xf32>
    %15 = vector.extract_strided_slice %11 {offsets = [48, 0], sizes = [16, 256], strides = [1, 1]} : vector<80x256xf32> to vector<16x256xf32>
    %16 = vector.extract_strided_slice %11 {offsets = [64, 0], sizes = [16, 256], strides = [1, 1]} : vector<80x256xf32> to vector<16x256xf32>
    %17 = arith.mulf %12, %12 : vector<16x256xf32>
    %18 = arith.mulf %13, %13 : vector<16x256xf32>
    %19 = arith.mulf %12, %13 : vector<16x256xf32>
    %20 = arith.subf %14, %17 : vector<16x256xf32>
    %21 = arith.subf %15, %18 : vector<16x256xf32>
    %22 = arith.subf %16, %19 : vector<16x256xf32>
    %cst_10 = arith.constant 2.000000e+00 : f32
    %23 = vector.broadcast %cst_10 : f32 to vector<16x256xf32>
    %24 = arith.mulf %23, %19 : vector<16x256xf32>
    %cst_11 = arith.constant 9.99999974E-5 : f32
    %25 = vector.broadcast %cst_11 : f32 to vector<16x256xf32>
    %26 = arith.addf %24, %25 : vector<16x256xf32>
    %cst_12 = arith.constant 2.000000e+00 : f32
    %27 = vector.broadcast %cst_12 : f32 to vector<16x256xf32>
    %28 = arith.mulf %27, %22 : vector<16x256xf32>
    %cst_13 = arith.constant 8.99999984E-4 : f32
    %29 = vector.broadcast %cst_13 : f32 to vector<16x256xf32>
    %30 = arith.addf %28, %29 : vector<16x256xf32>
    %31 = arith.mulf %26, %30 : vector<16x256xf32>
    %32 = arith.addf %17, %18 : vector<16x256xf32>
    %cst_14 = arith.constant 9.99999974E-5 : f32
    %33 = vector.broadcast %cst_14 : f32 to vector<16x256xf32>
    %34 = arith.addf %32, %33 : vector<16x256xf32>
    %35 = arith.addf %20, %21 : vector<16x256xf32>
    %cst_15 = arith.constant 8.99999984E-4 : f32
    %36 = vector.broadcast %cst_15 : f32 to vector<16x256xf32>
    %37 = arith.addf %35, %36 : vector<16x256xf32>
    %38 = arith.mulf %34, %37 : vector<16x256xf32>
    %39 = arith.divf %31, %38 : vector<16x256xf32>
    %40 = vector.shape_cast %39 : vector<16x256xf32> to vector<1x16x256xf32>
    %cst_16 = arith.constant dense<0.000000e+00> : vector<1xf32>
    %41 = vector.multi_reduction <add>, %40, %cst_16 [1, 2] : vector<1x16x256xf32> to vector<1xf32>
    %42 = vector.shape_cast %41 : vector<1xf32> to vector<1x1x1xf32>
    %43 = vector.extract %42[0, 0, 0] : f32 from vector<1x1x1xf32>
    %44 = vector.broadcast %43 : f32 to vector<1x8x128xf32>
    %c0_17 = arith.constant 0 : index
    %c0_18 = arith.constant 0 : index
    %c0_19 = arith.constant 0 : index
    %45 = vector.load %arg5[%c0_17, %c0_18, %c0_19] : memref<1x8x128xf32, #tpu.memory_space<vmem>>, vector<1x8x128xf32>
    tpu.vector_store %arg5[%c0_17, %c0_18, %c0_19], %44 {strides = array<i32>} : memref<1x8x128xf32, #tpu.memory_space<vmem>>, vector<1x8x128xf32>,
    return
  }
  func.func @transform_0(%arg0: i32) -> (i32, i32, i32) {
    %c0_i32 = arith.constant 0 : i32
    %c0_i32_0 = arith.constant 0 : i32
    %c0_i32_1 = arith.constant 0 : i32
    return %arg0, %c0_i32, %c0_i32_0 : i32, i32, i32
  }
  func.func @transform_1(%arg0: i32) -> (i32, i32, i32) {
    %c0_i32 = arith.constant 0 : i32
    %c0_i32_0 = arith.constant 0 : i32
    %c0_i32_1 = arith.constant 0 : i32
    return %arg0, %c0_i32, %c0_i32_0 : i32, i32, i32
  }
  func.func @transform_2(%arg0: i32) -> (i32, i32) {
    %c0_i32 = arith.constant 0 : i32
    %c0_i32_0 = arith.constant 0 : i32
    %c0_i32_1 = arith.constant 0 : i32
    return %c0_i32, %c0_i32_0 : i32, i32
  }
  func.func @transform_3(%arg0: i32) -> (i32, i32) {
    %c0_i32 = arith.constant 0 : i32
    %c0_i32_0 = arith.constant 0 : i32
    %c0_i32_1 = arith.constant 0 : i32
    return %c0_i32, %c0_i32_0 : i32, i32
  }
  func.func @transform_4(%arg0: i32) -> (i32, i32, i32) {
    %c0_i32 = arith.constant 0 : i32
    %c0_i32_0 = arith.constant 0 : i32
    %c0_i32_1 = arith.constant 0 : i32
    return %arg0, %c0_i32, %c0_i32_0 : i32, i32, i32
  }
}

</mosaic_0001>

<llo_original>
// kernel: _lambda_.1
$region0: #{_lambda_.1}
  #allocation0 [shape = 'u32[]', space=smem, size = 0x4, offset = 0x4, fixed_abs, tag = 'smem constant byte address 0x4 - core index']
  #allocation1 [shape = 'u32[144,128]{1,0:T(1,128)}', space=vmem, size = 0x12000, scoped, tag = 'internal scratch']
  %s0 = inlined_call_operand.vmem [shape: f32[2,16,256], index: 0, kind: input, shape index: {}]
  %s1 = inlined_call_operand.vmem [shape: f32[2,16,256], index: 1, kind: input, shape index: {}]
  %s2 = inlined_call_operand.vmem [shape: f32[256,256], index: 2, kind: input, shape index: {}]
  %s3 = inlined_call_operand.vmem [shape: f32[80,80], index: 3, kind: input, shape index: {}]
  %s4 = inlined_call_operand.vmem [shape: f32[2,8,128], index: 4, kind: output, shape index: {}]
  %s5 = sld [smem:[#allocation0]]
  $region49: #{_lambda_.1} parent=0
    _
  %s7 = ssub.s32 1, %s5
  %s8 = scalar_select 0, %s7, %s5
  loop: start=0, step=1, limit=4
  $region2: #{_lambda_.1} parent=0 // loop_pre_header
    _
  $region3: #{_lambda_.1} parent=0 // loop_header
    %s10 = sphi 0, %s14
    %p11 = scmp.ge.s32.totalorder %s10, 4
    %s20 = sphi 0, %s22
    %s23 = sphi 0, %s20
    %s24 = sphi 0, %s23
    %s40 = sphi 0, %s24
    %s46 = sphi 0, %s48
    %s49 = sphi 0, %s46
    %s50 = sphi 0, %s49
    %s66 = sphi 0, %s50
    %s70 = sphi 0, %s70
    %s72 = sphi 0, %s70
    %s73 = sphi 0, %s72
    %s87 = sphi 0, %s73
    %s91 = sphi 0, %s91
    %s93 = sphi 0, %s91
    %s94 = sphi 0, %s93
    %s108 = sphi 0, %s94
    %s114 = sphi 0, %s116
    %s117 = sphi 0, %s114
    %s118 = sphi 0, %s117
    %s134 = sphi 0, %s118
  $region4: #{_lambda_.1} parent=0 // loop_header_branch
    %13 = sbr.rel (%p11) target = $region8
  $region5: #{_lambda_.1} parent=0 // loop_body
    %s15 = ssub.s32 %s10, 1
    %s16 = ssub.s32 %s10, 2
    %s17 = sadd.s32 %s10, 1
    %s18 = ssub.s32 %s10, %s17
    %p19 = scmp.eq.s32.totalorder %s18, 0
    %s21 = sadd.s32 %s20, 1
    %s22 = scalar_select %p19, %s20, %s21
    %p25 = pneg %p19
    %p26 = scmp.eq.s32.totalorder %s10, 1
    %p27 = por %p25, %p26
    %p28 = scmp.ne.s32.totalorder %s20, %s23
    %p29 = scmp.eq.s32.totalorder %s10, 0
    %p30 = por %p28, %p29
    %p31 = scmp.ne.s32.totalorder %s20, %s23
    %p32 = scmp.eq.s32.totalorder %s15, 1
    %p33 = por %p31, %p32
    %p34 = scmp.ne.s32.totalorder %s23, %s24
    %p35 = scmp.eq.s32.totalorder %s15, 0
    %p36 = por %p34, %p35
    %p37 = scmp.ne.s32.totalorder %s23, %s24
    %p38 = scmp.eq.s32.totalorder %s16, 1
    %p39 = por %p37, %p38
    %p41 = scmp.ne.s32.totalorder %s24, %s40
    %p42 = scmp.eq.s32.totalorder %s16, 0
    %p43 = por %p41, %p42
    %s44 = ssub.s32 %s10, %s17
    %p45 = scmp.eq.s32.totalorder %s44, 0
    %s47 = sadd.s32 %s46, 1
    %s48 = scalar_select %p45, %s46, %s47
    %p51 = pneg %p45
    %p52 = scmp.eq.s32.totalorder %s10, 1
    %p53 = por %p51, %p52
    %p54 = scmp.ne.s32.totalorder %s46, %s49
    %p55 = scmp.eq.s32.totalorder %s10, 0
    %p56 = por %p54, %p55
    %p57 = scmp.ne.s32.totalorder %s46, %s49
    %p58 = scmp.eq.s32.totalorder %s15, 1
    %p59 = por %p57, %p58
    %p60 = scmp.ne.s32.totalorder %s49, %s50
    %p61 = scmp.eq.s32.totalorder %s15, 0
    %p62 = por %p60, %p61
    %p63 = scmp.ne.s32.totalorder %s49, %s50
    %p64 = scmp.eq.s32.totalorder %s16, 1
    %p65 = por %p63, %p64
    %p67 = scmp.ne.s32.totalorder %s50, %s66
    %p68 = scmp.eq.s32.totalorder %s16, 0
    %p69 = por %p67, %p68
    %s71 = sadd.s32 %s70, 1
    %p74 = scmp.eq.s32.totalorder %s10, 1
    %p75 = scmp.ne.s32.totalorder %s70, %s72
    %p76 = scmp.eq.s32.totalorder %s10, 0
    %p77 = por %p75, %p76
    %p78 = scmp.ne.s32.totalorder %s70, %s72
    %p79 = scmp.eq.s32.totalorder %s15, 1
    %p80 = por %p78, %p79
    %p81 = scmp.ne.s32.totalorder %s72, %s73
    %p82 = scmp.eq.s32.totalorder %s15, 0
    %p83 = por %p81, %p82
    %p84 = scmp.ne.s32.totalorder %s72, %s73
    %p85 = scmp.eq.s32.totalorder %s16, 1
    %p86 = por %p84, %p85
    %p88 = scmp.ne.s32.totalorder %s73, %s87
    %p89 = scmp.eq.s32.totalorder %s16, 0
    %p90 = por %p88, %p89
    %s92 = sadd.s32 %s91, 1
    %p95 = scmp.eq.s32.totalorder %s10, 1
    %p96 = scmp.ne.s32.totalorder %s91, %s93
    %p97 = scmp.eq.s32.totalorder %s10, 0
    %p98 = por %p96, %p97
    %p99 = scmp.ne.s32.totalorder %s91, %s93
    %p100 = scmp.eq.s32.totalorder %s15, 1
    %p101 = por %p99, %p100
    %p102 = scmp.ne.s32.totalorder %s93, %s94
    %p103 = scmp.eq.s32.totalorder %s15, 0
    %p104 = por %p102, %p103
    %p105 = scmp.ne.s32.totalorder %s93, %s94
    %p106 = scmp.eq.s32.totalorder %s16, 1
    %p107 = por %p105, %p106
    %p109 = scmp.ne.s32.totalorder %s94, %s108
    %p110 = scmp.eq.s32.totalorder %s16, 0
    %p111 = por %p109, %p110
    %s112 = ssub.s32 %s10, %s17
    %p113 = scmp.eq.s32.totalorder %s112, 0
    %s115 = sadd.s32 %s114, 1
    %s116 = scalar_select %p113, %s114, %s115
    %p119 = pneg %p113
    %p120 = scmp.eq.s32.totalorder %s10, 1
    %p121 = por %p119, %p120
    %p122 = scmp.ne.s32.totalorder %s114, %s117
    %p123 = scmp.eq.s32.totalorder %s10, 0
    %p124 = por %p122, %p123
    %p125 = scmp.ne.s32.totalorder %s114, %s117
    %p126 = scmp.eq.s32.totalorder %s15, 1
    %p127 = por %p125, %p126
    %p128 = scmp.ne.s32.totalorder %s117, %s118
    %p129 = scmp.eq.s32.totalorder %s15, 0
    %p130 = por %p128, %p129
    %p131 = scmp.ne.s32.totalorder %s117, %s118
    %p132 = scmp.eq.s32.totalorder %s16, 1
    %p133 = por %p131, %p132
    %p135 = scmp.ne.s32.totalorder %s118, %s134
    %p136 = scmp.eq.s32.totalorder %s16, 0
    %p137 = por %p135, %p136
    %p138 = scmp.le.s32.totalorder 1, %s10
    %p139 = scmp.lt.s32.totalorder %s10, 3
    %p140 = pnand %p138, %p139
    %p141 = pneg %p140
    // Predicated region
    $region9: #{_lambda_.1} parent=5 // pred_check
      _
    $region10: #{_lambda_.1} parent=5 // pred_check_branch
      %143 = sbr.rel (%p140) target = $region12
    $region11: #{_lambda_.1} parent=5 // pred_region
      %s144 = ssub.s32 %s10, 1
      // Predicated region
      $region13: #{_lambda_.1} parent=11 // pred_check
        %p145 = pneg %p83
      $region14: #{_lambda_.1} parent=11 // pred_check_branch
        %147 = sbr.rel (%p145) target = $region16
      $region15: #{_lambda_.1} parent=11 // pred_region
        _
      $region16: #{_lambda_.1} parent=11 // pred_fallthru
        _
      // Predicated region
      $region17: #{_lambda_.1} parent=11 // pred_check
        %p148 = pneg %p104
      $region18: #{_lambda_.1} parent=11 // pred_check_branch
        %150 = sbr.rel (%p148) target = $region20
      $region19: #{_lambda_.1} parent=11 // pred_region
        _
      $region20: #{_lambda_.1} parent=11 // pred_fallthru
        _
    $region12: #{_lambda_.1} parent=5 // pred_fallthru
      _
    %p151 = scmp.lt.s32.totalorder %s10, 2
    // Predicated region
    $region21: #{_lambda_.1} parent=5 // pred_check
      %p152 = pneg %p151
    $region22: #{_lambda_.1} parent=5 // pred_check_branch
      %154 = sbr.rel (%p152) target = $region24
    $region23: #{_lambda_.1} parent=5 // pred_region
      // Predicated region
      $region25: #{_lambda_.1} parent=23 // pred_check
        %p155 = pneg %p30
      $region26: #{_lambda_.1} parent=23 // pred_check_branch
        %157 = sbr.rel (%p155) target = $region28
      $region27: #{_lambda_.1} parent=23 // pred_region
        %p158 = scmp.lt.s32.totalorder %s10, 1
        %s159 = scalar_select %p158, %s10, 1
        %s160 = smul.addr %s159, 4
        %s161 = smul.addr %s160, 8
        %s162 = scalar_lea.vmem %s0, %s161
      $region28: #{_lambda_.1} parent=23 // pred_fallthru
        _
      // Predicated region
      $region29: #{_lambda_.1} parent=23 // pred_check
        %p163 = pneg %p56
      $region30: #{_lambda_.1} parent=23 // pred_check_branch
        %165 = sbr.rel (%p163) target = $region32
      $region31: #{_lambda_.1} parent=23 // pred_region
        %p166 = scmp.lt.s32.totalorder %s10, 1
        %s167 = scalar_select %p166, %s10, 1
        %s168 = smul.addr %s167, 4
        %s169 = smul.addr %s168, 8
        %s170 = scalar_lea.vmem %s1, %s169
      $region32: #{_lambda_.1} parent=23 // pred_fallthru
        _
    $region24: #{_lambda_.1} parent=5 // pred_fallthru
      _
    %p171 = scmp.le.s32.totalorder 1, %s10
    %p172 = scmp.lt.s32.totalorder %s10, 3
    %p173 = pnand %p171, %p172
    %p174 = pneg %p173
    // Predicated region
    $region33: #{_lambda_.1} parent=5 // pred_check
      _
    $region34: #{_lambda_.1} parent=5 // pred_check_branch
      %176 = sbr.rel (%p173) target = $region36
    $region35: #{_lambda_.1} parent=5 // pred_region
      %s177 = ssub.s32 %s10, 1
      %p178 = scmp.lt.s32.totalorder %s15, 1
      %s179 = scalar_select %p178, %s15, 1
      %s180 = smul.addr %s179, 4
      %s181 = smul.addr %s180, 8
      %s182 = scalar_lea.vmem %s0, %s181
      %p183 = pneg %p36
      %p184 = pneg %p33
      %p185 = scmp.lt.s32.totalorder %s15, 1
      %s186 = scalar_select %p185, %s15, 1
      %s187 = smul.addr %s186, 4
      %s188 = smul.addr %s187, 8
      %s189 = scalar_lea.vmem %s1, %s188
      %p190 = pneg %p62
      %p191 = pneg %p59
      %p192 = pneg %p83
      %p193 = pneg %p80
      %p194 = pneg %p104
      %p195 = pneg %p101
      %p196 = pneg %p130
      %p197 = pneg %p127
      %p198 = scmp.lt.s32.totalorder %s15, 1
      %s199 = scalar_select %p198, %s15, 1
      %s200 = smul.addr %s199, 8
      %s201 = scalar_lea.vmem %s4, %s200
      %p202 = scmp.lt.s32.totalorder %s15, 1
      %s203 = scalar_select %p202, %s15, 1
      %s204 = smul.addr %s203, 4
      %s205 = smul.addr %s204, 8
      %s206 = scalar_lea.vmem %s0, %s205
      %p207 = scmp.lt.s32.totalorder %s15, 1
      %s208 = scalar_select %p207, %s15, 1
      %s209 = smul.addr %s208, 4
      %s210 = smul.addr %s209, 8
      %s211 = scalar_lea.vmem %s1, %s210
      %p212 = scmp.lt.s32.totalorder %s15, 1
      %s213 = scalar_select %p212, %s15, 1
      %s214 = smul.addr %s213, 8
      %s215 = scalar_lea.vmem %s4, %s214
      %v216 = vld [vmem:[%s206] sm:$0xff]
      %v217 = vld [vmem:[%s206 + $0x8] sm:$0xff]
      %v218 = vld [vmem:[%s206 + $0x10] sm:$0xff]
      %v219 = vld [vmem:[%s206 + $0x18] sm:$0xff]
      %v220 = vld [vmem:[%s211] sm:$0xff]
      %v221 = vld [vmem:[%s211 + $0x8] sm:$0xff]
      %v222 = vld [vmem:[%s211 + $0x10] sm:$0xff]
      %v223 = vld [vmem:[%s211 + $0x18] sm:$0xff]
      %v224 = vmul.f32 %v216, %v216
      %v225 = vmul.f32 %v217, %v217
      %v226 = vmul.f32 %v218, %v218
      %v227 = vmul.f32 %v219, %v219
      %v228 = vmul.f32 %v220, %v220
      %v229 = vmul.f32 %v221, %v221
      %v230 = vmul.f32 %v222, %v222
      %v231 = vmul.f32 %v223, %v223
      %v232 = vmul.f32 %v216, %v220
      %v233 = vmul.f32 %v217, %v221
      %v234 = vmul.f32 %v218, %v222
      %v235 = vmul.f32 %v219, %v223
      %v236 = vld [vmem:[%s2] sm:$0xff]
      %v237 = vld [vmem:[%s2 + $0x8] sm:$0xff]
      %v238 = vld [vmem:[%s2 + $0x10] sm:$0xff]
      %v239 = vld [vmem:[%s2 + $0x18] sm:$0xff]
      %v240 = vld [vmem:[%s2 + $0x20] sm:$0xff]
      %v241 = vld [vmem:[%s2 + $0x28] sm:$0xff]
      %v242 = vld [vmem:[%s2 + $0x30] sm:$0xff]
      %v243 = vld [vmem:[%s2 + $0x38] sm:$0xff]
      %v244 = vld [vmem:[%s2 + $0x40] sm:$0xff]
      %v245 = vld [vmem:[%s2 + $0x48] sm:$0xff]
      %v246 = vld [vmem:[%s2 + $0x50] sm:$0xff]
      %v247 = vld [vmem:[%s2 + $0x58] sm:$0xff]
      %v248 = vld [vmem:[%s2 + $0x60] sm:$0xff]
      %v249 = vld [vmem:[%s2 + $0x68] sm:$0xff]
      %v250 = vld [vmem:[%s2 + $0x70] sm:$0xff]
      %v251 = vld [vmem:[%s2 + $0x78] sm:$0xff]
      %v252 = vld [vmem:[%s2 + $0x80] sm:$0xff]
      %v253 = vld [vmem:[%s2 + $0x88] sm:$0xff]
      %v254 = vld [vmem:[%s2 + $0x90] sm:$0xff]
      %v255 = vld [vmem:[%s2 + $0x98] sm:$0xff]
      %v256 = vld [vmem:[%s2 + $0xa0] sm:$0xff]
      %v257 = vld [vmem:[%s2 + $0xa8] sm:$0xff]
      %v258 = vld [vmem:[%s2 + $0xb0] sm:$0xff]
      %v259 = vld [vmem:[%s2 + $0xb8] sm:$0xff]
      %v260 = vld [vmem:[%s2 + $0xc0] sm:$0xff]
      %v261 = vld [vmem:[%s2 + $0xc8] sm:$0xff]
      %v262 = vld [vmem:[%s2 + $0xd0] sm:$0xff]
      %v263 = vld [vmem:[%s2 + $0xd8] sm:$0xff]
      %v264 = vld [vmem:[%s2 + $0xe0] sm:$0xff]
      %v265 = vld [vmem:[%s2 + $0xe8] sm:$0xff]
      %v266 = vld [vmem:[%s2 + $0xf0] sm:$0xff]
      %v267 = vld [vmem:[%s2 + $0xf8] sm:$0xff]
      %v268 = vld [vmem:[%s2 + $0x100] sm:$0xff]
      %v269 = vld [vmem:[%s2 + $0x108] sm:$0xff]
      %v270 = vld [vmem:[%s2 + $0x110] sm:$0xff]
      %v271 = vld [vmem:[%s2 + $0x118] sm:$0xff]
      %v272 = vld [vmem:[%s2 + $0x120] sm:$0xff]
      %v273 = vld [vmem:[%s2 + $0x128] sm:$0xff]
      %v274 = vld [vmem:[%s2 + $0x130] sm:$0xff]
      %v275 = vld [vmem:[%s2 + $0x138] sm:$0xff]
      %v276 = vld [vmem:[%s2 + $0x140] sm:$0xff]
      %v277 = vld [vmem:[%s2 + $0x148] sm:$0xff]
      %v278 = vld [vmem:[%s2 + $0x150] sm:$0xff]
      %v279 = vld [vmem:[%s2 + $0x158] sm:$0xff]
      %v280 = vld [vmem:[%s2 + $0x160] sm:$0xff]
      %v281 = vld [vmem:[%s2 + $0x168] sm:$0xff]
      %v282 = vld [vmem:[%s2 + $0x170] sm:$0xff]
      %v283 = vld [vmem:[%s2 + $0x178] sm:$0xff]
      %v284 = vld [vmem:[%s2 + $0x180] sm:$0xff]
      %v285 = vld [vmem:[%s2 + $0x188] sm:$0xff]
      %v286 = vld [vmem:[%s2 + $0x190] sm:$0xff]
      %v287 = vld [vmem:[%s2 + $0x198] sm:$0xff]
      %v288 = vld [vmem:[%s2 + $0x1a0] sm:$0xff]
      %v289 = vld [vmem:[%s2 + $0x1a8] sm:$0xff]
      %v290 = vld [vmem:[%s2 + $0x1b0] sm:$0xff]
      %v291 = vld [vmem:[%s2 + $0x1b8] sm:$0xff]
      %v292 = vld [vmem:[%s2 + $0x1c0] sm:$0xff]
      %v293 = vld [vmem:[%s2 + $0x1c8] sm:$0xff]
      %v294 = vld [vmem:[%s2 + $0x1d0] sm:$0xff]
      %v295 = vld [vmem:[%s2 + $0x1d8] sm:$0xff]
      %v296 = vld [vmem:[%s2 + $0x1e0] sm:$0xff]
      %v297 = vld [vmem:[%s2 + $0x1e8] sm:$0xff]
      %v298 = vld [vmem:[%s2 + $0x1f0] sm:$0xff]
      %v299 = vld [vmem:[%s2 + $0x1f8] sm:$0xff]
      %v300 = vand.u32 %v237, 4294901760
      %301 = vmatprep.subr.mxu0 %v300
      %v302 = vand.u32 %v236, 4294901760
      %303 = vmatpush1.msra.mxu0 %v302
      %v304 = vand.u32 %v239, 4294901760
      %305 = vmatprep.subr.mxu0 %v304
      %v306 = vand.u32 %v238, 4294901760
      %307 = vmatpush1.msra.mxu0 %v306
      %v308 = vand.u32 %v241, 4294901760
      %309 = vmatprep.subr.mxu0 %v308
      %v310 = vand.u32 %v240, 4294901760
      %311 = vmatpush1.msra.mxu0 %v310
      %v312 = vand.u32 %v243, 4294901760
      %313 = vmatprep.subr.mxu0 %v312
      %v314 = vand.u32 %v242, 4294901760
      %315 = vmatpush1.msra.mxu0 %v314
      %v316 = vand.u32 %v245, 4294901760
      %317 = vmatprep.subr.mxu0 %v316
      %v318 = vand.u32 %v244, 4294901760
      %319 = vmatpush1.msra.mxu0 %v318
      %v320 = vand.u32 %v247, 4294901760
      %321 = vmatprep.subr.mxu0 %v320
      %v322 = vand.u32 %v246, 4294901760
      %323 = vmatpush1.msra.mxu0 %v322
      %v324 = vand.u32 %v249, 4294901760
      %325 = vmatprep.subr.mxu0 %v324
      %v326 = vand.u32 %v248, 4294901760
      %327 = vmatpush1.msra.mxu0 %v326
      %v328 = vand.u32 %v251, 4294901760
      %329 = vmatprep.subr.mxu0 %v328
      %v330 = vand.u32 %v250, 4294901760
      %331 = vmatpush1.msra.mxu0 %v330
      %v332 = vand.u32 %v253, 4294901760
      %333 = vmatprep.subr.mxu0 %v332
      %v334 = vand.u32 %v252, 4294901760
      %335 = vmatpush1.msra.mxu0 %v334
      %v336 = vand.u32 %v255, 4294901760
      %337 = vmatprep.subr.mxu0 %v336
      %v338 = vand.u32 %v254, 4294901760
      %339 = vmatpush1.msra.mxu0 %v338
      %v340 = vand.u32 %v257, 4294901760
      %341 = vmatprep.subr.mxu0 %v340
      %v342 = vand.u32 %v256, 4294901760
      %343 = vmatpush1.msra.mxu0 %v342
      %v344 = vand.u32 %v259, 4294901760
      %345 = vmatprep.subr.mxu0 %v344
      %v346 = vand.u32 %v258, 4294901760
      %347 = vmatpush1.msra.mxu0 %v346
      %v348 = vand.u32 %v261, 4294901760
      %349 = vmatprep.subr.mxu0 %v348
      %v350 = vand.u32 %v260, 4294901760
      %351 = vmatpush1.msra.mxu0 %v350
      %v352 = vand.u32 %v263, 4294901760
      %353 = vmatprep.subr.mxu0 %v352
      %v354 = vand.u32 %v262, 4294901760
      %355 = vmatpush1.msra.mxu0 %v354
      %v356 = vand.u32 %v265, 4294901760
      %357 = vmatprep.subr.mxu0 %v356
      %v358 = vand.u32 %v264, 4294901760
      %359 = vmatpush1.msra.mxu0 %v358
      %v360 = vand.u32 %v267, 4294901760
      %361 = vmatprep.subr.mxu0 %v360
      %v362 = vand.u32 %v266, 4294901760
      %363 = vmatpush1.msra.mxu0 %v362
      %v364 = vand.u32 %v269, 4294901760
      %365 = vmatprep.subr.mxu0 %v364
      %v366 = vand.u32 %v268, 4294901760
      %367 = vmatpush1.msra.mxu0 %v366
      %v368 = vand.u32 %v271, 4294901760
      %369 = vmatprep.subr.mxu0 %v368
      %v370 = vand.u32 %v270, 4294901760
      %371 = vmatpush1.msra.mxu0 %v370
      %v372 = vand.u32 %v273, 4294901760
      %373 = vmatprep.subr.mxu0 %v372
      %v374 = vand.u32 %v272, 4294901760
      %375 = vmatpush1.msra.mxu0 %v374
      %v376 = vand.u32 %v275, 4294901760
      %377 = vmatprep.subr.mxu0 %v376
      %v378 = vand.u32 %v274, 4294901760
      %379 = vmatpush1.msra.mxu0 %v378
      %v380 = vand.u32 %v277, 4294901760
      %381 = vmatprep.subr.mxu0 %v380
      %v382 = vand.u32 %v276, 4294901760
      %383 = vmatpush1.msra.mxu0 %v382
      %v384 = vand.u32 %v279, 4294901760
      %385 = vmatprep.subr.mxu0 %v384
      %v386 = vand.u32 %v278, 4294901760
      %387 = vmatpush1.msra.mxu0 %v386
      %v388 = vand.u32 %v281, 4294901760
      %389 = vmatprep.subr.mxu0 %v388
      %v390 = vand.u32 %v280, 4294901760
      %391 = vmatpush1.msra.mxu0 %v390
      %v392 = vand.u32 %v283, 4294901760
      %393 = vmatprep.subr.mxu0 %v392
      %v394 = vand.u32 %v282, 4294901760
      %395 = vmatpush1.msra.mxu0 %v394
      %v396 = vand.u32 %v285, 4294901760
      %397 = vmatprep.subr.mxu0 %v396
      %v398 = vand.u32 %v284, 4294901760
      %399 = vmatpush1.msra.mxu0 %v398
      %v400 = vand.u32 %v287, 4294901760
      %401 = vmatprep.subr.mxu0 %v400
      %v402 = vand.u32 %v286, 4294901760
      %403 = vmatpush1.msra.mxu0 %v402
      %v404 = vand.u32 %v289, 4294901760
      %405 = vmatprep.subr.mxu0 %v404
      %v406 = vand.u32 %v288, 4294901760
      %407 = vmatpush1.msra.mxu0 %v406
      %v408 = vand.u32 %v291, 4294901760
      %409 = vmatprep.subr.mxu0 %v408
      %v410 = vand.u32 %v290, 4294901760
      %411 = vmatpush1.msra.mxu0 %v410
      %v412 = vand.u32 %v293, 4294901760
      %413 = vmatprep.subr.mxu0 %v412
      %v414 = vand.u32 %v292, 4294901760
      %415 = vmatpush1.msra.mxu0 %v414
      %v416 = vand.u32 %v295, 4294901760
      %417 = vmatprep.subr.mxu0 %v416
      %v418 = vand.u32 %v294, 4294901760
      %419 = vmatpush1.msra.mxu0 %v418
      %v420 = vand.u32 %v297, 4294901760
      %421 = vmatprep.subr.mxu0 %v420
      %v422 = vand.u32 %v296, 4294901760
      %423 = vmatpush1.msra.mxu0 %v422
      %v424 = vand.u32 %v299, 4294901760
      %425 = vmatprep.subr.mxu0 %v424
      %v426 = vand.u32 %v298, 4294901760
      %427 = vmatpush1.msra.mxu0 %v426
      %v428 = vand.u32 %v217, 4294901760
      %v429 = vsub.f32 %v217, %v428
      %v430 = vand.u32 %v429, 4294901760
      %v431 = vsub.f32 %v429, %v430
      %v432 = vand.u32 %v431, 4294901760
      %433 = vmatprep.mubr.f32.mxu0 %v432
      %v434 = vand.u32 %v216, 4294901760
      %v435 = vsub.f32 %v216, %v434
      %v436 = vand.u32 %v435, 4294901760
      %v437 = vsub.f32 %v435, %v436
      %v438 = vand.u32 %v437, 4294901760
      %439 = vmatmul.mubr.f32.gmra.mrb[0].mxu0 %v438
      %v440 = vpop.f32.mrb[0].mxu0
      %v441 = vadd.f32 0.0, %v440
      %v442 = vpop.f32.mrb[0].mxu0
      %v443 = vadd.f32 0.0, %v442
      %v444 = vand.u32 %v219, 4294901760
      %v445 = vsub.f32 %v219, %v444
      %v446 = vand.u32 %v445, 4294901760
      %v447 = vsub.f32 %v445, %v446
      %v448 = vand.u32 %v447, 4294901760
      %449 = vmatprep.mubr.f32.mxu0 %v448
      %v450 = vand.u32 %v218, 4294901760
      %v451 = vsub.f32 %v218, %v450
      %v452 = vand.u32 %v451, 4294901760
      %v453 = vsub.f32 %v451, %v452
      %v454 = vand.u32 %v453, 4294901760
      %455 = vmatmul.mubr.f32.gmra.mrb[0].mxu0 %v454
      %v456 = vpop.f32.mrb[0].mxu0
      %v457 = vadd.f32 0.0, %v456
      %v458 = vpop.f32.mrb[0].mxu0
      %v459 = vadd.f32 0.0, %v458
      %v460 = vand.u32 %v221, 4294901760
      %v461 = vsub.f32 %v221, %v460
      %v462 = vand.u32 %v461, 4294901760
      %v463 = vsub.f32 %v461, %v462
      %v464 = vand.u32 %v463, 4294901760
      %465 = vmatprep.mubr.f32.mxu0 %v464
      %v466 = vand.u32 %v220, 4294901760
      %v467 = vsub.f32 %v220, %v466
      %v468 = vand.u32 %v467, 4294901760
      %v469 = vsub.f32 %v467, %v468
      %v470 = vand.u32 %v469, 4294901760
      %471 = vmatmul.mubr.f32.gmra.mrb[0].mxu0 %v470
      %v472 = vpop.f32.mrb[0].mxu0
      %v473 = vadd.f32 0.0, %v472
      %v474 = vpop.f32.mrb[0].mxu0
      %v475 = vadd.f32 0.0, %v474
      %v476 = vand.u32 %v223, 4294901760
      %v477 = vsub.f32 %v223, %v476
      %v478 = vand.u32 %v477, 4294901760
      %v479 = vsub.f32 %v477, %v478
      %v480 = vand.u32 %v479, 4294901760
      %481 = vmatprep.mubr.f32.mxu0 %v480
      %v482 = vand.u32 %v222, 4294901760
      %v483 = vsub.f32 %v222, %v482
      %v484 = vand.u32 %v483, 4294901760
      %v485 = vsub.f32 %v483, %v484
      %v486 = vand.u32 %v485, 4294901760
      %487 = vmatmul.mubr.f32.gmra.mrb[0].mxu0 %v486
      %v488 = vpop.f32.mrb[0].mxu0
      %v489 = vadd.f32 0.0, %v488
      %v490 = vpop.f32.mrb[0].mxu0
      %v491 = vadd.f32 0.0, %v490
      %v492 = vand.u32 %v225, 4294901760
      %v493 = vsub.f32 %v225, %v492
      %v494 = vand.u32 %v493, 4294901760
      %v495 = vsub.f32 %v493, %v494
      %v496 = vand.u32 %v495, 4294901760
      %497 = vmatprep.mubr.f32.mxu0 %v496
      %v498 = vand.u32 %v224, 4294901760
      %v499 = vsub.f32 %v224, %v498
      %v500 = vand.u32 %v499, 4294901760
      %v501 = vsub.f32 %v499, %v500
      %v502 = vand.u32 %v501, 4294901760
      %503 = vmatmul.mubr.f32.gmra.mrb[0].mxu0 %v502
      %v504 = vpop.f32.mrb[0].mxu0
      %v505 = vadd.f32 0.0, %v504
      %v506 = vpop.f32.mrb[0].mxu0
      %v507 = vadd.f32 0.0, %v506
      %v508 = vand.u32 %v227, 4294901760
      %v509 = vsub.f32 %v227, %v508
      %v510 = vand.u32 %v509, 4294901760
      %v511 = vsub.f32 %v509, %v510
      %v512 = vand.u32 %v511, 4294901760
      %513 = vmatprep.mubr.f32.mxu0 %v512
      %v514 = vand.u32 %v226, 4294901760
      %v515 = vsub.f32 %v226, %v514
      %v516 = vand.u32 %v515, 4294901760
      %v517 = vsub.f32 %v515, %v516
      %v518 = vand.u32 %v517, 4294901760
      %519 = vmatmul.mubr.f32.gmra.mrb[0].mxu0 %v518
      %v520 = vpop.f32.mrb[0].mxu0
      %v521 = vadd.f32 0.0, %v520
      %v522 = vpop.f32.mrb[0].mxu0
      %v523 = vadd.f32 0.0, %v522
      %v524 = vand.u32 %v229, 4294901760
      %v525 = vsub.f32 %v229, %v524
      %v526 = vand.u32 %v525, 4294901760
      %v527 = vsub.f32 %v525, %v526
      %v528 = vand.u32 %v527, 4294901760
      %529 = vmatprep.mubr.f32.mxu0 %v528
      %v530 = vand.u32 %v228, 4294901760
      %v531 = vsub.f32 %v228, %v530
      %v532 = vand.u32 %v531, 4294901760
      %v533 = vsub.f32 %v531, %v532
      %v534 = vand.u32 %v533, 4294901760
      %535 = vmatmul.mubr.f32.gmra.mrb[0].mxu0 %v534
      %v536 = vpop.f32.mrb[0].mxu0
      %v537 = vadd.f32 0.0, %v536
      %v538 = vpop.f32.mrb[0].mxu0
      %v539 = vadd.f32 0.0, %v538
      %v540 = vand.u32 %v231, 4294901760
      %v541 = vsub.f32 %v231, %v540
      %v542 = vand.u32 %v541, 4294901760
      %v543 = vsub.f32 %v541, %v542
      %v544 = vand.u32 %v543, 4294901760
      %545 = vmatprep.mubr.f32.mxu0 %v544
      %v546 = vand.u32 %v230, 4294901760
      %v547 = vsub.f32 %v230, %v546
      %v548 = vand.u32 %v547, 4294901760
      %v549 = vsub.f32 %v547, %v548
      %v550 = vand.u32 %v549, 4294901760
      %551 = vmatmul.mubr.f32.gmra.mrb[0].mxu0 %v550
      %v552 = vpop.f32.mrb[0].mxu0
      %v553 = vadd.f32 0.0, %v552
      %v554 = vpop.f32.mrb[0].mxu0
      %v555 = vadd.f32 0.0, %v554
      %v556 = vand.u32 %v233, 4294901760
      %v557 = vsub.f32 %v233, %v556
      %v558 = vand.u32 %v557, 4294901760
      %v559 = vsub.f32 %v557, %v558
      %v560 = vand.u32 %v559, 4294901760
      %561 = vmatprep.mubr.f32.mxu0 %v560
      %v562 = vand.u32 %v232, 4294901760
      %v563 = vsub.f32 %v232, %v562
      %v564 = vand.u32 %v563, 4294901760
      %v565 = vsub.f32 %v563, %v564
      %v566 = vand.u32 %v565, 4294901760
      %567 = vmatmul.mubr.f32.gmra.mrb[0].mxu0 %v566
      %v568 = vpop.f32.mrb[0].mxu0
      %v569 = vadd.f32 0.0, %v568
      %v570 = vpop.f32.mrb[0].mxu0
      %v571 = vadd.f32 0.0, %v570
      %v572 = vand.u32 %v235, 4294901760
      %v573 = vsub.f32 %v235, %v572
      %v574 = vand.u32 %v573, 4294901760
      %v575 = vsub.f32 %v573, %v574
      %v576 = vand.u32 %v575, 4294901760
      %577 = vmatprep.mubr.f32.mxu0 %v576
      %v578 = vand.u32 %v234, 4294901760
      %v579 = vsub.f32 %v234, %v578
      %v580 = vand.u32 %v579, 4294901760
      %v581 = vsub.f32 %v579, %v580
      %v582 = vand.u32 %v581, 4294901760
      %583 = vmatmul.mubr.f32.gmra.mrb[0].mxu0 %v582
      %v584 = vpop.f32.mrb[0].mxu0
      %v585 = vadd.f32 0.0, %v584
      %v586 = vpop.f32.mrb[0].mxu0
      %v587 = vadd.f32 0.0, %v586
      %588 = vdwg.mxu0
      %v589 = vand.u32 %v237, 4294901760
      %v590 = vsub.f32 %v237, %v589
      %v591 = vand.u32 %v590, 4294901760
      %v592 = vsub.f32 %v590, %v591
      %v593 = vand.u32 %v592, 4294901760
      %594 = vmatprep.subr.mxu0 %v593
      %v595 = vand.u32 %v236, 4294901760
      %v596 = vsub.f32 %v236, %v595
      %v597 = vand.u32 %v596, 4294901760
      %v598 = vsub.f32 %v596, %v597
      %v599 = vand.u32 %v598, 4294901760
      %600 = vmatpush1.msra.mxu0 %v599
      %v601 = vand.u32 %v239, 4294901760
      %v602 = vsub.f32 %v239, %v601
      %v603 = vand.u32 %v602, 4294901760
      %v604 = vsub.f32 %v602, %v603
      %v605 = vand.u32 %v604, 4294901760
      %606 = vmatprep.subr.mxu0 %v605
      %v607 = vand.u32 %v238, 4294901760
      %v608 = vsub.f32 %v238, %v607
      %v609 = vand.u32 %v608, 4294901760
      %v610 = vsub.f32 %v608, %v609
      %v611 = vand.u32 %v610, 4294901760
      %612 = vmatpush1.msra.mxu0 %v611
      %v613 = vand.u32 %v241, 4294901760
      %v614 = vsub.f32 %v241, %v613
      %v615 = vand.u32 %v614, 4294901760
      %v616 = vsub.f32 %v614, %v615
      %v617 = vand.u32 %v616, 4294901760
      %618 = vmatprep.subr.mxu0 %v617
      %v619 = vand.u32 %v240, 4294901760
      %v620 = vsub.f32 %v240, %v619
      %v621 = vand.u32 %v620, 4294901760
      %v622 = vsub.f32 %v620, %v621
      %v623 = vand.u32 %v622, 4294901760
      %624 = vmatpush1.msra.mxu0 %v623
      %v625 = vand.u32 %v243, 4294901760
      %v626 = vsub.f32 %v243, %v625
      %v627 = vand.u32 %v626, 4294901760
      %v628 = vsub.f32 %v626, %v627
      %v629 = vand.u32 %v628, 4294901760
      %630 = vmatprep.subr.mxu0 %v629
      %v631 = vand.u32 %v242, 4294901760
      %v632 = vsub.f32 %v242, %v631
      %v633 = vand.u32 %v632, 4294901760
      %v634 = vsub.f32 %v632, %v633
      %v635 = vand.u32 %v634, 4294901760
      %636 = vmatpush1.msra.mxu0 %v635
      %v637 = vand.u32 %v245, 4294901760
      %v638 = vsub.f32 %v245, %v637
      %v639 = vand.u32 %v638, 4294901760
      %v640 = vsub.f32 %v638, %v639
      %v641 = vand.u32 %v640, 4294901760
      %642 = vmatprep.subr.mxu0 %v641
      %v643 = vand.u32 %v244, 4294901760
      %v644 = vsub.f32 %v244, %v643
      %v645 = vand.u32 %v644, 4294901760
      %v646 = vsub.f32 %v644, %v645
      %v647 = vand.u32 %v646, 4294901760
      %648 = vmatpush1.msra.mxu0 %v647
      %v649 = vand.u32 %v247, 4294901760
      %v650 = vsub.f32 %v247, %v649
      %v651 = vand.u32 %v650, 4294901760
      %v652 = vsub.f32 %v650, %v651
      %v653 = vand.u32 %v652, 4294901760
      %654 = vmatprep.subr.mxu0 %v653
      %v655 = vand.u32 %v246, 4294901760
      %v656 = vsub.f32 %v246, %v655
      %v657 = vand.u32 %v656, 4294901760
      %v658 = vsub.f32 %v656, %v657
      %v659 = vand.u32 %v658, 4294901760
      %660 = vmatpush1.msra.mxu0 %v659
      %v661 = vand.u32 %v249, 4294901760
      %v662 = vsub.f32 %v249, %v661
      %v663 = vand.u32 %v662, 4294901760
      %v664 = vsub.f32 %v662, %v663
      %v665 = vand.u32 %v664, 4294901760
      %666 = vmatprep.subr.mxu0 %v665
      %v667 = vand.u32 %v248, 4294901760
      %v668 = vsub.f32 %v248, %v667
      %v669 = vand.u32 %v668, 4294901760
      %v670 = vsub.f32 %v668, %v669
      %v671 = vand.u32 %v670, 4294901760
      %672 = vmatpush1.msra.mxu0 %v671
      %v673 = vand.u32 %v251, 4294901760
      %v674 = vsub.f32 %v251, %v673
      %v675 = vand.u32 %v674, 4294901760
      %v676 = vsub.f32 %v674, %v675
      %v677 = vand.u32 %v676, 4294901760
      %678 = vmatprep.subr.mxu0 %v677
      %v679 = vand.u32 %v250, 4294901760
      %v680 = vsub.f32 %v250, %v679
      %v681 = vand.u32 %v680, 4294901760
      %v682 = vsub.f32 %v680, %v681
      %v683 = vand.u32 %v682, 4294901760
      %684 = vmatpush1.msra.mxu0 %v683
      %v685 = vand.u32 %v253, 4294901760
      %v686 = vsub.f32 %v253, %v685
      %v687 = vand.u32 %v686, 4294901760
      %v688 = vsub.f32 %v686, %v687
      %v689 = vand.u32 %v688, 4294901760
      %690 = vmatprep.subr.mxu0 %v689
      %v691 = vand.u32 %v252, 4294901760
      %v692 = vsub.f32 %v252, %v691
      %v693 = vand.u32 %v692, 4294901760
      %v694 = vsub.f32 %v692, %v693
      %v695 = vand.u32 %v694, 4294901760
      %696 = vmatpush1.msra.mxu0 %v695
      %v697 = vand.u32 %v255, 4294901760
      %v698 = vsub.f32 %v255, %v697
      %v699 = vand.u32 %v698, 4294901760
      %v700 = vsub.f32 %v698, %v699
      %v701 = vand.u32 %v700, 4294901760
      %702 = vmatprep.subr.mxu0 %v701
      %v703 = vand.u32 %v254, 4294901760
      %v704 = vsub.f32 %v254, %v703
      %v705 = vand.u32 %v704, 4294901760
      %v706 = vsub.f32 %v704, %v705
      %v707 = vand.u32 %v706, 4294901760
      %708 = vmatpush1.msra.mxu0 %v707
      %v709 = vand.u32 %v257, 4294901760
      %v710 = vsub.f32 %v257, %v709
      %v711 = vand.u32 %v710, 4294901760
      %v712 = vsub.f32 %v710, %v711
      %v713 = vand.u32 %v712, 4294901760
      %714 = vmatprep.subr.mxu0 %v713
      %v715 = vand.u32 %v256, 4294901760
      %v716 = vsub.f32 %v256, %v715
      %v717 = vand.u32 %v716, 4294901760
      %v718 = vsub.f32 %v716, %v717
      %v719 = vand.u32 %v718, 4294901760
      %720 = vmatpush1.msra.mxu0 %v719
      %v721 = vand.u32 %v259, 4294901760
      %v722 = vsub.f32 %v259, %v721
      %v723 = vand.u32 %v722, 4294901760
      %v724 = vsub.f32 %v722, %v723
      %v725 = vand.u32 %v724, 4294901760
      %726 = vmatprep.subr.mxu0 %v725
      %v727 = vand.u32 %v258, 4294901760
      %v728 = vsub.f32 %v258, %v727
      %v729 = vand.u32 %v728, 4294901760
      %v730 = vsub.f32 %v728, %v729
      %v731 = vand.u32 %v730, 4294901760
      %732 = vmatpush1.msra.mxu0 %v731
      %v733 = vand.u32 %v261, 4294901760
      %v734 = vsub.f32 %v261, %v733
      %v735 = vand.u32 %v734, 4294901760
      %v736 = vsub.f32 %v734, %v735
      %v737 = vand.u32 %v736, 4294901760
      %738 = vmatprep.subr.mxu0 %v737
      %v739 = vand.u32 %v260, 4294901760
      %v740 = vsub.f32 %v260, %v739
      %v741 = vand.u32 %v740, 4294901760
      %v742 = vsub.f32 %v740, %v741
      %v743 = vand.u32 %v742, 4294901760
      %744 = vmatpush1.msra.mxu0 %v743
      %v745 = vand.u32 %v263, 4294901760
      %v746 = vsub.f32 %v263, %v745
      %v747 = vand.u32 %v746, 4294901760
      %v748 = vsub.f32 %v746, %v747
      %v749 = vand.u32 %v748, 4294901760
      %750 = vmatprep.subr.mxu0 %v749
      %v751 = vand.u32 %v262, 4294901760
      %v752 = vsub.f32 %v262, %v751
      %v753 = vand.u32 %v752, 4294901760
      %v754 = vsub.f32 %v752, %v753
      %v755 = vand.u32 %v754, 4294901760
      %756 = vmatpush1.msra.mxu0 %v755
      %v757 = vand.u32 %v265, 4294901760
      %v758 = vsub.f32 %v265, %v757
      %v759 = vand.u32 %v758, 4294901760
      %v760 = vsub.f32 %v758, %v759
      %v761 = vand.u32 %v760, 4294901760
      %762 = vmatprep.subr.mxu0 %v761
      %v763 = vand.u32 %v264, 4294901760
      %v764 = vsub.f32 %v264, %v763
      %v765 = vand.u32 %v764, 4294901760
      %v766 = vsub.f32 %v764, %v765
      %v767 = vand.u32 %v766, 4294901760
      %768 = vmatpush1.msra.mxu0 %v767
      %v769 = vand.u32 %v267, 4294901760
      %v770 = vsub.f32 %v267, %v769
      %v771 = vand.u32 %v770, 4294901760
      %v772 = vsub.f32 %v770, %v771
      %v773 = vand.u32 %v772, 4294901760
      %774 = vmatprep.subr.mxu0 %v773
      %v775 = vand.u32 %v266, 4294901760
      %v776 = vsub.f32 %v266, %v775
      %v777 = vand.u32 %v776, 4294901760
      %v778 = vsub.f32 %v776, %v777
      %v779 = vand.u32 %v778, 4294901760
      %780 = vmatpush1.msra.mxu0 %v779
      %v781 = vand.u32 %v269, 4294901760
      %v782 = vsub.f32 %v269, %v781
      %v783 = vand.u32 %v782, 4294901760
      %v784 = vsub.f32 %v782, %v783
      %v785 = vand.u32 %v784, 4294901760
      %786 = vmatprep.subr.mxu0 %v785
      %v787 = vand.u32 %v268, 4294901760
      %v788 = vsub.f32 %v268, %v787
      %v789 = vand.u32 %v788, 4294901760
      %v790 = vsub.f32 %v788, %v789
      %v791 = vand.u32 %v790, 4294901760
      %792 = vmatpush1.msra.mxu0 %v791
      %v793 = vand.u32 %v271, 4294901760
      %v794 = vsub.f32 %v271, %v793
      %v795 = vand.u32 %v794, 4294901760
      %v796 = vsub.f32 %v794, %v795
      %v797 = vand.u32 %v796, 4294901760
      %798 = vmatprep.subr.mxu0 %v797
      %v799 = vand.u32 %v270, 4294901760
      %v800 = vsub.f32 %v270, %v799
      %v801 = vand.u32 %v800, 4294901760
      %v802 = vsub.f32 %v800, %v801
      %v803 = vand.u32 %v802, 4294901760
      %804 = vmatpush1.msra.mxu0 %v803
      %v805 = vand.u32 %v273, 4294901760
      %v806 = vsub.f32 %v273, %v805
      %v807 = vand.u32 %v806, 4294901760
      %v808 = vsub.f32 %v806, %v807
      %v809 = vand.u32 %v808, 4294901760
      %810 = vmatprep.subr.mxu0 %v809
      %v811 = vand.u32 %v272, 4294901760
      %v812 = vsub.f32 %v272, %v811
      %v813 = vand.u32 %v812, 4294901760
      %v814 = vsub.f32 %v812, %v813
      %v815 = vand.u32 %v814, 4294901760
      %816 = vmatpush1.msra.mxu0 %v815
      %v817 = vand.u32 %v275, 4294901760
      %v818 = vsub.f32 %v275, %v817
      %v819 = vand.u32 %v818, 4294901760
      %v820 = vsub.f32 %v818, %v819
      %v821 = vand.u32 %v820, 4294901760
      %822 = vmatprep.subr.mxu0 %v821
      %v823 = vand.u32 %v274, 4294901760
      %v824 = vsub.f32 %v274, %v823
      %v825 = vand.u32 %v824, 4294901760
      %v826 = vsub.f32 %v824, %v825
      %v827 = vand.u32 %v826, 4294901760
      %828 = vmatpush1.msra.mxu0 %v827
      %v829 = vand.u32 %v277, 4294901760
      %v830 = vsub.f32 %v277, %v829
      %v831 = vand.u32 %v830, 4294901760
      %v832 = vsub.f32 %v830, %v831
      %v833 = vand.u32 %v832, 4294901760
      %834 = vmatprep.subr.mxu0 %v833
      %v835 = vand.u32 %v276, 4294901760
      %v836 = vsub.f32 %v276, %v835
      %v837 = vand.u32 %v836, 4294901760
      %v838 = vsub.f32 %v836, %v837
      %v839 = vand.u32 %v838, 4294901760
      %840 = vmatpush1.msra.mxu0 %v839
      %v841 = vand.u32 %v279, 4294901760
      %v842 = vsub.f32 %v279, %v841
      %v843 = vand.u32 %v842, 4294901760
      %v844 = vsub.f32 %v842, %v843
      %v845 = vand.u32 %v844, 4294901760
      %846 = vmatprep.subr.mxu0 %v845
      %v847 = vand.u32 %v278, 4294901760
      %v848 = vsub.f32 %v278, %v847
      %v849 = vand.u32 %v848, 4294901760
      %v850 = vsub.f32 %v848, %v849
      %v851 = vand.u32 %v850, 4294901760
      %852 = vmatpush1.msra.mxu0 %v851
      %v853 = vand.u32 %v281, 4294901760
      %v854 = vsub.f32 %v281, %v853
      %v855 = vand.u32 %v854, 4294901760
      %v856 = vsub.f32 %v854, %v855
      %v857 = vand.u32 %v856, 4294901760
      %858 = vmatprep.subr.mxu0 %v857
      %v859 = vand.u32 %v280, 4294901760
      %v860 = vsub.f32 %v280, %v859
      %v861 = vand.u32 %v860, 4294901760
      %v862 = vsub.f32 %v860, %v861
      %v863 = vand.u32 %v862, 4294901760
      %864 = vmatpush1.msra.mxu0 %v863
      %v865 = vand.u32 %v283, 4294901760
      %v866 = vsub.f32 %v283, %v865
      %v867 = vand.u32 %v866, 4294901760
      %v868 = vsub.f32 %v866, %v867
      %v869 = vand.u32 %v868, 4294901760
      %870 = vmatprep.subr.mxu0 %v869
      %v871 = vand.u32 %v282, 4294901760
      %v872 = vsub.f32 %v282, %v871
      %v873 = vand.u32 %v872, 4294901760
      %v874 = vsub.f32 %v872, %v873
      %v875 = vand.u32 %v874, 4294901760
      %876 = vmatpush1.msra.mxu0 %v875
      %v877 = vand.u32 %v285, 4294901760
      %v878 = vsub.f32 %v285, %v877
      %v879 = vand.u32 %v878, 4294901760
      %v880 = vsub.f32 %v878, %v879
      %v881 = vand.u32 %v880, 4294901760
      %882 = vmatprep.subr.mxu0 %v881
      %v883 = vand.u32 %v284, 4294901760
      %v884 = vsub.f32 %v284, %v883
      %v885 = vand.u32 %v884, 4294901760
      %v886 = vsub.f32 %v884, %v885
      %v887 = vand.u32 %v886, 4294901760
      %888 = vmatpush1.msra.mxu0 %v887
      %v889 = vand.u32 %v287, 4294901760
      %v890 = vsub.f32 %v287, %v889
      %v891 = vand.u32 %v890, 4294901760
      %v892 = vsub.f32 %v890, %v891
      %v893 = vand.u32 %v892, 4294901760
      %894 = vmatprep.subr.mxu0 %v893
      %v895 = vand.u32 %v286, 4294901760
      %v896 = vsub.f32 %v286, %v895
      %v897 = vand.u32 %v896, 4294901760
      %v898 = vsub.f32 %v896, %v897
      %v899 = vand.u32 %v898, 4294901760
      %900 = vmatpush1.msra.mxu0 %v899
      %v901 = vand.u32 %v289, 4294901760
      %v902 = vsub.f32 %v289, %v901
      %v903 = vand.u32 %v902, 4294901760
      %v904 = vsub.f32 %v902, %v903
      %v905 = vand.u32 %v904, 4294901760
      %906 = vmatprep.subr.mxu0 %v905
      %v907 = vand.u32 %v288, 4294901760
      %v908 = vsub.f32 %v288, %v907
      %v909 = vand.u32 %v908, 4294901760
      %v910 = vsub.f32 %v908, %v909
      %v911 = vand.u32 %v910, 4294901760
      %912 = vmatpush1.msra.mxu0 %v911
      %v913 = vand.u32 %v291, 4294901760
      %v914 = vsub.f32 %v291, %v913
      %v915 = vand.u32 %v914, 4294901760
      %v916 = vsub.f32 %v914, %v915
      %v917 = vand.u32 %v916, 4294901760
      %918 = vmatprep.subr.mxu0 %v917
      %v919 = vand.u32 %v290, 4294901760
      %v920 = vsub.f32 %v290, %v919
      %v921 = vand.u32 %v920, 4294901760
      %v922 = vsub.f32 %v920, %v921
      %v923 = vand.u32 %v922, 4294901760
      %924 = vmatpush1.msra.mxu0 %v923
      %v925 = vand.u32 %v293, 4294901760
      %v926 = vsub.f32 %v293, %v925
      %v927 = vand.u32 %v926, 4294901760
      %v928 = vsub.f32 %v926, %v927
      %v929 = vand.u32 %v928, 4294901760
      %930 = vmatprep.subr.mxu0 %v929
      %v931 = vand.u32 %v292, 4294901760
      %v932 = vsub.f32 %v292, %v931
      %v933 = vand.u32 %v932, 4294901760
      %v934 = vsub.f32 %v932, %v933
      %v935 = vand.u32 %v934, 4294901760
      %936 = vmatpush1.msra.mxu0 %v935
      %v937 = vand.u32 %v295, 4294901760
      %v938 = vsub.f32 %v295, %v937
      %v939 = vand.u32 %v938, 4294901760
      %v940 = vsub.f32 %v938, %v939
      %v941 = vand.u32 %v940, 4294901760
      %942 = vmatprep.subr.mxu0 %v941
      %v943 = vand.u32 %v294, 4294901760
      %v944 = vsub.f32 %v294, %v943
      %v945 = vand.u32 %v944, 4294901760
      %v946 = vsub.f32 %v944, %v945
      %v947 = vand.u32 %v946, 4294901760
      %948 = vmatpush1.msra.mxu0 %v947
      %v949 = vand.u32 %v297, 4294901760
      %v950 = vsub.f32 %v297, %v949
      %v951 = vand.u32 %v950, 4294901760
      %v952 = vsub.f32 %v950, %v951
      %v953 = vand.u32 %v952, 4294901760
      %954 = vmatprep.subr.mxu0 %v953
      %v955 = vand.u32 %v296, 4294901760
      %v956 = vsub.f32 %v296, %v955
      %v957 = vand.u32 %v956, 4294901760
      %v958 = vsub.f32 %v956, %v957
      %v959 = vand.u32 %v958, 4294901760
      %960 = vmatpush1.msra.mxu0 %v959
      %v961 = vand.u32 %v299, 4294901760
      %v962 = vsub.f32 %v299, %v961
      %v963 = vand.u32 %v962, 4294901760
      %v964 = vsub.f32 %v962, %v963
      %v965 = vand.u32 %v964, 4294901760
      %966 = vmatprep.subr.mxu0 %v965
      %v967 = vand.u32 %v298, 4294901760
      %v968 = vsub.f32 %v298, %v967
      %v969 = vand.u32 %v968, 4294901760
      %v970 = vsub.f32 %v968, %v969
      %v971 = vand.u32 %v970, 4294901760
      %972 = vmatpush1.msra.mxu0 %v971
      %v973 = vand.u32 %v217, 4294901760
      %974 = vmatprep.mubr.f32.mxu0 %v973
      %v975 = vand.u32 %v216, 4294901760
      %976 = vmatmul.mubr.f32.gmra.mrb[0].mxu0 %v975
      %v977 = vpop.f32.mrb[0].mxu0
      %v978 = vadd.f32 %v441, %v977
      %v979 = vpop.f32.mrb[0].mxu0
      %v980 = vadd.f32 %v443, %v979
      %v981 = vand.u32 %v219, 4294901760
      %982 = vmatprep.mubr.f32.mxu0 %v981
      %v983 = vand.u32 %v218, 4294901760
      %984 = vmatmul.mubr.f32.gmra.mrb[0].mxu0 %v983
      %v985 = vpop.f32.mrb[0].mxu0
      %v986 = vadd.f32 %v457, %v985
      %v987 = vpop.f32.mrb[0].mxu0
      %v988 = vadd.f32 %v459, %v987
      %v989 = vand.u32 %v221, 4294901760
      %990 = vmatprep.mubr.f32.mxu0 %v989
      %v991 = vand.u32 %v220, 4294901760
      %992 = vmatmul.mubr.f32.gmra.mrb[0].mxu0 %v991
      %v993 = vpop.f32.mrb[0].mxu0
      %v994 = vadd.f32 %v473, %v993
      %v995 = vpop.f32.mrb[0].mxu0
      %v996 = vadd.f32 %v475, %v995
      %v997 = vand.u32 %v223, 4294901760
      %998 = vmatprep.mubr.f32.mxu0 %v997
      %v999 = vand.u32 %v222, 4294901760
      %1000 = vmatmul.mubr.f32.gmra.mrb[0].mxu0 %v999
      %v1001 = vpop.f32.mrb[0].mxu0
      %v1002 = vadd.f32 %v489, %v1001
      %v1003 = vpop.f32.mrb[0].mxu0
      %v1004 = vadd.f32 %v491, %v1003
      %v1005 = vand.u32 %v225, 4294901760
      %1006 = vmatprep.mubr.f32.mxu0 %v1005
      %v1007 = vand.u32 %v224, 4294901760
      %1008 = vmatmul.mubr.f32.gmra.mrb[0].mxu0 %v1007
      %v1009 = vpop.f32.mrb[0].mxu0
      %v1010 = vadd.f32 %v505, %v1009
      %v1011 = vpop.f32.mrb[0].mxu0
      %v1012 = vadd.f32 %v507, %v1011
      %v1013 = vand.u32 %v227, 4294901760
      %1014 = vmatprep.mubr.f32.mxu0 %v1013
      %v1015 = vand.u32 %v226, 4294901760
      %1016 = vmatmul.mubr.f32.gmra.mrb[0].mxu0 %v1015
      %v1017 = vpop.f32.mrb[0].mxu0
      %v1018 = vadd.f32 %v521, %v1017
      %v1019 = vpop.f32.mrb[0].mxu0
      %v1020 = vadd.f32 %v523, %v1019
      %v1021 = vand.u32 %v229, 4294901760
      %1022 = vmatprep.mubr.f32.mxu0 %v1021
      %v1023 = vand.u32 %v228, 4294901760
      %1024 = vmatmul.mubr.f32.gmra.mrb[0].mxu0 %v1023
      %v1025 = vpop.f32.mrb[0].mxu0
      %v1026 = vadd.f32 %v537, %v1025
      %v1027 = vpop.f32.mrb[0].mxu0
      %v1028 = vadd.f32 %v539, %v1027
      %v1029 = vand.u32 %v231, 4294901760
      %1030 = vmatprep.mubr.f32.mxu0 %v1029
      %v1031 = vand.u32 %v230, 4294901760
      %1032 = vmatmul.mubr.f32.gmra.mrb[0].mxu0 %v1031
      %v1033 = vpop.f32.mrb[0].mxu0
      %v1034 = vadd.f32 %v553, %v1033
      %v1035 = vpop.f32.mrb[0].mxu0
      %v1036 = vadd.f32 %v555, %v1035
      %v1037 = vand.u32 %v233, 4294901760
      %1038 = vmatprep.mubr.f32.mxu0 %v1037
      %v1039 = vand.u32 %v232, 4294901760
      %1040 = vmatmul.mubr.f32.gmra.mrb[0].mxu0 %v1039
      %v1041 = vpop.f32.mrb[0].mxu0
      %v1042 = vadd.f32 %v569, %v1041
      %v1043 = vpop.f32.mrb[0].mxu0
      %v1044 = vadd.f32 %v571, %v1043
      %v1045 = vand.u32 %v235, 4294901760
      %1046 = vmatprep.mubr.f32.mxu0 %v1045
      %v1047 = vand.u32 %v234, 4294901760
      %1048 = vmatmul.mubr.f32.gmra.mrb[0].mxu0 %v1047
      %v1049 = vpop.f32.mrb[0].mxu0
      %v1050 = vadd.f32 %v585, %v1049
      %v1051 = vpop.f32.mrb[0].mxu0
      %v1052 = vadd.f32 %v587, %v1051
      %1053 = vdwg.mxu0
      %v1054 = vand.u32 %v237, 4294901760
      %v1055 = vsub.f32 %v237, %v1054
      %1056 = vmatprep.subr.mxu0 %v1055
      %v1057 = vand.u32 %v236, 4294901760
      %v1058 = vsub.f32 %v236, %v1057
      %1059 = vmatpush1.msra.mxu0 %v1058
      %v1060 = vand.u32 %v239, 4294901760
      %v1061 = vsub.f32 %v239, %v1060
      %1062 = vmatprep.subr.mxu0 %v1061
      %v1063 = vand.u32 %v238, 4294901760
      %v1064 = vsub.f32 %v238, %v1063
      %1065 = vmatpush1.msra.mxu0 %v1064
      %v1066 = vand.u32 %v241, 4294901760
      %v1067 = vsub.f32 %v241, %v1066
      %1068 = vmatprep.subr.mxu0 %v1067
      %v1069 = vand.u32 %v240, 4294901760
      %v1070 = vsub.f32 %v240, %v1069
      %1071 = vmatpush1.msra.mxu0 %v1070
      %v1072 = vand.u32 %v243, 4294901760
      %v1073 = vsub.f32 %v243, %v1072
      %1074 = vmatprep.subr.mxu0 %v1073
      %v1075 = vand.u32 %v242, 4294901760
      %v1076 = vsub.f32 %v242, %v1075
      %1077 = vmatpush1.msra.mxu0 %v1076
      %v1078 = vand.u32 %v245, 4294901760
      %v1079 = vsub.f32 %v245, %v1078
      %1080 = vmatprep.subr.mxu0 %v1079
      %v1081 = vand.u32 %v244, 4294901760
      %v1082 = vsub.f32 %v244, %v1081
      %1083 = vmatpush1.msra.mxu0 %v1082
      %v1084 = vand.u32 %v247, 4294901760
      %v1085 = vsub.f32 %v247, %v1084
      %1086 = vmatprep.subr.mxu0 %v1085
      %v1087 = vand.u32 %v246, 4294901760
      %v1088 = vsub.f32 %v246, %v1087
      %1089 = vmatpush1.msra.mxu0 %v1088
      %v1090 = vand.u32 %v249, 4294901760
      %v1091 = vsub.f32 %v249, %v1090
      %1092 = vmatprep.subr.mxu0 %v1091
      %v1093 = vand.u32 %v248, 4294901760
      %v1094 = vsub.f32 %v248, %v1093
      %1095 = vmatpush1.msra.mxu0 %v1094
      %v1096 = vand.u32 %v251, 4294901760
      %v1097 = vsub.f32 %v251, %v1096
      %1098 = vmatprep.subr.mxu0 %v1097
      %v1099 = vand.u32 %v250, 4294901760
      %v1100 = vsub.f32 %v250, %v1099
      %1101 = vmatpush1.msra.mxu0 %v1100
      %v1102 = vand.u32 %v253, 4294901760
      %v1103 = vsub.f32 %v253, %v1102
      %1104 = vmatprep.subr.mxu0 %v1103
      %v1105 = vand.u32 %v252, 4294901760
      %v1106 = vsub.f32 %v252, %v1105
      %1107 = vmatpush1.msra.mxu0 %v1106
      %v1108 = vand.u32 %v255, 4294901760
      %v1109 = vsub.f32 %v255, %v1108
      %1110 = vmatprep.subr.mxu0 %v1109
      %v1111 = vand.u32 %v254, 4294901760
      %v1112 = vsub.f32 %v254, %v1111
      %1113 = vmatpush1.msra.mxu0 %v1112
      %v1114 = vand.u32 %v257, 4294901760
      %v1115 = vsub.f32 %v257, %v1114
      %1116 = vmatprep.subr.mxu0 %v1115
      %v1117 = vand.u32 %v256, 4294901760
      %v1118 = vsub.f32 %v256, %v1117
      %1119 = vmatpush1.msra.mxu0 %v1118
      %v1120 = vand.u32 %v259, 4294901760
      %v1121 = vsub.f32 %v259, %v1120
      %1122 = vmatprep.subr.mxu0 %v1121
      %v1123 = vand.u32 %v258, 4294901760
      %v1124 = vsub.f32 %v258, %v1123
      %1125 = vmatpush1.msra.mxu0 %v1124
      %v1126 = vand.u32 %v261, 4294901760
      %v1127 = vsub.f32 %v261, %v1126
      %1128 = vmatprep.subr.mxu0 %v1127
      %v1129 = vand.u32 %v260, 4294901760
      %v1130 = vsub.f32 %v260, %v1129
      %1131 = vmatpush1.msra.mxu0 %v1130
      %v1132 = vand.u32 %v263, 4294901760
      %v1133 = vsub.f32 %v263, %v1132
      %1134 = vmatprep.subr.mxu0 %v1133
      %v1135 = vand.u32 %v262, 4294901760
      %v1136 = vsub.f32 %v262, %v1135
      %1137 = vmatpush1.msra.mxu0 %v1136
      %v1138 = vand.u32 %v265, 4294901760
      %v1139 = vsub.f32 %v265, %v1138
      %1140 = vmatprep.subr.mxu0 %v1139
      %v1141 = vand.u32 %v264, 4294901760
      %v1142 = vsub.f32 %v264, %v1141
      %1143 = vmatpush1.msra.mxu0 %v1142
      %v1144 = vand.u32 %v267, 4294901760
      %v1145 = vsub.f32 %v267, %v1144
      %1146 = vmatprep.subr.mxu0 %v1145
      %v1147 = vand.u32 %v266, 4294901760
      %v1148 = vsub.f32 %v266, %v1147
      %1149 = vmatpush1.msra.mxu0 %v1148
      %v1150 = vand.u32 %v269, 4294901760
      %v1151 = vsub.f32 %v269, %v1150
      %1152 = vmatprep.subr.mxu0 %v1151
      %v1153 = vand.u32 %v268, 4294901760
      %v1154 = vsub.f32 %v268, %v1153
      %1155 = vmatpush1.msra.mxu0 %v1154
      %v1156 = vand.u32 %v271, 4294901760
      %v1157 = vsub.f32 %v271, %v1156
      %1158 = vmatprep.subr.mxu0 %v1157
      %v1159 = vand.u32 %v270, 4294901760
      %v1160 = vsub.f32 %v270, %v1159
      %1161 = vmatpush1.msra.mxu0 %v1160
      %v1162 = vand.u32 %v273, 4294901760
      %v1163 = vsub.f32 %v273, %v1162
      %1164 = vmatprep.subr.mxu0 %v1163
      %v1165 = vand.u32 %v272, 4294901760
      %v1166 = vsub.f32 %v272, %v1165
      %1167 = vmatpush1.msra.mxu0 %v1166
      %v1168 = vand.u32 %v275, 4294901760
      %v1169 = vsub.f32 %v275, %v1168
      %1170 = vmatprep.subr.mxu0 %v1169
      %v1171 = vand.u32 %v274, 4294901760
      %v1172 = vsub.f32 %v274, %v1171
      %1173 = vmatpush1.msra.mxu0 %v1172
      %v1174 = vand.u32 %v277, 4294901760
      %v1175 = vsub.f32 %v277, %v1174
      %1176 = vmatprep.subr.mxu0 %v1175
      %v1177 = vand.u32 %v276, 4294901760
      %v1178 = vsub.f32 %v276, %v1177
      %1179 = vmatpush1.msra.mxu0 %v1178
      %v1180 = vand.u32 %v279, 4294901760
      %v1181 = vsub.f32 %v279, %v1180
      %1182 = vmatprep.subr.mxu0 %v1181
      %v1183 = vand.u32 %v278, 4294901760
      %v1184 = vsub.f32 %v278, %v1183
      %1185 = vmatpush1.msra.mxu0 %v1184
      %v1186 = vand.u32 %v281, 4294901760
      %v1187 = vsub.f32 %v281, %v1186
      %1188 = vmatprep.subr.mxu0 %v1187
      %v1189 = vand.u32 %v280, 4294901760
      %v1190 = vsub.f32 %v280, %v1189
      %1191 = vmatpush1.msra.mxu0 %v1190
      %v1192 = vand.u32 %v283, 4294901760
      %v1193 = vsub.f32 %v283, %v1192
      %1194 = vmatprep.subr.mxu0 %v1193
      %v1195 = vand.u32 %v282, 4294901760
      %v1196 = vsub.f32 %v282, %v1195
      %1197 = vmatpush1.msra.mxu0 %v1196
      %v1198 = vand.u32 %v285, 4294901760
      %v1199 = vsub.f32 %v285, %v1198
      %1200 = vmatprep.subr.mxu0 %v1199
      %v1201 = vand.u32 %v284, 4294901760
      %v1202 = vsub.f32 %v284, %v1201
      %1203 = vmatpush1.msra.mxu0 %v1202
      %v1204 = vand.u32 %v287, 4294901760
      %v1205 = vsub.f32 %v287, %v1204
      %1206 = vmatprep.subr.mxu0 %v1205
      %v1207 = vand.u32 %v286, 4294901760
      %v1208 = vsub.f32 %v286, %v1207
      %1209 = vmatpush1.msra.mxu0 %v1208
      %v1210 = vand.u32 %v289, 4294901760
      %v1211 = vsub.f32 %v289, %v1210
      %1212 = vmatprep.subr.mxu0 %v1211
      %v1213 = vand.u32 %v288, 4294901760
      %v1214 = vsub.f32 %v288, %v1213
      %1215 = vmatpush1.msra.mxu0 %v1214
      %v1216 = vand.u32 %v291, 4294901760
      %v1217 = vsub.f32 %v291, %v1216
      %1218 = vmatprep.subr.mxu0 %v1217
      %v1219 = vand.u32 %v290, 4294901760
      %v1220 = vsub.f32 %v290, %v1219
      %1221 = vmatpush1.msra.mxu0 %v1220
      %v1222 = vand.u32 %v293, 4294901760
      %v1223 = vsub.f32 %v293, %v1222
      %1224 = vmatprep.subr.mxu0 %v1223
      %v1225 = vand.u32 %v292, 4294901760
      %v1226 = vsub.f32 %v292, %v1225
      %1227 = vmatpush1.msra.mxu0 %v1226
      %v1228 = vand.u32 %v295, 4294901760
      %v1229 = vsub.f32 %v295, %v1228
      %1230 = vmatprep.subr.mxu0 %v1229
      %v1231 = vand.u32 %v294, 4294901760
      %v1232 = vsub.f32 %v294, %v1231
      %1233 = vmatpush1.msra.mxu0 %v1232
      %v1234 = vand.u32 %v297, 4294901760
      %v1235 = vsub.f32 %v297, %v1234
      %1236 = vmatprep.subr.mxu0 %v1235
      %v1237 = vand.u32 %v296, 4294901760
      %v1238 = vsub.f32 %v296, %v1237
      %1239 = vmatpush1.msra.mxu0 %v1238
      %v1240 = vand.u32 %v299, 4294901760
      %v1241 = vsub.f32 %v299, %v1240
      %1242 = vmatprep.subr.mxu0 %v1241
      %v1243 = vand.u32 %v298, 4294901760
      %v1244 = vsub.f32 %v298, %v1243
      %1245 = vmatpush1.msra.mxu0 %v1244
      %v1246 = vand.u32 %v217, 4294901760
      %v1247 = vsub.f32 %v217, %v1246
      %1248 = vmatprep.mubr.f32.mxu0 %v1247
      %v1249 = vand.u32 %v216, 4294901760
      %v1250 = vsub.f32 %v216, %v1249
      %1251 = vmatmul.mubr.f32.gmra.mrb[0].mxu0 %v1250
      %v1252 = vpop.f32.mrb[0].mxu0
      %v1253 = vadd.f32 %v978, %v1252
      %v1254 = vpop.f32.mrb[0].mxu0
      %v1255 = vadd.f32 %v980, %v1254
      %v1256 = vand.u32 %v219, 4294901760
      %v1257 = vsub.f32 %v219, %v1256
      %1258 = vmatprep.mubr.f32.mxu0 %v1257
      %v1259 = vand.u32 %v218, 4294901760
      %v1260 = vsub.f32 %v218, %v1259
      %1261 = vmatmul.mubr.f32.gmra.mrb[0].mxu0 %v1260
      %v1262 = vpop.f32.mrb[0].mxu0
      %v1263 = vadd.f32 %v986, %v1262
      %v1264 = vpop.f32.mrb[0].mxu0
      %v1265 = vadd.f32 %v988, %v1264
      %v1266 = vand.u32 %v221, 4294901760
      %v1267 = vsub.f32 %v221, %v1266
      %1268 = vmatprep.mubr.f32.mxu0 %v1267
      %v1269 = vand.u32 %v220, 4294901760
      %v1270 = vsub.f32 %v220, %v1269
      %1271 = vmatmul.mubr.f32.gmra.mrb[0].mxu0 %v1270
      %v1272 = vpop.f32.mrb[0].mxu0
      %v1273 = vadd.f32 %v994, %v1272
      %v1274 = vpop.f32.mrb[0].mxu0
      %v1275 = vadd.f32 %v996, %v1274
      %v1276 = vand.u32 %v223, 4294901760
      %v1277 = vsub.f32 %v223, %v1276
      %1278 = vmatprep.mubr.f32.mxu0 %v1277
      %v1279 = vand.u32 %v222, 4294901760
      %v1280 = vsub.f32 %v222, %v1279
      %1281 = vmatmul.mubr.f32.gmra.mrb[0].mxu0 %v1280
      %v1282 = vpop.f32.mrb[0].mxu0
      %v1283 = vadd.f32 %v1002, %v1282
      %v1284 = vpop.f32.mrb[0].mxu0
      %v1285 = vadd.f32 %v1004, %v1284
      %v1286 = vand.u32 %v225, 4294901760
      %v1287 = vsub.f32 %v225, %v1286
      %1288 = vmatprep.mubr.f32.mxu0 %v1287
      %v1289 = vand.u32 %v224, 4294901760
      %v1290 = vsub.f32 %v224, %v1289
      %1291 = vmatmul.mubr.f32.gmra.mrb[0].mxu0 %v1290
      %v1292 = vpop.f32.mrb[0].mxu0
      %v1293 = vadd.f32 %v1010, %v1292
      %v1294 = vpop.f32.mrb[0].mxu0
      %v1295 = vadd.f32 %v1012, %v1294
      %v1296 = vand.u32 %v227, 4294901760
      %v1297 = vsub.f32 %v227, %v1296
      %1298 = vmatprep.mubr.f32.mxu0 %v1297
      %v1299 = vand.u32 %v226, 4294901760
      %v1300 = vsub.f32 %v226, %v1299
      %1301 = vmatmul.mubr.f32.gmra.mrb[0].mxu0 %v1300
      %v1302 = vpop.f32.mrb[0].mxu0
      %v1303 = vadd.f32 %v1018, %v1302
      %v1304 = vpop.f32.mrb[0].mxu0
      %v1305 = vadd.f32 %v1020, %v1304
      %v1306 = vand.u32 %v229, 4294901760
      %v1307 = vsub.f32 %v229, %v1306
      %1308 = vmatprep.mubr.f32.mxu0 %v1307
      %v1309 = vand.u32 %v228, 4294901760
      %v1310 = vsub.f32 %v228, %v1309
      %1311 = vmatmul.mubr.f32.gmra.mrb[0].mxu0 %v1310
      %v1312 = vpop.f32.mrb[0].mxu0
      %v1313 = vadd.f32 %v1026, %v1312
      %v1314 = vpop.f32.mrb[0].mxu0
      %v1315 = vadd.f32 %v1028, %v1314
      %v1316 = vand.u32 %v231, 4294901760
      %v1317 = vsub.f32 %v231, %v1316
      %1318 = vmatprep.mubr.f32.mxu0 %v1317
      %v1319 = vand.u32 %v230, 4294901760
      %v1320 = vsub.f32 %v230, %v1319
      %1321 = vmatmul.mubr.f32.gmra.mrb[0].mxu0 %v1320
      %v1322 = vpop.f32.mrb[0].mxu0
      %v1323 = vadd.f32 %v1034, %v1322
      %v1324 = vpop.f32.mrb[0].mxu0
      %v1325 = vadd.f32 %v1036, %v1324
      %v1326 = vand.u32 %v233, 4294901760
      %v1327 = vsub.f32 %v233, %v1326
      %1328 = vmatprep.mubr.f32.mxu0 %v1327
      %v1329 = vand.u32 %v232, 4294901760
      %v1330 = vsub.f32 %v232, %v1329
      %1331 = vmatmul.mubr.f32.gmra.mrb[0].mxu0 %v1330
      %v1332 = vpop.f32.mrb[0].mxu0
      %v1333 = vadd.f32 %v1042, %v1332
      %v1334 = vpop.f32.mrb[0].mxu0
      %v1335 = vadd.f32 %v1044, %v1334
      %v1336 = vand.u32 %v235, 4294901760
      %v1337 = vsub.f32 %v235, %v1336
      %1338 = vmatprep.mubr.f32.mxu0 %v1337
      %v1339 = vand.u32 %v234, 4294901760
      %v1340 = vsub.f32 %v234, %v1339
      %1341 = vmatmul.mubr.f32.gmra.mrb[0].mxu0 %v1340
      %v1342 = vpop.f32.mrb[0].mxu0
      %v1343 = vadd.f32 %v1050, %v1342
      %v1344 = vpop.f32.mrb[0].mxu0
      %v1345 = vadd.f32 %v1052, %v1344
      %1346 = vdwg.mxu0
      %v1347 = vand.u32 %v237, 4294901760
      %1348 = vmatprep.subr.mxu0 %v1347
      %v1349 = vand.u32 %v236, 4294901760
      %1350 = vmatpush1.msra.mxu0 %v1349
      %v1351 = vand.u32 %v239, 4294901760
      %1352 = vmatprep.subr.mxu0 %v1351
      %v1353 = vand.u32 %v238, 4294901760
      %1354 = vmatpush1.msra.mxu0 %v1353
      %v1355 = vand.u32 %v241, 4294901760
      %1356 = vmatprep.subr.mxu0 %v1355
      %v1357 = vand.u32 %v240, 4294901760
      %1358 = vmatpush1.msra.mxu0 %v1357
      %v1359 = vand.u32 %v243, 4294901760
      %1360 = vmatprep.subr.mxu0 %v1359
      %v1361 = vand.u32 %v242, 4294901760
      %1362 = vmatpush1.msra.mxu0 %v1361
      %v1363 = vand.u32 %v245, 4294901760
      %1364 = vmatprep.subr.mxu0 %v1363
      %v1365 = vand.u32 %v244, 4294901760
      %1366 = vmatpush1.msra.mxu0 %v1365
      %v1367 = vand.u32 %v247, 4294901760
      %1368 = vmatprep.subr.mxu0 %v1367
      %v1369 = vand.u32 %v246, 4294901760
      %1370 = vmatpush1.msra.mxu0 %v1369
      %v1371 = vand.u32 %v249, 4294901760
      %1372 = vmatprep.subr.mxu0 %v1371
      %v1373 = vand.u32 %v248, 4294901760
      %1374 = vmatpush1.msra.mxu0 %v1373
      %v1375 = vand.u32 %v251, 4294901760
      %1376 = vmatprep.subr.mxu0 %v1375
      %v1377 = vand.u32 %v250, 4294901760
      %1378 = vmatpush1.msra.mxu0 %v1377
      %v1379 = vand.u32 %v253, 4294901760
      %1380 = vmatprep.subr.mxu0 %v1379
      %v1381 = vand.u32 %v252, 4294901760
      %1382 = vmatpush1.msra.mxu0 %v1381
      %v1383 = vand.u32 %v255, 4294901760
      %1384 = vmatprep.subr.mxu0 %v1383
      %v1385 = vand.u32 %v254, 4294901760
      %1386 = vmatpush1.msra.mxu0 %v1385
      %v1387 = vand.u32 %v257, 4294901760
      %1388 = vmatprep.subr.mxu0 %v1387
      %v1389 = vand.u32 %v256, 4294901760
      %1390 = vmatpush1.msra.mxu0 %v1389
      %v1391 = vand.u32 %v259, 4294901760
      %1392 = vmatprep.subr.mxu0 %v1391
      %v1393 = vand.u32 %v258, 4294901760
      %1394 = vmatpush1.msra.mxu0 %v1393
      %v1395 = vand.u32 %v261, 4294901760
      %1396 = vmatprep.subr.mxu0 %v1395
      %v1397 = vand.u32 %v260, 4294901760
      %1398 = vmatpush1.msra.mxu0 %v1397
      %v1399 = vand.u32 %v263, 4294901760
      %1400 = vmatprep.subr.mxu0 %v1399
      %v1401 = vand.u32 %v262, 4294901760
      %1402 = vmatpush1.msra.mxu0 %v1401
      %v1403 = vand.u32 %v265, 4294901760
      %1404 = vmatprep.subr.mxu0 %v1403
      %v1405 = vand.u32 %v264, 4294901760
      %1406 = vmatpush1.msra.mxu0 %v1405
      %v1407 = vand.u32 %v267, 4294901760
      %1408 = vmatprep.subr.mxu0 %v1407
      %v1409 = vand.u32 %v266, 4294901760
      %1410 = vmatpush1.msra.mxu0 %v1409
      %v1411 = vand.u32 %v269, 4294901760
      %1412 = vmatprep.subr.mxu0 %v1411
      %v1413 = vand.u32 %v268, 4294901760
      %1414 = vmatpush1.msra.mxu0 %v1413
      %v1415 = vand.u32 %v271, 4294901760
      %1416 = vmatprep.subr.mxu0 %v1415
      %v1417 = vand.u32 %v270, 4294901760
      %1418 = vmatpush1.msra.mxu0 %v1417
      %v1419 = vand.u32 %v273, 4294901760
      %1420 = vmatprep.subr.mxu0 %v1419
      %v1421 = vand.u32 %v272, 4294901760
      %1422 = vmatpush1.msra.mxu0 %v1421
      %v1423 = vand.u32 %v275, 4294901760
      %1424 = vmatprep.subr.mxu0 %v1423
      %v1425 = vand.u32 %v274, 4294901760
      %1426 = vmatpush1.msra.mxu0 %v1425
      %v1427 = vand.u32 %v277, 4294901760
      %1428 = vmatprep.subr.mxu0 %v1427
      %v1429 = vand.u32 %v276, 4294901760
      %1430 = vmatpush1.msra.mxu0 %v1429
      %v1431 = vand.u32 %v279, 4294901760
      %1432 = vmatprep.subr.mxu0 %v1431
      %v1433 = vand.u32 %v278, 4294901760
      %1434 = vmatpush1.msra.mxu0 %v1433
      %v1435 = vand.u32 %v281, 4294901760
      %1436 = vmatprep.subr.mxu0 %v1435
      %v1437 = vand.u32 %v280, 4294901760
      %1438 = vmatpush1.msra.mxu0 %v1437
      %v1439 = vand.u32 %v283, 4294901760
      %1440 = vmatprep.subr.mxu0 %v1439
      %v1441 = vand.u32 %v282, 4294901760
      %1442 = vmatpush1.msra.mxu0 %v1441
      %v1443 = vand.u32 %v285, 4294901760
      %1444 = vmatprep.subr.mxu0 %v1443
      %v1445 = vand.u32 %v284, 4294901760
      %1446 = vmatpush1.msra.mxu0 %v1445
      %v1447 = vand.u32 %v287, 4294901760
      %1448 = vmatprep.subr.mxu0 %v1447
      %v1449 = vand.u32 %v286, 4294901760
      %1450 = vmatpush1.msra.mxu0 %v1449
      %v1451 = vand.u32 %v289, 4294901760
      %1452 = vmatprep.subr.mxu0 %v1451
      %v1453 = vand.u32 %v288, 4294901760
      %1454 = vmatpush1.msra.mxu0 %v1453
      %v1455 = vand.u32 %v291, 4294901760
      %1456 = vmatprep.subr.mxu0 %v1455
      %v1457 = vand.u32 %v290, 4294901760
      %1458 = vmatpush1.msra.mxu0 %v1457
      %v1459 = vand.u32 %v293, 4294901760
      %1460 = vmatprep.subr.mxu0 %v1459
      %v1461 = vand.u32 %v292, 4294901760
      %1462 = vmatpush1.msra.mxu0 %v1461
      %v1463 = vand.u32 %v295, 4294901760
      %1464 = vmatprep.subr.mxu0 %v1463
      %v1465 = vand.u32 %v294, 4294901760
      %1466 = vmatpush1.msra.mxu0 %v1465
      %v1467 = vand.u32 %v297, 4294901760
      %1468 = vmatprep.subr.mxu0 %v1467
      %v1469 = vand.u32 %v296, 4294901760
      %1470 = vmatpush1.msra.mxu0 %v1469
      %v1471 = vand.u32 %v299, 4294901760
      %1472 = vmatprep.subr.mxu0 %v1471
      %v1473 = vand.u32 %v298, 4294901760
      %1474 = vmatpush1.msra.mxu0 %v1473
      %v1475 = vand.u32 %v217, 4294901760
      %v1476 = vsub.f32 %v217, %v1475
      %v1477 = vand.u32 %v1476, 4294901760
      %1478 = vmatprep.mubr.f32.mxu0 %v1477
      %v1479 = vand.u32 %v216, 4294901760
      %v1480 = vsub.f32 %v216, %v1479
      %v1481 = vand.u32 %v1480, 4294901760
      %1482 = vmatmul.mubr.f32.gmra.mrb[0].mxu0 %v1481
      %v1483 = vpop.f32.mrb[0].mxu0
      %v1484 = vadd.f32 %v1253, %v1483
      %v1485 = vpop.f32.mrb[0].mxu0
      %v1486 = vadd.f32 %v1255, %v1485
      %v1487 = vand.u32 %v219, 4294901760
      %v1488 = vsub.f32 %v219, %v1487
      %v1489 = vand.u32 %v1488, 4294901760
      %1490 = vmatprep.mubr.f32.mxu0 %v1489
      %v1491 = vand.u32 %v218, 4294901760
      %v1492 = vsub.f32 %v218, %v1491
      %v1493 = vand.u32 %v1492, 4294901760
      %1494 = vmatmul.mubr.f32.gmra.mrb[0].mxu0 %v1493
      %v1495 = vpop.f32.mrb[0].mxu0
      %v1496 = vadd.f32 %v1263, %v1495
      %v1497 = vpop.f32.mrb[0].mxu0
      %v1498 = vadd.f32 %v1265, %v1497
      %v1499 = vand.u32 %v221, 4294901760
      %v1500 = vsub.f32 %v221, %v1499
      %v1501 = vand.u32 %v1500, 4294901760
      %1502 = vmatprep.mubr.f32.mxu0 %v1501
      %v1503 = vand.u32 %v220, 4294901760
      %v1504 = vsub.f32 %v220, %v1503
      %v1505 = vand.u32 %v1504, 4294901760
      %1506 = vmatmul.mubr.f32.gmra.mrb[0].mxu0 %v1505
      %v1507 = vpop.f32.mrb[0].mxu0
      %v1508 = vadd.f32 %v1273, %v1507
      %v1509 = vpop.f32.mrb[0].mxu0
      %v1510 = vadd.f32 %v1275, %v1509
      %v1511 = vand.u32 %v223, 4294901760
      %v1512 = vsub.f32 %v223, %v1511
      %v1513 = vand.u32 %v1512, 4294901760
      %1514 = vmatprep.mubr.f32.mxu0 %v1513
      %v1515 = vand.u32 %v222, 4294901760
      %v1516 = vsub.f32 %v222, %v1515
      %v1517 = vand.u32 %v1516, 4294901760
      %1518 = vmatmul.mubr.f32.gmra.mrb[0].mxu0 %v1517
      %v1519 = vpop.f32.mrb[0].mxu0
      %v1520 = vadd.f32 %v1283, %v1519
      %v1521 = vpop.f32.mrb[0].mxu0
      %v1522 = vadd.f32 %v1285, %v1521
      %v1523 = vand.u32 %v225, 4294901760
      %v1524 = vsub.f32 %v225, %v1523
      %v1525 = vand.u32 %v1524, 4294901760
      %1526 = vmatprep.mubr.f32.mxu0 %v1525
      %v1527 = vand.u32 %v224, 4294901760
      %v1528 = vsub.f32 %v224, %v1527
      %v1529 = vand.u32 %v1528, 4294901760
      %1530 = vmatmul.mubr.f32.gmra.mrb[0].mxu0 %v1529
      %v1531 = vpop.f32.mrb[0].mxu0
      %v1532 = vadd.f32 %v1293, %v1531
      %v1533 = vpop.f32.mrb[0].mxu0
      %v1534 = vadd.f32 %v1295, %v1533
      %v1535 = vand.u32 %v227, 4294901760
      %v1536 = vsub.f32 %v227, %v1535
      %v1537 = vand.u32 %v1536, 4294901760
      %1538 = vmatprep.mubr.f32.mxu0 %v1537
      %v1539 = vand.u32 %v226, 4294901760
      %v1540 = vsub.f32 %v226, %v1539
      %v1541 = vand.u32 %v1540, 4294901760
      %1542 = vmatmul.mubr.f32.gmra.mrb[0].mxu0 %v1541
      %v1543 = vpop.f32.mrb[0].mxu0
      %v1544 = vadd.f32 %v1303, %v1543
      %v1545 = vpop.f32.mrb[0].mxu0
      %v1546 = vadd.f32 %v1305, %v1545
      %v1547 = vand.u32 %v229, 4294901760
      %v1548 = vsub.f32 %v229, %v1547
      %v1549 = vand.u32 %v1548, 4294901760
      %1550 = vmatprep.mubr.f32.mxu0 %v1549
      %v1551 = vand.u32 %v228, 4294901760
      %v1552 = vsub.f32 %v228, %v1551
      %v1553 = vand.u32 %v1552, 4294901760
      %1554 = vmatmul.mubr.f32.gmra.mrb[0].mxu0 %v1553
      %v1555 = vpop.f32.mrb[0].mxu0
      %v1556 = vadd.f32 %v1313, %v1555
      %v1557 = vpop.f32.mrb[0].mxu0
      %v1558 = vadd.f32 %v1315, %v1557
      %v1559 = vand.u32 %v231, 4294901760
      %v1560 = vsub.f32 %v231, %v1559
      %v1561 = vand.u32 %v1560, 4294901760
      %1562 = vmatprep.mubr.f32.mxu0 %v1561
      %v1563 = vand.u32 %v230, 4294901760
      %v1564 = vsub.f32 %v230, %v1563
      %v1565 = vand.u32 %v1564, 4294901760
      %1566 = vmatmul.mubr.f32.gmra.mrb[0].mxu0 %v1565
      %v1567 = vpop.f32.mrb[0].mxu0
      %v1568 = vadd.f32 %v1323, %v1567
      %v1569 = vpop.f32.mrb[0].mxu0
      %v1570 = vadd.f32 %v1325, %v1569
      %v1571 = vand.u32 %v233, 4294901760
      %v1572 = vsub.f32 %v233, %v1571
      %v1573 = vand.u32 %v1572, 4294901760
      %1574 = vmatprep.mubr.f32.mxu0 %v1573
      %v1575 = vand.u32 %v232, 4294901760
      %v1576 = vsub.f32 %v232, %v1575
      %v1577 = vand.u32 %v1576, 4294901760
      %1578 = vmatmul.mubr.f32.gmra.mrb[0].mxu0 %v1577
      %v1579 = vpop.f32.mrb[0].mxu0
      %v1580 = vadd.f32 %v1333, %v1579
      %v1581 = vpop.f32.mrb[0].mxu0
      %v1582 = vadd.f32 %v1335, %v1581
      %v1583 = vand.u32 %v235, 4294901760
      %v1584 = vsub.f32 %v235, %v1583
      %v1585 = vand.u32 %v1584, 4294901760
      %1586 = vmatprep.mubr.f32.mxu0 %v1585
      %v1587 = vand.u32 %v234, 4294901760
      %v1588 = vsub.f32 %v234, %v1587
      %v1589 = vand.u32 %v1588, 4294901760
      %1590 = vmatmul.mubr.f32.gmra.mrb[0].mxu0 %v1589
      %v1591 = vpop.f32.mrb[0].mxu0
      %v1592 = vadd.f32 %v1343, %v1591
      %v1593 = vpop.f32.mrb[0].mxu0
      %v1594 = vadd.f32 %v1345, %v1593
      %1595 = vdwg.mxu0
      %v1596 = vand.u32 %v237, 4294901760
      %v1597 = vsub.f32 %v237, %v1596
      %v1598 = vand.u32 %v1597, 4294901760
      %1599 = vmatprep.subr.mxu0 %v1598
      %v1600 = vand.u32 %v236, 4294901760
      %v1601 = vsub.f32 %v236, %v1600
      %v1602 = vand.u32 %v1601, 4294901760
      %1603 = vmatpush1.msra.mxu0 %v1602
      %v1604 = vand.u32 %v239, 4294901760
      %v1605 = vsub.f32 %v239, %v1604
      %v1606 = vand.u32 %v1605, 4294901760
      %1607 = vmatprep.subr.mxu0 %v1606
      %v1608 = vand.u32 %v238, 4294901760
      %v1609 = vsub.f32 %v238, %v1608
      %v1610 = vand.u32 %v1609, 4294901760
      %1611 = vmatpush1.msra.mxu0 %v1610
      %v1612 = vand.u32 %v241, 4294901760
      %v1613 = vsub.f32 %v241, %v1612
      %v1614 = vand.u32 %v1613, 4294901760
      %1615 = vmatprep.subr.mxu0 %v1614
      %v1616 = vand.u32 %v240, 4294901760
      %v1617 = vsub.f32 %v240, %v1616
      %v1618 = vand.u32 %v1617, 4294901760
      %1619 = vmatpush1.msra.mxu0 %v1618
      %v1620 = vand.u32 %v243, 4294901760
      %v1621 = vsub.f32 %v243, %v1620
      %v1622 = vand.u32 %v1621, 4294901760
      %1623 = vmatprep.subr.mxu0 %v1622
      %v1624 = vand.u32 %v242, 4294901760
      %v1625 = vsub.f32 %v242, %v1624
      %v1626 = vand.u32 %v1625, 4294901760
      %1627 = vmatpush1.msra.mxu0 %v1626
      %v1628 = vand.u32 %v245, 4294901760
      %v1629 = vsub.f32 %v245, %v1628
      %v1630 = vand.u32 %v1629, 4294901760
      %1631 = vmatprep.subr.mxu0 %v1630
      %v1632 = vand.u32 %v244, 4294901760
      %v1633 = vsub.f32 %v244, %v1632
      %v1634 = vand.u32 %v1633, 4294901760
      %1635 = vmatpush1.msra.mxu0 %v1634
      %v1636 = vand.u32 %v247, 4294901760
      %v1637 = vsub.f32 %v247, %v1636
      %v1638 = vand.u32 %v1637, 4294901760
      %1639 = vmatprep.subr.mxu0 %v1638
      %v1640 = vand.u32 %v246, 4294901760
      %v1641 = vsub.f32 %v246, %v1640
      %v1642 = vand.u32 %v1641, 4294901760
      %1643 = vmatpush1.msra.mxu0 %v1642
      %v1644 = vand.u32 %v249, 4294901760
      %v1645 = vsub.f32 %v249, %v1644
      %v1646 = vand.u32 %v1645, 4294901760
      %1647 = vmatprep.subr.mxu0 %v1646
      %v1648 = vand.u32 %v248, 4294901760
      %v1649 = vsub.f32 %v248, %v1648
      %v1650 = vand.u32 %v1649, 4294901760
      %1651 = vmatpush1.msra.mxu0 %v1650
      %v1652 = vand.u32 %v251, 4294901760
      %v1653 = vsub.f32 %v251, %v1652
      %v1654 = vand.u32 %v1653, 4294901760
      %1655 = vmatprep.subr.mxu0 %v1654
      %v1656 = vand.u32 %v250, 4294901760
      %v1657 = vsub.f32 %v250, %v1656
      %v1658 = vand.u32 %v1657, 4294901760
      %1659 = vmatpush1.msra.mxu0 %v1658
      %v1660 = vand.u32 %v253, 4294901760
      %v1661 = vsub.f32 %v253, %v1660
      %v1662 = vand.u32 %v1661, 4294901760
      %1663 = vmatprep.subr.mxu0 %v1662
      %v1664 = vand.u32 %v252, 4294901760
      %v1665 = vsub.f32 %v252, %v1664
      %v1666 = vand.u32 %v1665, 4294901760
      %1667 = vmatpush1.msra.mxu0 %v1666
      %v1668 = vand.u32 %v255, 4294901760
      %v1669 = vsub.f32 %v255, %v1668
      %v1670 = vand.u32 %v1669, 4294901760
      %1671 = vmatprep.subr.mxu0 %v1670
      %v1672 = vand.u32 %v254, 4294901760
      %v1673 = vsub.f32 %v254, %v1672
      %v1674 = vand.u32 %v1673, 4294901760
      %1675 = vmatpush1.msra.mxu0 %v1674
      %v1676 = vand.u32 %v257, 4294901760
      %v1677 = vsub.f32 %v257, %v1676
      %v1678 = vand.u32 %v1677, 4294901760
      %1679 = vmatprep.subr.mxu0 %v1678
      %v1680 = vand.u32 %v256, 4294901760
      %v1681 = vsub.f32 %v256, %v1680
      %v1682 = vand.u32 %v1681, 4294901760
      %1683 = vmatpush1.msra.mxu0 %v1682
      %v1684 = vand.u32 %v259, 4294901760
      %v1685 = vsub.f32 %v259, %v1684
      %v1686 = vand.u32 %v1685, 4294901760
      %1687 = vmatprep.subr.mxu0 %v1686
      %v1688 = vand.u32 %v258, 4294901760
      %v1689 = vsub.f32 %v258, %v1688
      %v1690 = vand.u32 %v1689, 4294901760
      %1691 = vmatpush1.msra.mxu0 %v1690
      %v1692 = vand.u32 %v261, 4294901760
      %v1693 = vsub.f32 %v261, %v1692
      %v1694 = vand.u32 %v1693, 4294901760
      %1695 = vmatprep.subr.mxu0 %v1694
      %v1696 = vand.u32 %v260, 4294901760
      %v1697 = vsub.f32 %v260, %v1696
      %v1698 = vand.u32 %v1697, 4294901760
      %1699 = vmatpush1.msra.mxu0 %v1698
      %v1700 = vand.u32 %v263, 4294901760
      %v1701 = vsub.f32 %v263, %v1700
      %v1702 = vand.u32 %v1701, 4294901760
      %1703 = vmatprep.subr.mxu0 %v1702
      %v1704 = vand.u32 %v262, 4294901760
      %v1705 = vsub.f32 %v262, %v1704
      %v1706 = vand.u32 %v1705, 4294901760
      %1707 = vmatpush1.msra.mxu0 %v1706
      %v1708 = vand.u32 %v265, 4294901760
      %v1709 = vsub.f32 %v265, %v1708
      %v1710 = vand.u32 %v1709, 4294901760
      %1711 = vmatprep.subr.mxu0 %v1710
      %v1712 = vand.u32 %v264, 4294901760
      %v1713 = vsub.f32 %v264, %v1712
      %v1714 = vand.u32 %v1713, 4294901760
      %1715 = vmatpush1.msra.mxu0 %v1714
      %v1716 = vand.u32 %v267, 4294901760
      %v1717 = vsub.f32 %v267, %v1716
      %v1718 = vand.u32 %v1717, 4294901760
      %1719 = vmatprep.subr.mxu0 %v1718
      %v1720 = vand.u32 %v266, 4294901760
      %v1721 = vsub.f32 %v266, %v1720
      %v1722 = vand.u32 %v1721, 4294901760
      %1723 = vmatpush1.msra.mxu0 %v1722
      %v1724 = vand.u32 %v269, 4294901760
      %v1725 = vsub.f32 %v269, %v1724
      %v1726 = vand.u32 %v1725, 4294901760
      %1727 = vmatprep.subr.mxu0 %v1726
      %v1728 = vand.u32 %v268, 4294901760
      %v1729 = vsub.f32 %v268, %v1728
      %v1730 = vand.u32 %v1729, 4294901760
      %1731 = vmatpush1.msra.mxu0 %v1730
      %v1732 = vand.u32 %v271, 4294901760
      %v1733 = vsub.f32 %v271, %v1732
      %v1734 = vand.u32 %v1733, 4294901760
      %1735 = vmatprep.subr.mxu0 %v1734
      %v1736 = vand.u32 %v270, 4294901760
      %v1737 = vsub.f32 %v270, %v1736
      %v1738 = vand.u32 %v1737, 4294901760
      %1739 = vmatpush1.msra.mxu0 %v1738
      %v1740 = vand.u32 %v273, 4294901760
      %v1741 = vsub.f32 %v273, %v1740
      %v1742 = vand.u32 %v1741, 4294901760
      %1743 = vmatprep.subr.mxu0 %v1742
      %v1744 = vand.u32 %v272, 4294901760
      %v1745 = vsub.f32 %v272, %v1744
      %v1746 = vand.u32 %v1745, 4294901760
      %1747 = vmatpush1.msra.mxu0 %v1746
      %v1748 = vand.u32 %v275, 4294901760
      %v1749 = vsub.f32 %v275, %v1748
      %v1750 = vand.u32 %v1749, 4294901760
      %1751 = vmatprep.subr.mxu0 %v1750
      %v1752 = vand.u32 %v274, 4294901760
      %v1753 = vsub.f32 %v274, %v1752
      %v1754 = vand.u32 %v1753, 4294901760
      %1755 = vmatpush1.msra.mxu0 %v1754
      %v1756 = vand.u32 %v277, 4294901760
      %v1757 = vsub.f32 %v277, %v1756
      %v1758 = vand.u32 %v1757, 4294901760
      %1759 = vmatprep.subr.mxu0 %v1758
      %v1760 = vand.u32 %v276, 4294901760
      %v1761 = vsub.f32 %v276, %v1760
      %v1762 = vand.u32 %v1761, 4294901760
      %1763 = vmatpush1.msra.mxu0 %v1762
      %v1764 = vand.u32 %v279, 4294901760
      %v1765 = vsub.f32 %v279, %v1764
      %v1766 = vand.u32 %v1765, 4294901760
      %1767 = vmatprep.subr.mxu0 %v1766
      %v1768 = vand.u32 %v278, 4294901760
      %v1769 = vsub.f32 %v278, %v1768
      %v1770 = vand.u32 %v1769, 4294901760
      %1771 = vmatpush1.msra.mxu0 %v1770
      %v1772 = vand.u32 %v281, 4294901760
      %v1773 = vsub.f32 %v281, %v1772
      %v1774 = vand.u32 %v1773, 4294901760
      %1775 = vmatprep.subr.mxu0 %v1774
      %v1776 = vand.u32 %v280, 4294901760
      %v1777 = vsub.f32 %v280, %v1776
      %v1778 = vand.u32 %v1777, 4294901760
      %1779 = vmatpush1.msra.mxu0 %v1778
      %v1780 = vand.u32 %v283, 4294901760
      %v1781 = vsub.f32 %v283, %v1780
      %v1782 = vand.u32 %v1781, 4294901760
      %1783 = vmatprep.subr.mxu0 %v1782
      %v1784 = vand.u32 %v282, 4294901760
      %v1785 = vsub.f32 %v282, %v1784
      %v1786 = vand.u32 %v1785, 4294901760
      %1787 = vmatpush1.msra.mxu0 %v1786
      %v1788 = vand.u32 %v285, 4294901760
      %v1789 = vsub.f32 %v285, %v1788
      %v1790 = vand.u32 %v1789, 4294901760
      %1791 = vmatprep.subr.mxu0 %v1790
      %v1792 = vand.u32 %v284, 4294901760
      %v1793 = vsub.f32 %v284, %v1792
      %v1794 = vand.u32 %v1793, 4294901760
      %1795 = vmatpush1.msra.mxu0 %v1794
      %v1796 = vand.u32 %v287, 4294901760
      %v1797 = vsub.f32 %v287, %v1796
      %v1798 = vand.u32 %v1797, 4294901760
      %1799 = vmatprep.subr.mxu0 %v1798
      %v1800 = vand.u32 %v286, 4294901760
      %v1801 = vsub.f32 %v286, %v1800
      %v1802 = vand.u32 %v1801, 4294901760
      %1803 = vmatpush1.msra.mxu0 %v1802
      %v1804 = vand.u32 %v289, 4294901760
      %v1805 = vsub.f32 %v289, %v1804
      %v1806 = vand.u32 %v1805, 4294901760
      %1807 = vmatprep.subr.mxu0 %v1806
      %v1808 = vand.u32 %v288, 4294901760
      %v1809 = vsub.f32 %v288, %v1808
      %v1810 = vand.u32 %v1809, 4294901760
      %1811 = vmatpush1.msra.mxu0 %v1810
      %v1812 = vand.u32 %v291, 4294901760
      %v1813 = vsub.f32 %v291, %v1812
      %v1814 = vand.u32 %v1813, 4294901760
      %1815 = vmatprep.subr.mxu0 %v1814
      %v1816 = vand.u32 %v290, 4294901760
      %v1817 = vsub.f32 %v290, %v1816
      %v1818 = vand.u32 %v1817, 4294901760
      %1819 = vmatpush1.msra.mxu0 %v1818
      %v1820 = vand.u32 %v293, 4294901760
      %v1821 = vsub.f32 %v293, %v1820
      %v1822 = vand.u32 %v1821, 4294901760
      %1823 = vmatprep.subr.mxu0 %v1822
      %v1824 = vand.u32 %v292, 4294901760
      %v1825 = vsub.f32 %v292, %v1824
      %v1826 = vand.u32 %v1825, 4294901760
      %1827 = vmatpush1.msra.mxu0 %v1826
      %v1828 = vand.u32 %v295, 4294901760
      %v1829 = vsub.f32 %v295, %v1828
      %v1830 = vand.u32 %v1829, 4294901760
      %1831 = vmatprep.subr.mxu0 %v1830
      %v1832 = vand.u32 %v294, 4294901760
      %v1833 = vsub.f32 %v294, %v1832
      %v1834 = vand.u32 %v1833, 4294901760
      %1835 = vmatpush1.msra.mxu0 %v1834
      %v1836 = vand.u32 %v297, 4294901760
      %v1837 = vsub.f32 %v297, %v1836
      %v1838 = vand.u32 %v1837, 4294901760
      %1839 = vmatprep.subr.mxu0 %v1838
      %v1840 = vand.u32 %v296, 4294901760
      %v1841 = vsub.f32 %v296, %v1840
      %v1842 = vand.u32 %v1841, 4294901760
      %1843 = vmatpush1.msra.mxu0 %v1842
      %v1844 = vand.u32 %v299, 4294901760
      %v1845 = vsub.f32 %v299, %v1844
      %v1846 = vand.u32 %v1845, 4294901760
      %1847 = vmatprep.subr.mxu0 %v1846
      %v1848 = vand.u32 %v298, 4294901760
      %v1849 = vsub.f32 %v298, %v1848
      %v1850 = vand.u32 %v1849, 4294901760
      %1851 = vmatpush1.msra.mxu0 %v1850
      %v1852 = vand.u32 %v217, 4294901760
      %1853 = vmatprep.mubr.f32.mxu0 %v1852
      %v1854 = vand.u32 %v216, 4294901760
      %1855 = vmatmul.mubr.f32.gmra.mrb[0].mxu0 %v1854
      %v1856 = vpop.f32.mrb[0].mxu0
      %v1857 = vadd.f32 %v1484, %v1856
      %v1858 = vpop.f32.mrb[0].mxu0
      %v1859 = vadd.f32 %v1486, %v1858
      %v1860 = vand.u32 %v219, 4294901760
      %1861 = vmatprep.mubr.f32.mxu0 %v1860
      %v1862 = vand.u32 %v218, 4294901760
      %1863 = vmatmul.mubr.f32.gmra.mrb[0].mxu0 %v1862
      %v1864 = vpop.f32.mrb[0].mxu0
      %v1865 = vadd.f32 %v1496, %v1864
      %v1866 = vpop.f32.mrb[0].mxu0
      %v1867 = vadd.f32 %v1498, %v1866
      %v1868 = vand.u32 %v221, 4294901760
      %1869 = vmatprep.mubr.f32.mxu0 %v1868
      %v1870 = vand.u32 %v220, 4294901760
      %1871 = vmatmul.mubr.f32.gmra.mrb[0].mxu0 %v1870
      %v1872 = vpop.f32.mrb[0].mxu0
      %v1873 = vadd.f32 %v1508, %v1872
      %v1874 = vpop.f32.mrb[0].mxu0
      %v1875 = vadd.f32 %v1510, %v1874
      %v1876 = vand.u32 %v223, 4294901760
      %1877 = vmatprep.mubr.f32.mxu0 %v1876
      %v1878 = vand.u32 %v222, 4294901760
      %1879 = vmatmul.mubr.f32.gmra.mrb[0].mxu0 %v1878
      %v1880 = vpop.f32.mrb[0].mxu0
      %v1881 = vadd.f32 %v1520, %v1880
      %v1882 = vpop.f32.mrb[0].mxu0
      %v1883 = vadd.f32 %v1522, %v1882
      %v1884 = vand.u32 %v225, 4294901760
      %1885 = vmatprep.mubr.f32.mxu0 %v1884
      %v1886 = vand.u32 %v224, 4294901760
      %1887 = vmatmul.mubr.f32.gmra.mrb[0].mxu0 %v1886
      %v1888 = vpop.f32.mrb[0].mxu0
      %v1889 = vadd.f32 %v1532, %v1888
      %v1890 = vpop.f32.mrb[0].mxu0
      %v1891 = vadd.f32 %v1534, %v1890
      %v1892 = vand.u32 %v227, 4294901760
      %1893 = vmatprep.mubr.f32.mxu0 %v1892
      %v1894 = vand.u32 %v226, 4294901760
      %1895 = vmatmul.mubr.f32.gmra.mrb[0].mxu0 %v1894
      %v1896 = vpop.f32.mrb[0].mxu0
      %v1897 = vadd.f32 %v1544, %v1896
      %v1898 = vpop.f32.mrb[0].mxu0
      %v1899 = vadd.f32 %v1546, %v1898
      %v1900 = vand.u32 %v229, 4294901760
      %1901 = vmatprep.mubr.f32.mxu0 %v1900
      %v1902 = vand.u32 %v228, 4294901760
      %1903 = vmatmul.mubr.f32.gmra.mrb[0].mxu0 %v1902
      %v1904 = vpop.f32.mrb[0].mxu0
      %v1905 = vadd.f32 %v1556, %v1904
      %v1906 = vpop.f32.mrb[0].mxu0
      %v1907 = vadd.f32 %v1558, %v1906
      %v1908 = vand.u32 %v231, 4294901760
      %1909 = vmatprep.mubr.f32.mxu0 %v1908
      %v1910 = vand.u32 %v230, 4294901760
      %1911 = vmatmul.mubr.f32.gmra.mrb[0].mxu0 %v1910
      %v1912 = vpop.f32.mrb[0].mxu0
      %v1913 = vadd.f32 %v1568, %v1912
      %v1914 = vpop.f32.mrb[0].mxu0
      %v1915 = vadd.f32 %v1570, %v1914
      %v1916 = vand.u32 %v233, 4294901760
      %1917 = vmatprep.mubr.f32.mxu0 %v1916
      %v1918 = vand.u32 %v232, 4294901760
      %1919 = vmatmul.mubr.f32.gmra.mrb[0].mxu0 %v1918
      %v1920 = vpop.f32.mrb[0].mxu0
      %v1921 = vadd.f32 %v1580, %v1920
      %v1922 = vpop.f32.mrb[0].mxu0
      %v1923 = vadd.f32 %v1582, %v1922
      %v1924 = vand.u32 %v235, 4294901760
      %1925 = vmatprep.mubr.f32.mxu0 %v1924
      %v1926 = vand.u32 %v234, 4294901760
      %1927 = vmatmul.mubr.f32.gmra.mrb[0].mxu0 %v1926
      %v1928 = vpop.f32.mrb[0].mxu0
      %v1929 = vadd.f32 %v1592, %v1928
      %v1930 = vpop.f32.mrb[0].mxu0
      %v1931 = vadd.f32 %v1594, %v1930
      %1932 = vdwg.mxu0
      %v1933 = vand.u32 %v237, 4294901760
      %1934 = vmatprep.subr.mxu0 %v1933
      %v1935 = vand.u32 %v236, 4294901760
      %1936 = vmatpush1.msra.mxu0 %v1935
      %v1937 = vand.u32 %v239, 4294901760
      %1938 = vmatprep.subr.mxu0 %v1937
      %v1939 = vand.u32 %v238, 4294901760
      %1940 = vmatpush1.msra.mxu0 %v1939
      %v1941 = vand.u32 %v241, 4294901760
      %1942 = vmatprep.subr.mxu0 %v1941
      %v1943 = vand.u32 %v240, 4294901760
      %1944 = vmatpush1.msra.mxu0 %v1943
      %v1945 = vand.u32 %v243, 4294901760
      %1946 = vmatprep.subr.mxu0 %v1945
      %v1947 = vand.u32 %v242, 4294901760
      %1948 = vmatpush1.msra.mxu0 %v1947
      %v1949 = vand.u32 %v245, 4294901760
      %1950 = vmatprep.subr.mxu0 %v1949
      %v1951 = vand.u32 %v244, 4294901760
      %1952 = vmatpush1.msra.mxu0 %v1951
      %v1953 = vand.u32 %v247, 4294901760
      %1954 = vmatprep.subr.mxu0 %v1953
      %v1955 = vand.u32 %v246, 4294901760
      %1956 = vmatpush1.msra.mxu0 %v1955
      %v1957 = vand.u32 %v249, 4294901760
      %1958 = vmatprep.subr.mxu0 %v1957
      %v1959 = vand.u32 %v248, 4294901760
      %1960 = vmatpush1.msra.mxu0 %v1959
      %v1961 = vand.u32 %v251, 4294901760
      %1962 = vmatprep.subr.mxu0 %v1961
      %v1963 = vand.u32 %v250, 4294901760
      %1964 = vmatpush1.msra.mxu0 %v1963
      %v1965 = vand.u32 %v253, 4294901760
      %1966 = vmatprep.subr.mxu0 %v1965
      %v1967 = vand.u32 %v252, 4294901760
      %1968 = vmatpush1.msra.mxu0 %v1967
      %v1969 = vand.u32 %v255, 4294901760
      %1970 = vmatprep.subr.mxu0 %v1969
      %v1971 = vand.u32 %v254, 4294901760
      %1972 = vmatpush1.msra.mxu0 %v1971
      %v1973 = vand.u32 %v257, 4294901760
      %1974 = vmatprep.subr.mxu0 %v1973
      %v1975 = vand.u32 %v256, 4294901760
      %1976 = vmatpush1.msra.mxu0 %v1975
      %v1977 = vand.u32 %v259, 4294901760
      %1978 = vmatprep.subr.mxu0 %v1977
      %v1979 = vand.u32 %v258, 4294901760
      %1980 = vmatpush1.msra.mxu0 %v1979
      %v1981 = vand.u32 %v261, 4294901760
      %1982 = vmatprep.subr.mxu0 %v1981
      %v1983 = vand.u32 %v260, 4294901760
      %1984 = vmatpush1.msra.mxu0 %v1983
      %v1985 = vand.u32 %v263, 4294901760
      %1986 = vmatprep.subr.mxu0 %v1985
      %v1987 = vand.u32 %v262, 4294901760
      %1988 = vmatpush1.msra.mxu0 %v1987
      %v1989 = vand.u32 %v265, 4294901760
      %1990 = vmatprep.subr.mxu0 %v1989
      %v1991 = vand.u32 %v264, 4294901760
      %1992 = vmatpush1.msra.mxu0 %v1991
      %v1993 = vand.u32 %v267, 4294901760
      %1994 = vmatprep.subr.mxu0 %v1993
      %v1995 = vand.u32 %v266, 4294901760
      %1996 = vmatpush1.msra.mxu0 %v1995
      %v1997 = vand.u32 %v269, 4294901760
      %1998 = vmatprep.subr.mxu0 %v1997
      %v1999 = vand.u32 %v268, 4294901760
      %2000 = vmatpush1.msra.mxu0 %v1999
      %v2001 = vand.u32 %v271, 4294901760
      %2002 = vmatprep.subr.mxu0 %v2001
      %v2003 = vand.u32 %v270, 4294901760
      %2004 = vmatpush1.msra.mxu0 %v2003
      %v2005 = vand.u32 %v273, 4294901760
      %2006 = vmatprep.subr.mxu0 %v2005
      %v2007 = vand.u32 %v272, 4294901760
      %2008 = vmatpush1.msra.mxu0 %v2007
      %v2009 = vand.u32 %v275, 4294901760
      %2010 = vmatprep.subr.mxu0 %v2009
      %v2011 = vand.u32 %v274, 4294901760
      %2012 = vmatpush1.msra.mxu0 %v2011
      %v2013 = vand.u32 %v277, 4294901760
      %2014 = vmatprep.subr.mxu0 %v2013
      %v2015 = vand.u32 %v276, 4294901760
      %2016 = vmatpush1.msra.mxu0 %v2015
      %v2017 = vand.u32 %v279, 4294901760
      %2018 = vmatprep.subr.mxu0 %v2017
      %v2019 = vand.u32 %v278, 4294901760
      %2020 = vmatpush1.msra.mxu0 %v2019
      %v2021 = vand.u32 %v281, 4294901760
      %2022 = vmatprep.subr.mxu0 %v2021
      %v2023 = vand.u32 %v280, 4294901760
      %2024 = vmatpush1.msra.mxu0 %v2023
      %v2025 = vand.u32 %v283, 4294901760
      %2026 = vmatprep.subr.mxu0 %v2025
      %v2027 = vand.u32 %v282, 4294901760
      %2028 = vmatpush1.msra.mxu0 %v2027
      %v2029 = vand.u32 %v285, 4294901760
      %2030 = vmatprep.subr.mxu0 %v2029
      %v2031 = vand.u32 %v284, 4294901760
      %2032 = vmatpush1.msra.mxu0 %v2031
      %v2033 = vand.u32 %v287, 4294901760
      %2034 = vmatprep.subr.mxu0 %v2033
      %v2035 = vand.u32 %v286, 4294901760
      %2036 = vmatpush1.msra.mxu0 %v2035
      %v2037 = vand.u32 %v289, 4294901760
      %2038 = vmatprep.subr.mxu0 %v2037
      %v2039 = vand.u32 %v288, 4294901760
      %2040 = vmatpush1.msra.mxu0 %v2039
      %v2041 = vand.u32 %v291, 4294901760
      %2042 = vmatprep.subr.mxu0 %v2041
      %v2043 = vand.u32 %v290, 4294901760
      %2044 = vmatpush1.msra.mxu0 %v2043
      %v2045 = vand.u32 %v293, 4294901760
      %2046 = vmatprep.subr.mxu0 %v2045
      %v2047 = vand.u32 %v292, 4294901760
      %2048 = vmatpush1.msra.mxu0 %v2047
      %v2049 = vand.u32 %v295, 4294901760
      %2050 = vmatprep.subr.mxu0 %v2049
      %v2051 = vand.u32 %v294, 4294901760
      %2052 = vmatpush1.msra.mxu0 %v2051
      %v2053 = vand.u32 %v297, 4294901760
      %2054 = vmatprep.subr.mxu0 %v2053
      %v2055 = vand.u32 %v296, 4294901760
      %2056 = vmatpush1.msra.mxu0 %v2055
      %v2057 = vand.u32 %v299, 4294901760
      %2058 = vmatprep.subr.mxu0 %v2057
      %v2059 = vand.u32 %v298, 4294901760
      %2060 = vmatpush1.msra.mxu0 %v2059
      %v2061 = vand.u32 %v217, 4294901760
      %2062 = vmatprep.mubr.f32.mxu0 %v2061
      %v2063 = vand.u32 %v216, 4294901760
      %2064 = vmatmul.mubr.f32.gmra.mrb[0].mxu0 %v2063
      %v2065 = vpop.f32.mrb[0].mxu0
      %v2066 = vadd.f32 %v1857, %v2065
      %v2067 = vpop.f32.mrb[0].mxu0
      %v2068 = vadd.f32 %v1859, %v2067
      %v2069 = vand.u32 %v219, 4294901760
      %2070 = vmatprep.mubr.f32.mxu0 %v2069
      %v2071 = vand.u32 %v218, 4294901760
      %2072 = vmatmul.mubr.f32.gmra.mrb[0].mxu0 %v2071
      %v2073 = vpop.f32.mrb[0].mxu0
      %v2074 = vadd.f32 %v1865, %v2073
      %v2075 = vpop.f32.mrb[0].mxu0
      %v2076 = vadd.f32 %v1867, %v2075
      %v2077 = vand.u32 %v221, 4294901760
      %2078 = vmatprep.mubr.f32.mxu0 %v2077
      %v2079 = vand.u32 %v220, 4294901760
      %2080 = vmatmul.mubr.f32.gmra.mrb[0].mxu0 %v2079
      %v2081 = vpop.f32.mrb[0].mxu0
      %v2082 = vadd.f32 %v1873, %v2081
      %v2083 = vpop.f32.mrb[0].mxu0
      %v2084 = vadd.f32 %v1875, %v2083
      %v2085 = vand.u32 %v223, 4294901760
      %2086 = vmatprep.mubr.f32.mxu0 %v2085
      %v2087 = vand.u32 %v222, 4294901760
      %2088 = vmatmul.mubr.f32.gmra.mrb[0].mxu0 %v2087
      %v2089 = vpop.f32.mrb[0].mxu0
      %v2090 = vadd.f32 %v1881, %v2089
      %v2091 = vpop.f32.mrb[0].mxu0
      %v2092 = vadd.f32 %v1883, %v2091
      %v2093 = vand.u32 %v225, 4294901760
      %2094 = vmatprep.mubr.f32.mxu0 %v2093
      %v2095 = vand.u32 %v224, 4294901760
      %2096 = vmatmul.mubr.f32.gmra.mrb[0].mxu0 %v2095
      %v2097 = vpop.f32.mrb[0].mxu0
      %v2098 = vadd.f32 %v1889, %v2097
      %v2099 = vpop.f32.mrb[0].mxu0
      %v2100 = vadd.f32 %v1891, %v2099
      %v2101 = vand.u32 %v227, 4294901760
      %2102 = vmatprep.mubr.f32.mxu0 %v2101
      %v2103 = vand.u32 %v226, 4294901760
      %2104 = vmatmul.mubr.f32.gmra.mrb[0].mxu0 %v2103
      %v2105 = vpop.f32.mrb[0].mxu0
      %v2106 = vadd.f32 %v1897, %v2105
      %v2107 = vpop.f32.mrb[0].mxu0
      %v2108 = vadd.f32 %v1899, %v2107
      %v2109 = vand.u32 %v229, 4294901760
      %2110 = vmatprep.mubr.f32.mxu0 %v2109
      %v2111 = vand.u32 %v228, 4294901760
      %2112 = vmatmul.mubr.f32.gmra.mrb[0].mxu0 %v2111
      %v2113 = vpop.f32.mrb[0].mxu0
      %v2114 = vadd.f32 %v1905, %v2113
      %v2115 = vpop.f32.mrb[0].mxu0
      %v2116 = vadd.f32 %v1907, %v2115
      %v2117 = vand.u32 %v231, 4294901760
      %2118 = vmatprep.mubr.f32.mxu0 %v2117
      %v2119 = vand.u32 %v230, 4294901760
      %2120 = vmatmul.mubr.f32.gmra.mrb[0].mxu0 %v2119
      %v2121 = vpop.f32.mrb[0].mxu0
      %v2122 = vadd.f32 %v1913, %v2121
      %v2123 = vpop.f32.mrb[0].mxu0
      %v2124 = vadd.f32 %v1915, %v2123
      %v2125 = vand.u32 %v233, 4294901760
      %2126 = vmatprep.mubr.f32.mxu0 %v2125
      %v2127 = vand.u32 %v232, 4294901760
      %2128 = vmatmul.mubr.f32.gmra.mrb[0].mxu0 %v2127
      %v2129 = vpop.f32.mrb[0].mxu0
      %v2130 = vadd.f32 %v1921, %v2129
      %v2131 = vpop.f32.mrb[0].mxu0
      %v2132 = vadd.f32 %v1923, %v2131
      %v2133 = vand.u32 %v235, 4294901760
      %2134 = vmatprep.mubr.f32.mxu0 %v2133
      %v2135 = vand.u32 %v234, 4294901760
      %2136 = vmatmul.mubr.f32.gmra.mrb[0].mxu0 %v2135
      %v2137 = vpop.f32.mrb[0].mxu0
      %v2138 = vadd.f32 %v1929, %v2137
      %v2139 = vpop.f32.mrb[0].mxu0
      %v2140 = vadd.f32 %v1931, %v2139
      %2141 = vdwg.mxu0
      %v2142 = vld [vmem:[%s3] sm:$0xff]
      %v2143 = vld [vmem:[%s3 + $0x8] sm:$0xff]
      %v2144 = vld [vmem:[%s3 + $0x10] sm:$0xff]
      %v2145 = vld [vmem:[%s3 + $0x18] sm:$0xff]
      %v2146 = vld [vmem:[%s3 + $0x20] sm:$0xff]
      %v2147 = vld [vmem:[%s3 + $0x28] sm:$0xff]
      %v2148 = vld [vmem:[%s3 + $0x30] sm:$0xff]
      %v2149 = vld [vmem:[%s3 + $0x38] sm:$0xff]
      %v2150 = vld [vmem:[%s3 + $0x40] sm:$0xff]
      %v2151 = vld [vmem:[%s3 + $0x48] sm:$0xff]
      %vm2152 = vcmask 654336
      %v2154 = vsel %vm2152, %v2142, 0
      %v2157 = vsel %vm2152, %v2143, 0
      %v2160 = vsel %vm2152, %v2144, 0
      %v2163 = vsel %vm2152, %v2145, 0
      %v2166 = vsel %vm2152, %v2146, 0
      %v2169 = vsel %vm2152, %v2147, 0
      %v2172 = vsel %vm2152, %v2148, 0
      %v2175 = vsel %vm2152, %v2149, 0
      %v2178 = vsel %vm2152, %v2150, 0
      %v2181 = vsel %vm2152, %v2151, 0
      %v2183 = vand.u32 %v2068, 4294901760
      %2184 = vmatprep.subr.mxu0 %v2183
      %v2185 = vand.u32 %v2066, 4294901760
      %2186 = vmatpush1.msra.mxu0 %v2185
      %v2187 = vand.u32 %v2076, 4294901760
      %2188 = vmatprep.subr.mxu0 %v2187
      %v2189 = vand.u32 %v2074, 4294901760
      %2190 = vmatpush1.msra.mxu0 %v2189
      %v2191 = vand.u32 %v2084, 4294901760
      %2192 = vmatprep.subr.mxu0 %v2191
      %v2193 = vand.u32 %v2082, 4294901760
      %2194 = vmatpush1.msra.mxu0 %v2193
      %v2195 = vand.u32 %v2092, 4294901760
      %2196 = vmatprep.subr.mxu0 %v2195
      %v2197 = vand.u32 %v2090, 4294901760
      %2198 = vmatpush1.msra.mxu0 %v2197
      %v2199 = vand.u32 %v2100, 4294901760
      %2200 = vmatprep.subr.mxu0 %v2199
      %v2201 = vand.u32 %v2098, 4294901760
      %2202 = vmatpush1.msra.mxu0 %v2201
      %v2203 = vand.u32 %v2108, 4294901760
      %2204 = vmatprep.subr.mxu0 %v2203
      %v2205 = vand.u32 %v2106, 4294901760
      %2206 = vmatpush1.msra.mxu0 %v2205
      %v2207 = vand.u32 %v2116, 4294901760
      %2208 = vmatprep.subr.mxu0 %v2207
      %v2209 = vand.u32 %v2114, 4294901760
      %2210 = vmatpush1.msra.mxu0 %v2209
      %v2211 = vand.u32 %v2124, 4294901760
      %2212 = vmatprep.subr.mxu0 %v2211
      %v2213 = vand.u32 %v2122, 4294901760
      %2214 = vmatpush1.msra.mxu0 %v2213
      %v2215 = vand.u32 %v2132, 4294901760
      %2216 = vmatprep.subr.mxu0 %v2215
      %v2217 = vand.u32 %v2130, 4294901760
      %2218 = vmatpush1.msra.mxu0 %v2217
      %v2219 = vand.u32 %v2140, 4294901760
      %2220 = vmatprep.subr.mxu0 %v2219
      %v2221 = vand.u32 %v2138, 4294901760
      %2222 = vmatpush1.msra.mxu0 %v2221
      %2223 = vmatprep.subr.mxu0 0.0
      %2224 = vmatpush1.msra.mxu0 0.0
      %2225 = vmatprep.subr.mxu0 0.0
      %2226 = vmatpush1.msra.mxu0 0.0
      %2227 = vmatprep.subr.mxu0 0.0
      %2228 = vmatpush1.msra.mxu0 0.0
      %2229 = vmatprep.subr.mxu0 0.0
      %2230 = vmatpush1.msra.mxu0 0.0
      %2231 = vmatprep.subr.mxu0 0.0
      %2232 = vmatpush1.msra.mxu0 0.0
      %2233 = vmatprep.subr.mxu0 0.0
      %2234 = vmatpush1.msra.mxu0 0.0
      %2235 = vmatprep.subr.mxu0 0.0
      %2236 = vmatpush1.msra.mxu0 0.0
      %2237 = vmatprep.subr.mxu0 0.0
      %2238 = vmatpush1.msra.mxu0 0.0
      %2239 = vmatprep.subr.mxu0 0.0
      %2240 = vmatpush1.msra.mxu0 0.0
      %2241 = vmatprep.subr.mxu0 0.0
      %2242 = vmatpush1.msra.mxu0 0.0
      %2243 = vmatprep.subr.mxu0 0.0
      %2244 = vmatpush1.msra.mxu0 0.0
      %2245 = vmatprep.subr.mxu0 0.0
      %2246 = vmatpush1.msra.mxu0 0.0
      %2247 = vmatprep.subr.mxu0 0.0
      %2248 = vmatpush1.msra.mxu0 0.0
      %2249 = vmatprep.subr.mxu0 0.0
      %2250 = vmatpush1.msra.mxu0 0.0
      %2251 = vmatprep.subr.mxu0 0.0
      %2252 = vmatpush1.msra.mxu0 0.0
      %2253 = vmatprep.subr.mxu0 0.0
      %2254 = vmatpush1.msra.mxu0 0.0
      %2255 = vmatprep.subr.mxu0 0.0
      %2256 = vmatpush1.msra.mxu0 0.0
      %2257 = vmatprep.subr.mxu0 0.0
      %2258 = vmatpush1.msra.mxu0 0.0
      %2259 = vmatprep.subr.mxu0 0.0
      %2260 = vmatpush1.msra.mxu0 0.0
      %2261 = vmatprep.subr.mxu0 0.0
      %2262 = vmatpush1.msra.mxu0 0.0
      %2263 = vmatprep.subr.mxu0 0.0
      %2264 = vmatpush1.msra.mxu0 0.0
      %2265 = vmatprep.subr.mxu0 0.0
      %2266 = vmatpush1.msra.mxu0 0.0
      %2267 = vmatprep.mubr.f32.mxu0 0.0
      %v2268 = vand.u32 %v2154, 4294901760
      %v2269 = vsub.f32 %v2154, %v2268
      %v2270 = vand.u32 %v2269, 4294901760
      %v2271 = vsub.f32 %v2269, %v2270
      %v2272 = vand.u32 %v2271, 4294901760
      %2273 = vmatmul.mubr.f32.gmra.mrb[0].mxu0 %v2272
      %v2274 = vpop.f32.mrb[0].mxu0
      %v2275 = vadd.f32 0.0, %v2274
      %v2276 = vpop.f32.mrb[0].mxu0
      %v2277 = vadd.f32 0.0, %v2276
      %2278 = vmatprep.mubr.f32.mxu0 0.0
      %v2279 = vand.u32 %v2157, 4294901760
      %v2280 = vsub.f32 %v2157, %v2279
      %v2281 = vand.u32 %v2280, 4294901760
      %v2282 = vsub.f32 %v2280, %v2281
      %v2283 = vand.u32 %v2282, 4294901760
      %2284 = vmatmul.mubr.f32.gmra.mrb[0].mxu0 %v2283
      %v2285 = vpop.f32.mrb[0].mxu0
      %v2286 = vadd.f32 0.0, %v2285
      %v2287 = vpop.f32.mrb[0].mxu0
      %v2288 = vadd.f32 0.0, %v2287
      %2289 = vmatprep.mubr.f32.mxu0 0.0
      %v2290 = vand.u32 %v2160, 4294901760
      %v2291 = vsub.f32 %v2160, %v2290
      %v2292 = vand.u32 %v2291, 4294901760
      %v2293 = vsub.f32 %v2291, %v2292
      %v2294 = vand.u32 %v2293, 4294901760
      %2295 = vmatmul.mubr.f32.gmra.mrb[0].mxu0 %v2294
      %v2296 = vpop.f32.mrb[0].mxu0
      %v2297 = vadd.f32 0.0, %v2296
      %v2298 = vpop.f32.mrb[0].mxu0
      %v2299 = vadd.f32 0.0, %v2298
      %2300 = vmatprep.mubr.f32.mxu0 0.0
      %v2301 = vand.u32 %v2163, 4294901760
      %v2302 = vsub.f32 %v2163, %v2301
      %v2303 = vand.u32 %v2302, 4294901760
      %v2304 = vsub.f32 %v2302, %v2303
      %v2305 = vand.u32 %v2304, 4294901760
      %2306 = vmatmul.mubr.f32.gmra.mrb[0].mxu0 %v2305
      %v2307 = vpop.f32.mrb[0].mxu0
      %v2308 = vadd.f32 0.0, %v2307
      %v2309 = vpop.f32.mrb[0].mxu0
      %v2310 = vadd.f32 0.0, %v2309
      %2311 = vmatprep.mubr.f32.mxu0 0.0
      %v2312 = vand.u32 %v2166, 4294901760
      %v2313 = vsub.f32 %v2166, %v2312
      %v2314 = vand.u32 %v2313, 4294901760
      %v2315 = vsub.f32 %v2313, %v2314
      %v2316 = vand.u32 %v2315, 4294901760
      %2317 = vmatmul.mubr.f32.gmra.mrb[0].mxu0 %v2316
      %v2318 = vpop.f32.mrb[0].mxu0
      %v2319 = vadd.f32 0.0, %v2318
      %v2320 = vpop.f32.mrb[0].mxu0
      %v2321 = vadd.f32 0.0, %v2320
      %2322 = vmatprep.mubr.f32.mxu0 0.0
      %v2323 = vand.u32 %v2169, 4294901760
      %v2324 = vsub.f32 %v2169, %v2323
      %v2325 = vand.u32 %v2324, 4294901760
      %v2326 = vsub.f32 %v2324, %v2325
      %v2327 = vand.u32 %v2326, 4294901760
      %2328 = vmatmul.mubr.f32.gmra.mrb[0].mxu0 %v2327
      %v2329 = vpop.f32.mrb[0].mxu0
      %v2330 = vadd.f32 0.0, %v2329
      %v2331 = vpop.f32.mrb[0].mxu0
      %v2332 = vadd.f32 0.0, %v2331
      %2333 = vmatprep.mubr.f32.mxu0 0.0
      %v2334 = vand.u32 %v2172, 4294901760
      %v2335 = vsub.f32 %v2172, %v2334
      %v2336 = vand.u32 %v2335, 4294901760
      %v2337 = vsub.f32 %v2335, %v2336
      %v2338 = vand.u32 %v2337, 4294901760
      %2339 = vmatmul.mubr.f32.gmra.mrb[0].mxu0 %v2338
      %v2340 = vpop.f32.mrb[0].mxu0
      %v2341 = vadd.f32 0.0, %v2340
      %v2342 = vpop.f32.mrb[0].mxu0
      %v2343 = vadd.f32 0.0, %v2342
      %2344 = vmatprep.mubr.f32.mxu0 0.0
      %v2345 = vand.u32 %v2175, 4294901760
      %v2346 = vsub.f32 %v2175, %v2345
      %v2347 = vand.u32 %v2346, 4294901760
      %v2348 = vsub.f32 %v2346, %v2347
      %v2349 = vand.u32 %v2348, 4294901760
      %2350 = vmatmul.mubr.f32.gmra.mrb[0].mxu0 %v2349
      %v2351 = vpop.f32.mrb[0].mxu0
      %v2352 = vadd.f32 0.0, %v2351
      %v2353 = vpop.f32.mrb[0].mxu0
      %v2354 = vadd.f32 0.0, %v2353
      %2355 = vmatprep.mubr.f32.mxu0 0.0
      %v2356 = vand.u32 %v2178, 4294901760
      %v2357 = vsub.f32 %v2178, %v2356
      %v2358 = vand.u32 %v2357, 4294901760
      %v2359 = vsub.f32 %v2357, %v2358
      %v2360 = vand.u32 %v2359, 4294901760
      %2361 = vmatmul.mubr.f32.gmra.mrb[0].mxu0 %v2360
      %v2362 = vpop.f32.mrb[0].mxu0
      %v2363 = vadd.f32 0.0, %v2362
      %v2364 = vpop.f32.mrb[0].mxu0
      %v2365 = vadd.f32 0.0, %v2364
      %2366 = vmatprep.mubr.f32.mxu0 0.0
      %v2367 = vand.u32 %v2181, 4294901760
      %v2368 = vsub.f32 %v2181, %v2367
      %v2369 = vand.u32 %v2368, 4294901760
      %v2370 = vsub.f32 %v2368, %v2369
      %v2371 = vand.u32 %v2370, 4294901760
      %2372 = vmatmul.mubr.f32.gmra.mrb[0].mxu0 %v2371
      %v2373 = vpop.f32.mrb[0].mxu0
      %v2374 = vadd.f32 0.0, %v2373
      %v2375 = vpop.f32.mrb[0].mxu0
      %v2376 = vadd.f32 0.0, %v2375
      %2377 = vdwg.mxu0
      %v2378 = vand.u32 %v2068, 4294901760
      %v2379 = vsub.f32 %v2068, %v2378
      %v2380 = vand.u32 %v2379, 4294901760
      %v2381 = vsub.f32 %v2379, %v2380
      %v2382 = vand.u32 %v2381, 4294901760
      %2383 = vmatprep.subr.mxu0 %v2382
      %v2384 = vand.u32 %v2066, 4294901760
      %v2385 = vsub.f32 %v2066, %v2384
      %v2386 = vand.u32 %v2385, 4294901760
      %v2387 = vsub.f32 %v2385, %v2386
      %v2388 = vand.u32 %v2387, 4294901760
      %2389 = vmatpush1.msra.mxu0 %v2388
      %v2390 = vand.u32 %v2076, 4294901760
      %v2391 = vsub.f32 %v2076, %v2390
      %v2392 = vand.u32 %v2391, 4294901760
      %v2393 = vsub.f32 %v2391, %v2392
      %v2394 = vand.u32 %v2393, 4294901760
      %2395 = vmatprep.subr.mxu0 %v2394
      %v2396 = vand.u32 %v2074, 4294901760
      %v2397 = vsub.f32 %v2074, %v2396
      %v2398 = vand.u32 %v2397, 4294901760
      %v2399 = vsub.f32 %v2397, %v2398
      %v2400 = vand.u32 %v2399, 4294901760
      %2401 = vmatpush1.msra.mxu0 %v2400
      %v2402 = vand.u32 %v2084, 4294901760
      %v2403 = vsub.f32 %v2084, %v2402
      %v2404 = vand.u32 %v2403, 4294901760
      %v2405 = vsub.f32 %v2403, %v2404
      %v2406 = vand.u32 %v2405, 4294901760
      %2407 = vmatprep.subr.mxu0 %v2406
      %v2408 = vand.u32 %v2082, 4294901760
      %v2409 = vsub.f32 %v2082, %v2408
      %v2410 = vand.u32 %v2409, 4294901760
      %v2411 = vsub.f32 %v2409, %v2410
      %v2412 = vand.u32 %v2411, 4294901760
      %2413 = vmatpush1.msra.mxu0 %v2412
      %v2414 = vand.u32 %v2092, 4294901760
      %v2415 = vsub.f32 %v2092, %v2414
      %v2416 = vand.u32 %v2415, 4294901760
      %v2417 = vsub.f32 %v2415, %v2416
      %v2418 = vand.u32 %v2417, 4294901760
      %2419 = vmatprep.subr.mxu0 %v2418
      %v2420 = vand.u32 %v2090, 4294901760
      %v2421 = vsub.f32 %v2090, %v2420
      %v2422 = vand.u32 %v2421, 4294901760
      %v2423 = vsub.f32 %v2421, %v2422
      %v2424 = vand.u32 %v2423, 4294901760
      %2425 = vmatpush1.msra.mxu0 %v2424
      %v2426 = vand.u32 %v2100, 4294901760
      %v2427 = vsub.f32 %v2100, %v2426
      %v2428 = vand.u32 %v2427, 4294901760
      %v2429 = vsub.f32 %v2427, %v2428
      %v2430 = vand.u32 %v2429, 4294901760
      %2431 = vmatprep.subr.mxu0 %v2430
      %v2432 = vand.u32 %v2098, 4294901760
      %v2433 = vsub.f32 %v2098, %v2432
      %v2434 = vand.u32 %v2433, 4294901760
      %v2435 = vsub.f32 %v2433, %v2434
      %v2436 = vand.u32 %v2435, 4294901760
      %2437 = vmatpush1.msra.mxu0 %v2436
      %v2438 = vand.u32 %v2108, 4294901760
      %v2439 = vsub.f32 %v2108, %v2438
      %v2440 = vand.u32 %v2439, 4294901760
      %v2441 = vsub.f32 %v2439, %v2440
      %v2442 = vand.u32 %v2441, 4294901760
      %2443 = vmatprep.subr.mxu0 %v2442
      %v2444 = vand.u32 %v2106, 4294901760
      %v2445 = vsub.f32 %v2106, %v2444
      %v2446 = vand.u32 %v2445, 4294901760
      %v2447 = vsub.f32 %v2445, %v2446
      %v2448 = vand.u32 %v2447, 4294901760
      %2449 = vmatpush1.msra.mxu0 %v2448
      %v2450 = vand.u32 %v2116, 4294901760
      %v2451 = vsub.f32 %v2116, %v2450
      %v2452 = vand.u32 %v2451, 4294901760
      %v2453 = vsub.f32 %v2451, %v2452
      %v2454 = vand.u32 %v2453, 4294901760
      %2455 = vmatprep.subr.mxu0 %v2454
      %v2456 = vand.u32 %v2114, 4294901760
      %v2457 = vsub.f32 %v2114, %v2456
      %v2458 = vand.u32 %v2457, 4294901760
      %v2459 = vsub.f32 %v2457, %v2458
      %v2460 = vand.u32 %v2459, 4294901760
      %2461 = vmatpush1.msra.mxu0 %v2460
      %v2462 = vand.u32 %v2124, 4294901760
      %v2463 = vsub.f32 %v2124, %v2462
      %v2464 = vand.u32 %v2463, 4294901760
      %v2465 = vsub.f32 %v2463, %v2464
      %v2466 = vand.u32 %v2465, 4294901760
      %2467 = vmatprep.subr.mxu0 %v2466
      %v2468 = vand.u32 %v2122, 4294901760
      %v2469 = vsub.f32 %v2122, %v2468
      %v2470 = vand.u32 %v2469, 4294901760
      %v2471 = vsub.f32 %v2469, %v2470
      %v2472 = vand.u32 %v2471, 4294901760
      %2473 = vmatpush1.msra.mxu0 %v2472
      %v2474 = vand.u32 %v2132, 4294901760
      %v2475 = vsub.f32 %v2132, %v2474
      %v2476 = vand.u32 %v2475, 4294901760
      %v2477 = vsub.f32 %v2475, %v2476
      %v2478 = vand.u32 %v2477, 4294901760
      %2479 = vmatprep.subr.mxu0 %v2478
      %v2480 = vand.u32 %v2130, 4294901760
      %v2481 = vsub.f32 %v2130, %v2480
      %v2482 = vand.u32 %v2481, 4294901760
      %v2483 = vsub.f32 %v2481, %v2482
      %v2484 = vand.u32 %v2483, 4294901760
      %2485 = vmatpush1.msra.mxu0 %v2484
      %v2486 = vand.u32 %v2140, 4294901760
      %v2487 = vsub.f32 %v2140, %v2486
      %v2488 = vand.u32 %v2487, 4294901760
      %v2489 = vsub.f32 %v2487, %v2488
      %v2490 = vand.u32 %v2489, 4294901760
      %2491 = vmatprep.subr.mxu0 %v2490
      %v2492 = vand.u32 %v2138, 4294901760
      %v2493 = vsub.f32 %v2138, %v2492
      %v2494 = vand.u32 %v2493, 4294901760
      %v2495 = vsub.f32 %v2493, %v2494
      %v2496 = vand.u32 %v2495, 4294901760
      %2497 = vmatpush1.msra.mxu0 %v2496
      %2498 = vmatprep.subr.mxu0 0.0
      %2499 = vmatpush1.msra.mxu0 0.0
      %2500 = vmatprep.subr.mxu0 0.0
      %2501 = vmatpush1.msra.mxu0 0.0
      %2502 = vmatprep.subr.mxu0 0.0
      %2503 = vmatpush1.msra.mxu0 0.0
      %2504 = vmatprep.subr.mxu0 0.0
      %2505 = vmatpush1.msra.mxu0 0.0
      %2506 = vmatprep.subr.mxu0 0.0
      %2507 = vmatpush1.msra.mxu0 0.0
      %2508 = vmatprep.subr.mxu0 0.0
      %2509 = vmatpush1.msra.mxu0 0.0
      %2510 = vmatprep.subr.mxu0 0.0
      %2511 = vmatpush1.msra.mxu0 0.0
      %2512 = vmatprep.subr.mxu0 0.0
      %2513 = vmatpush1.msra.mxu0 0.0
      %2514 = vmatprep.subr.mxu0 0.0
      %2515 = vmatpush1.msra.mxu0 0.0
      %2516 = vmatprep.subr.mxu0 0.0
      %2517 = vmatpush1.msra.mxu0 0.0
      %2518 = vmatprep.subr.mxu0 0.0
      %2519 = vmatpush1.msra.mxu0 0.0
      %2520 = vmatprep.subr.mxu0 0.0
      %2521 = vmatpush1.msra.mxu0 0.0
      %2522 = vmatprep.subr.mxu0 0.0
      %2523 = vmatpush1.msra.mxu0 0.0
      %2524 = vmatprep.subr.mxu0 0.0
      %2525 = vmatpush1.msra.mxu0 0.0
      %2526 = vmatprep.subr.mxu0 0.0
      %2527 = vmatpush1.msra.mxu0 0.0
      %2528 = vmatprep.subr.mxu0 0.0
      %2529 = vmatpush1.msra.mxu0 0.0
      %2530 = vmatprep.subr.mxu0 0.0
      %2531 = vmatpush1.msra.mxu0 0.0
      %2532 = vmatprep.subr.mxu0 0.0
      %2533 = vmatpush1.msra.mxu0 0.0
      %2534 = vmatprep.subr.mxu0 0.0
      %2535 = vmatpush1.msra.mxu0 0.0
      %2536 = vmatprep.subr.mxu0 0.0
      %2537 = vmatpush1.msra.mxu0 0.0
      %2538 = vmatprep.subr.mxu0 0.0
      %2539 = vmatpush1.msra.mxu0 0.0
      %2540 = vmatprep.subr.mxu0 0.0
      %2541 = vmatpush1.msra.mxu0 0.0
      %2542 = vmatprep.mubr.f32.mxu0 0.0
      %v2543 = vand.u32 %v2154, 4294901760
      %2544 = vmatmul.mubr.f32.gmra.mrb[0].mxu0 %v2543
      %v2545 = vpop.f32.mrb[0].mxu0
      %v2546 = vadd.f32 %v2275, %v2545
      %v2547 = vpop.f32.mrb[0].mxu0
      %v2548 = vadd.f32 %v2277, %v2547
      %2549 = vmatprep.mubr.f32.mxu0 0.0
      %v2550 = vand.u32 %v2157, 4294901760
      %2551 = vmatmul.mubr.f32.gmra.mrb[0].mxu0 %v2550
      %v2552 = vpop.f32.mrb[0].mxu0
      %v2553 = vadd.f32 %v2286, %v2552
      %v2554 = vpop.f32.mrb[0].mxu0
      %v2555 = vadd.f32 %v2288, %v2554
      %2556 = vmatprep.mubr.f32.mxu0 0.0
      %v2557 = vand.u32 %v2160, 4294901760
      %2558 = vmatmul.mubr.f32.gmra.mrb[0].mxu0 %v2557
      %v2559 = vpop.f32.mrb[0].mxu0
      %v2560 = vadd.f32 %v2297, %v2559
      %v2561 = vpop.f32.mrb[0].mxu0
      %v2562 = vadd.f32 %v2299, %v2561
      %2563 = vmatprep.mubr.f32.mxu0 0.0
      %v2564 = vand.u32 %v2163, 4294901760
      %2565 = vmatmul.mubr.f32.gmra.mrb[0].mxu0 %v2564
      %v2566 = vpop.f32.mrb[0].mxu0
      %v2567 = vadd.f32 %v2308, %v2566
      %v2568 = vpop.f32.mrb[0].mxu0
      %v2569 = vadd.f32 %v2310, %v2568
      %2570 = vmatprep.mubr.f32.mxu0 0.0
      %v2571 = vand.u32 %v2166, 4294901760
      %2572 = vmatmul.mubr.f32.gmra.mrb[0].mxu0 %v2571
      %v2573 = vpop.f32.mrb[0].mxu0
      %v2574 = vadd.f32 %v2319, %v2573
      %v2575 = vpop.f32.mrb[0].mxu0
      %v2576 = vadd.f32 %v2321, %v2575
      %2577 = vmatprep.mubr.f32.mxu0 0.0
      %v2578 = vand.u32 %v2169, 4294901760
      %2579 = vmatmul.mubr.f32.gmra.mrb[0].mxu0 %v2578
      %v2580 = vpop.f32.mrb[0].mxu0
      %v2581 = vadd.f32 %v2330, %v2580
      %v2582 = vpop.f32.mrb[0].mxu0
      %v2583 = vadd.f32 %v2332, %v2582
      %2584 = vmatprep.mubr.f32.mxu0 0.0
      %v2585 = vand.u32 %v2172, 4294901760
      %2586 = vmatmul.mubr.f32.gmra.mrb[0].mxu0 %v2585
      %v2587 = vpop.f32.mrb[0].mxu0
      %v2588 = vadd.f32 %v2341, %v2587
      %v2589 = vpop.f32.mrb[0].mxu0
      %v2590 = vadd.f32 %v2343, %v2589
      %2591 = vmatprep.mubr.f32.mxu0 0.0
      %v2592 = vand.u32 %v2175, 4294901760
      %2593 = vmatmul.mubr.f32.gmra.mrb[0].mxu0 %v2592
      %v2594 = vpop.f32.mrb[0].mxu0
      %v2595 = vadd.f32 %v2352, %v2594
      %v2596 = vpop.f32.mrb[0].mxu0
      %v2597 = vadd.f32 %v2354, %v2596
      %2598 = vmatprep.mubr.f32.mxu0 0.0
      %v2599 = vand.u32 %v2178, 4294901760
      %2600 = vmatmul.mubr.f32.gmra.mrb[0].mxu0 %v2599
      %v2601 = vpop.f32.mrb[0].mxu0
      %v2602 = vadd.f32 %v2363, %v2601
      %v2603 = vpop.f32.mrb[0].mxu0
      %v2604 = vadd.f32 %v2365, %v2603
      %2605 = vmatprep.mubr.f32.mxu0 0.0
      %v2606 = vand.u32 %v2181, 4294901760
      %2607 = vmatmul.mubr.f32.gmra.mrb[0].mxu0 %v2606
      %v2608 = vpop.f32.mrb[0].mxu0
      %v2609 = vadd.f32 %v2374, %v2608
      %v2610 = vpop.f32.mrb[0].mxu0
      %v2611 = vadd.f32 %v2376, %v2610
      %2612 = vdwg.mxu0
      %v2613 = vand.u32 %v2068, 4294901760
      %v2614 = vsub.f32 %v2068, %v2613
      %2615 = vmatprep.subr.mxu0 %v2614
      %v2616 = vand.u32 %v2066, 4294901760
      %v2617 = vsub.f32 %v2066, %v2616
      %2618 = vmatpush1.msra.mxu0 %v2617
      %v2619 = vand.u32 %v2076, 4294901760
      %v2620 = vsub.f32 %v2076, %v2619
      %2621 = vmatprep.subr.mxu0 %v2620
      %v2622 = vand.u32 %v2074, 4294901760
      %v2623 = vsub.f32 %v2074, %v2622
      %2624 = vmatpush1.msra.mxu0 %v2623
      %v2625 = vand.u32 %v2084, 4294901760
      %v2626 = vsub.f32 %v2084, %v2625
      %2627 = vmatprep.subr.mxu0 %v2626
      %v2628 = vand.u32 %v2082, 4294901760
      %v2629 = vsub.f32 %v2082, %v2628
      %2630 = vmatpush1.msra.mxu0 %v2629
      %v2631 = vand.u32 %v2092, 4294901760
      %v2632 = vsub.f32 %v2092, %v2631
      %2633 = vmatprep.subr.mxu0 %v2632
      %v2634 = vand.u32 %v2090, 4294901760
      %v2635 = vsub.f32 %v2090, %v2634
      %2636 = vmatpush1.msra.mxu0 %v2635
      %v2637 = vand.u32 %v2100, 4294901760
      %v2638 = vsub.f32 %v2100, %v2637
      %2639 = vmatprep.subr.mxu0 %v2638
      %v2640 = vand.u32 %v2098, 4294901760
      %v2641 = vsub.f32 %v2098, %v2640
      %2642 = vmatpush1.msra.mxu0 %v2641
      %v2643 = vand.u32 %v2108, 4294901760
      %v2644 = vsub.f32 %v2108, %v2643
      %2645 = vmatprep.subr.mxu0 %v2644
      %v2646 = vand.u32 %v2106, 4294901760
      %v2647 = vsub.f32 %v2106, %v2646
      %2648 = vmatpush1.msra.mxu0 %v2647
      %v2649 = vand.u32 %v2116, 4294901760
      %v2650 = vsub.f32 %v2116, %v2649
      %2651 = vmatprep.subr.mxu0 %v2650
      %v2652 = vand.u32 %v2114, 4294901760
      %v2653 = vsub.f32 %v2114, %v2652
      %2654 = vmatpush1.msra.mxu0 %v2653
      %v2655 = vand.u32 %v2124, 4294901760
      %v2656 = vsub.f32 %v2124, %v2655
      %2657 = vmatprep.subr.mxu0 %v2656
      %v2658 = vand.u32 %v2122, 4294901760
      %v2659 = vsub.f32 %v2122, %v2658
      %2660 = vmatpush1.msra.mxu0 %v2659
      %v2661 = vand.u32 %v2132, 4294901760
      %v2662 = vsub.f32 %v2132, %v2661
      %2663 = vmatprep.subr.mxu0 %v2662
      %v2664 = vand.u32 %v2130, 4294901760
      %v2665 = vsub.f32 %v2130, %v2664
      %2666 = vmatpush1.msra.mxu0 %v2665
      %v2667 = vand.u32 %v2140, 4294901760
      %v2668 = vsub.f32 %v2140, %v2667
      %2669 = vmatprep.subr.mxu0 %v2668
      %v2670 = vand.u32 %v2138, 4294901760
      %v2671 = vsub.f32 %v2138, %v2670
      %2672 = vmatpush1.msra.mxu0 %v2671
      %2673 = vmatprep.subr.mxu0 0.0
      %2674 = vmatpush1.msra.mxu0 0.0
      %2675 = vmatprep.subr.mxu0 0.0
      %2676 = vmatpush1.msra.mxu0 0.0
      %2677 = vmatprep.subr.mxu0 0.0
      %2678 = vmatpush1.msra.mxu0 0.0
      %2679 = vmatprep.subr.mxu0 0.0
      %2680 = vmatpush1.msra.mxu0 0.0
      %2681 = vmatprep.subr.mxu0 0.0
      %2682 = vmatpush1.msra.mxu0 0.0
      %2683 = vmatprep.subr.mxu0 0.0
      %2684 = vmatpush1.msra.mxu0 0.0
      %2685 = vmatprep.subr.mxu0 0.0
      %2686 = vmatpush1.msra.mxu0 0.0
      %2687 = vmatprep.subr.mxu0 0.0
      %2688 = vmatpush1.msra.mxu0 0.0
      %2689 = vmatprep.subr.mxu0 0.0
      %2690 = vmatpush1.msra.mxu0 0.0
      %2691 = vmatprep.subr.mxu0 0.0
      %2692 = vmatpush1.msra.mxu0 0.0
      %2693 = vmatprep.subr.mxu0 0.0
      %2694 = vmatpush1.msra.mxu0 0.0
      %2695 = vmatprep.subr.mxu0 0.0
      %2696 = vmatpush1.msra.mxu0 0.0
      %2697 = vmatprep.subr.mxu0 0.0
      %2698 = vmatpush1.msra.mxu0 0.0
      %2699 = vmatprep.subr.mxu0 0.0
      %2700 = vmatpush1.msra.mxu0 0.0
      %2701 = vmatprep.subr.mxu0 0.0
      %2702 = vmatpush1.msra.mxu0 0.0
      %2703 = vmatprep.subr.mxu0 0.0
      %2704 = vmatpush1.msra.mxu0 0.0
      %2705 = vmatprep.subr.mxu0 0.0
      %2706 = vmatpush1.msra.mxu0 0.0
      %2707 = vmatprep.subr.mxu0 0.0
      %2708 = vmatpush1.msra.mxu0 0.0
      %2709 = vmatprep.subr.mxu0 0.0
      %2710 = vmatpush1.msra.mxu0 0.0
      %2711 = vmatprep.subr.mxu0 0.0
      %2712 = vmatpush1.msra.mxu0 0.0
      %2713 = vmatprep.subr.mxu0 0.0
      %2714 = vmatpush1.msra.mxu0 0.0
      %2715 = vmatprep.subr.mxu0 0.0
      %2716 = vmatpush1.msra.mxu0 0.0
      %2717 = vmatprep.mubr.f32.mxu0 0.0
      %v2718 = vand.u32 %v2154, 4294901760
      %v2719 = vsub.f32 %v2154, %v2718
      %2720 = vmatmul.mubr.f32.gmra.mrb[0].mxu0 %v2719
      %v2721 = vpop.f32.mrb[0].mxu0
      %v2722 = vadd.f32 %v2546, %v2721
      %v2723 = vpop.f32.mrb[0].mxu0
      %v2724 = vadd.f32 %v2548, %v2723
      %2725 = vmatprep.mubr.f32.mxu0 0.0
      %v2726 = vand.u32 %v2157, 4294901760
      %v2727 = vsub.f32 %v2157, %v2726
      %2728 = vmatmul.mubr.f32.gmra.mrb[0].mxu0 %v2727
      %v2729 = vpop.f32.mrb[0].mxu0
      %v2730 = vadd.f32 %v2553, %v2729
      %v2731 = vpop.f32.mrb[0].mxu0
      %v2732 = vadd.f32 %v2555, %v2731
      %2733 = vmatprep.mubr.f32.mxu0 0.0
      %v2734 = vand.u32 %v2160, 4294901760
      %v2735 = vsub.f32 %v2160, %v2734
      %2736 = vmatmul.mubr.f32.gmra.mrb[0].mxu0 %v2735
      %v2737 = vpop.f32.mrb[0].mxu0
      %v2738 = vadd.f32 %v2560, %v2737
      %v2739 = vpop.f32.mrb[0].mxu0
      %v2740 = vadd.f32 %v2562, %v2739
      %2741 = vmatprep.mubr.f32.mxu0 0.0
      %v2742 = vand.u32 %v2163, 4294901760
      %v2743 = vsub.f32 %v2163, %v2742
      %2744 = vmatmul.mubr.f32.gmra.mrb[0].mxu0 %v2743
      %v2745 = vpop.f32.mrb[0].mxu0
      %v2746 = vadd.f32 %v2567, %v2745
      %v2747 = vpop.f32.mrb[0].mxu0
      %v2748 = vadd.f32 %v2569, %v2747
      %2749 = vmatprep.mubr.f32.mxu0 0.0
      %v2750 = vand.u32 %v2166, 4294901760
      %v2751 = vsub.f32 %v2166, %v2750
      %2752 = vmatmul.mubr.f32.gmra.mrb[0].mxu0 %v2751
      %v2753 = vpop.f32.mrb[0].mxu0
      %v2754 = vadd.f32 %v2574, %v2753
      %v2755 = vpop.f32.mrb[0].mxu0
      %v2756 = vadd.f32 %v2576, %v2755
      %2757 = vmatprep.mubr.f32.mxu0 0.0
      %v2758 = vand.u32 %v2169, 4294901760
      %v2759 = vsub.f32 %v2169, %v2758
      %2760 = vmatmul.mubr.f32.gmra.mrb[0].mxu0 %v2759
      %v2761 = vpop.f32.mrb[0].mxu0
      %v2762 = vadd.f32 %v2581, %v2761
      %v2763 = vpop.f32.mrb[0].mxu0
      %v2764 = vadd.f32 %v2583, %v2763
      %2765 = vmatprep.mubr.f32.mxu0 0.0
      %v2766 = vand.u32 %v2172, 4294901760
      %v2767 = vsub.f32 %v2172, %v2766
      %2768 = vmatmul.mubr.f32.gmra.mrb[0].mxu0 %v2767
      %v2769 = vpop.f32.mrb[0].mxu0
      %v2770 = vadd.f32 %v2588, %v2769
      %v2771 = vpop.f32.mrb[0].mxu0
      %v2772 = vadd.f32 %v2590, %v2771
      %2773 = vmatprep.mubr.f32.mxu0 0.0
      %v2774 = vand.u32 %v2175, 4294901760
      %v2775 = vsub.f32 %v2175, %v2774
      %2776 = vmatmul.mubr.f32.gmra.mrb[0].mxu0 %v2775
      %v2777 = vpop.f32.mrb[0].mxu0
      %v2778 = vadd.f32 %v2595, %v2777
      %v2779 = vpop.f32.mrb[0].mxu0
      %v2780 = vadd.f32 %v2597, %v2779
      %2781 = vmatprep.mubr.f32.mxu0 0.0
      %v2782 = vand.u32 %v2178, 4294901760
      %v2783 = vsub.f32 %v2178, %v2782
      %2784 = vmatmul.mubr.f32.gmra.mrb[0].mxu0 %v2783
      %v2785 = vpop.f32.mrb[0].mxu0
      %v2786 = vadd.f32 %v2602, %v2785
      %v2787 = vpop.f32.mrb[0].mxu0
      %v2788 = vadd.f32 %v2604, %v2787
      %2789 = vmatprep.mubr.f32.mxu0 0.0
      %v2790 = vand.u32 %v2181, 4294901760
      %v2791 = vsub.f32 %v2181, %v2790
      %2792 = vmatmul.mubr.f32.gmra.mrb[0].mxu0 %v2791
      %v2793 = vpop.f32.mrb[0].mxu0
      %v2794 = vadd.f32 %v2609, %v2793
      %v2795 = vpop.f32.mrb[0].mxu0
      %v2796 = vadd.f32 %v2611, %v2795
      %2797 = vdwg.mxu0
      %v2798 = vand.u32 %v2068, 4294901760
      %2799 = vmatprep.subr.mxu0 %v2798
      %v2800 = vand.u32 %v2066, 4294901760
      %2801 = vmatpush1.msra.mxu0 %v2800
      %v2802 = vand.u32 %v2076, 4294901760
      %2803 = vmatprep.subr.mxu0 %v2802
      %v2804 = vand.u32 %v2074, 4294901760
      %2805 = vmatpush1.msra.mxu0 %v2804
      %v2806 = vand.u32 %v2084, 4294901760
      %2807 = vmatprep.subr.mxu0 %v2806
      %v2808 = vand.u32 %v2082, 4294901760
      %2809 = vmatpush1.msra.mxu0 %v2808
      %v2810 = vand.u32 %v2092, 4294901760
      %2811 = vmatprep.subr.mxu0 %v2810
      %v2812 = vand.u32 %v2090, 4294901760
      %2813 = vmatpush1.msra.mxu0 %v2812
      %v2814 = vand.u32 %v2100, 4294901760
      %2815 = vmatprep.subr.mxu0 %v2814
      %v2816 = vand.u32 %v2098, 4294901760
      %2817 = vmatpush1.msra.mxu0 %v2816
      %v2818 = vand.u32 %v2108, 4294901760
      %2819 = vmatprep.subr.mxu0 %v2818
      %v2820 = vand.u32 %v2106, 4294901760
      %2821 = vmatpush1.msra.mxu0 %v2820
      %v2822 = vand.u32 %v2116, 4294901760
      %2823 = vmatprep.subr.mxu0 %v2822
      %v2824 = vand.u32 %v2114, 4294901760
      %2825 = vmatpush1.msra.mxu0 %v2824
      %v2826 = vand.u32 %v2124, 4294901760
      %2827 = vmatprep.subr.mxu0 %v2826
      %v2828 = vand.u32 %v2122, 4294901760
      %2829 = vmatpush1.msra.mxu0 %v2828
      %v2830 = vand.u32 %v2132, 4294901760
      %2831 = vmatprep.subr.mxu0 %v2830
      %v2832 = vand.u32 %v2130, 4294901760
      %2833 = vmatpush1.msra.mxu0 %v2832
      %v2834 = vand.u32 %v2140, 4294901760
      %2835 = vmatprep.subr.mxu0 %v2834
      %v2836 = vand.u32 %v2138, 4294901760
      %2837 = vmatpush1.msra.mxu0 %v2836
      %2838 = vmatprep.subr.mxu0 0.0
      %2839 = vmatpush1.msra.mxu0 0.0
      %2840 = vmatprep.subr.mxu0 0.0
      %2841 = vmatpush1.msra.mxu0 0.0
      %2842 = vmatprep.subr.mxu0 0.0
      %2843 = vmatpush1.msra.mxu0 0.0
      %2844 = vmatprep.subr.mxu0 0.0
      %2845 = vmatpush1.msra.mxu0 0.0
      %2846 = vmatprep.subr.mxu0 0.0
      %2847 = vmatpush1.msra.mxu0 0.0
      %2848 = vmatprep.subr.mxu0 0.0
      %2849 = vmatpush1.msra.mxu0 0.0
      %2850 = vmatprep.subr.mxu0 0.0
      %2851 = vmatpush1.msra.mxu0 0.0
      %2852 = vmatprep.subr.mxu0 0.0
      %2853 = vmatpush1.msra.mxu0 0.0
      %2854 = vmatprep.subr.mxu0 0.0
      %2855 = vmatpush1.msra.mxu0 0.0
      %2856 = vmatprep.subr.mxu0 0.0
      %2857 = vmatpush1.msra.mxu0 0.0
      %2858 = vmatprep.subr.mxu0 0.0
      %2859 = vmatpush1.msra.mxu0 0.0
      %2860 = vmatprep.subr.mxu0 0.0
      %2861 = vmatpush1.msra.mxu0 0.0
      %2862 = vmatprep.subr.mxu0 0.0
      %2863 = vmatpush1.msra.mxu0 0.0
      %2864 = vmatprep.subr.mxu0 0.0
      %2865 = vmatpush1.msra.mxu0 0.0
      %2866 = vmatprep.subr.mxu0 0.0
      %2867 = vmatpush1.msra.mxu0 0.0
      %2868 = vmatprep.subr.mxu0 0.0
      %2869 = vmatpush1.msra.mxu0 0.0
      %2870 = vmatprep.subr.mxu0 0.0
      %2871 = vmatpush1.msra.mxu0 0.0
      %2872 = vmatprep.subr.mxu0 0.0
      %2873 = vmatpush1.msra.mxu0 0.0
      %2874 = vmatprep.subr.mxu0 0.0
      %2875 = vmatpush1.msra.mxu0 0.0
      %2876 = vmatprep.subr.mxu0 0.0
      %2877 = vmatpush1.msra.mxu0 0.0
      %2878 = vmatprep.subr.mxu0 0.0
      %2879 = vmatpush1.msra.mxu0 0.0
      %2880 = vmatprep.subr.mxu0 0.0
      %2881 = vmatpush1.msra.mxu0 0.0
      %2882 = vmatprep.mubr.f32.mxu0 0.0
      %v2883 = vand.u32 %v2154, 4294901760
      %v2884 = vsub.f32 %v2154, %v2883
      %v2885 = vand.u32 %v2884, 4294901760
      %2886 = vmatmul.mubr.f32.gmra.mrb[0].mxu0 %v2885
      %v2887 = vpop.f32.mrb[0].mxu0
      %v2888 = vadd.f32 %v2722, %v2887
      %v2889 = vpop.f32.mrb[0].mxu0
      %v2890 = vadd.f32 %v2724, %v2889
      %2891 = vmatprep.mubr.f32.mxu0 0.0
      %v2892 = vand.u32 %v2157, 4294901760
      %v2893 = vsub.f32 %v2157, %v2892
      %v2894 = vand.u32 %v2893, 4294901760
      %2895 = vmatmul.mubr.f32.gmra.mrb[0].mxu0 %v2894
      %v2896 = vpop.f32.mrb[0].mxu0
      %v2897 = vadd.f32 %v2730, %v2896
      %v2898 = vpop.f32.mrb[0].mxu0
      %v2899 = vadd.f32 %v2732, %v2898
      %2900 = vmatprep.mubr.f32.mxu0 0.0
      %v2901 = vand.u32 %v2160, 4294901760
      %v2902 = vsub.f32 %v2160, %v2901
      %v2903 = vand.u32 %v2902, 4294901760
      %2904 = vmatmul.mubr.f32.gmra.mrb[0].mxu0 %v2903
      %v2905 = vpop.f32.mrb[0].mxu0
      %v2906 = vadd.f32 %v2738, %v2905
      %v2907 = vpop.f32.mrb[0].mxu0
      %v2908 = vadd.f32 %v2740, %v2907
      %2909 = vmatprep.mubr.f32.mxu0 0.0
      %v2910 = vand.u32 %v2163, 4294901760
      %v2911 = vsub.f32 %v2163, %v2910
      %v2912 = vand.u32 %v2911, 4294901760
      %2913 = vmatmul.mubr.f32.gmra.mrb[0].mxu0 %v2912
      %v2914 = vpop.f32.mrb[0].mxu0
      %v2915 = vadd.f32 %v2746, %v2914
      %v2916 = vpop.f32.mrb[0].mxu0
      %v2917 = vadd.f32 %v2748, %v2916
      %2918 = vmatprep.mubr.f32.mxu0 0.0
      %v2919 = vand.u32 %v2166, 4294901760
      %v2920 = vsub.f32 %v2166, %v2919
      %v2921 = vand.u32 %v2920, 4294901760
      %2922 = vmatmul.mubr.f32.gmra.mrb[0].mxu0 %v2921
      %v2923 = vpop.f32.mrb[0].mxu0
      %v2924 = vadd.f32 %v2754, %v2923
      %v2925 = vpop.f32.mrb[0].mxu0
      %v2926 = vadd.f32 %v2756, %v2925
      %2927 = vmatprep.mubr.f32.mxu0 0.0
      %v2928 = vand.u32 %v2169, 4294901760
      %v2929 = vsub.f32 %v2169, %v2928
      %v2930 = vand.u32 %v2929, 4294901760
      %2931 = vmatmul.mubr.f32.gmra.mrb[0].mxu0 %v2930
      %v2932 = vpop.f32.mrb[0].mxu0
      %v2933 = vadd.f32 %v2762, %v2932
      %v2934 = vpop.f32.mrb[0].mxu0
      %v2935 = vadd.f32 %v2764, %v2934
      %2936 = vmatprep.mubr.f32.mxu0 0.0
      %v2937 = vand.u32 %v2172, 4294901760
      %v2938 = vsub.f32 %v2172, %v2937
      %v2939 = vand.u32 %v2938, 4294901760
      %2940 = vmatmul.mubr.f32.gmra.mrb[0].mxu0 %v2939
      %v2941 = vpop.f32.mrb[0].mxu0
      %v2942 = vadd.f32 %v2770, %v2941
      %v2943 = vpop.f32.mrb[0].mxu0
      %v2944 = vadd.f32 %v2772, %v2943
      %2945 = vmatprep.mubr.f32.mxu0 0.0
      %v2946 = vand.u32 %v2175, 4294901760
      %v2947 = vsub.f32 %v2175, %v2946
      %v2948 = vand.u32 %v2947, 4294901760
      %2949 = vmatmul.mubr.f32.gmra.mrb[0].mxu0 %v2948
      %v2950 = vpop.f32.mrb[0].mxu0
      %v2951 = vadd.f32 %v2778, %v2950
      %v2952 = vpop.f32.mrb[0].mxu0
      %v2953 = vadd.f32 %v2780, %v2952
      %2954 = vmatprep.mubr.f32.mxu0 0.0
      %v2955 = vand.u32 %v2178, 4294901760
      %v2956 = vsub.f32 %v2178, %v2955
      %v2957 = vand.u32 %v2956, 4294901760
      %2958 = vmatmul.mubr.f32.gmra.mrb[0].mxu0 %v2957
      %v2959 = vpop.f32.mrb[0].mxu0
      %v2960 = vadd.f32 %v2786, %v2959
      %v2961 = vpop.f32.mrb[0].mxu0
      %v2962 = vadd.f32 %v2788, %v2961
      %2963 = vmatprep.mubr.f32.mxu0 0.0
      %v2964 = vand.u32 %v2181, 4294901760
      %v2965 = vsub.f32 %v2181, %v2964
      %v2966 = vand.u32 %v2965, 4294901760
      %2967 = vmatmul.mubr.f32.gmra.mrb[0].mxu0 %v2966
      %v2968 = vpop.f32.mrb[0].mxu0
      %v2969 = vadd.f32 %v2794, %v2968
      %v2970 = vpop.f32.mrb[0].mxu0
      %v2971 = vadd.f32 %v2796, %v2970
      %2972 = vdwg.mxu0
      %v2973 = vand.u32 %v2068, 4294901760
      %v2974 = vsub.f32 %v2068, %v2973
      %v2975 = vand.u32 %v2974, 4294901760
      %2976 = vmatprep.subr.mxu0 %v2975
      %v2977 = vand.u32 %v2066, 4294901760
      %v2978 = vsub.f32 %v2066, %v2977
      %v2979 = vand.u32 %v2978, 4294901760
      %2980 = vmatpush1.msra.mxu0 %v2979
      %v2981 = vand.u32 %v2076, 4294901760
      %v2982 = vsub.f32 %v2076, %v2981
      %v2983 = vand.u32 %v2982, 4294901760
      %2984 = vmatprep.subr.mxu0 %v2983
      %v2985 = vand.u32 %v2074, 4294901760
      %v2986 = vsub.f32 %v2074, %v2985
      %v2987 = vand.u32 %v2986, 4294901760
      %2988 = vmatpush1.msra.mxu0 %v2987
      %v2989 = vand.u32 %v2084, 4294901760
      %v2990 = vsub.f32 %v2084, %v2989
      %v2991 = vand.u32 %v2990, 4294901760
      %2992 = vmatprep.subr.mxu0 %v2991
      %v2993 = vand.u32 %v2082, 4294901760
      %v2994 = vsub.f32 %v2082, %v2993
      %v2995 = vand.u32 %v2994, 4294901760
      %2996 = vmatpush1.msra.mxu0 %v2995
      %v2997 = vand.u32 %v2092, 4294901760
      %v2998 = vsub.f32 %v2092, %v2997
      %v2999 = vand.u32 %v2998, 4294901760
      %3000 = vmatprep.subr.mxu0 %v2999
      %v3001 = vand.u32 %v2090, 4294901760
      %v3002 = vsub.f32 %v2090, %v3001
      %v3003 = vand.u32 %v3002, 4294901760
      %3004 = vmatpush1.msra.mxu0 %v3003
      %v3005 = vand.u32 %v2100, 4294901760
      %v3006 = vsub.f32 %v2100, %v3005
      %v3007 = vand.u32 %v3006, 4294901760
      %3008 = vmatprep.subr.mxu0 %v3007
      %v3009 = vand.u32 %v2098, 4294901760
      %v3010 = vsub.f32 %v2098, %v3009
      %v3011 = vand.u32 %v3010, 4294901760
      %3012 = vmatpush1.msra.mxu0 %v3011
      %v3013 = vand.u32 %v2108, 4294901760
      %v3014 = vsub.f32 %v2108, %v3013
      %v3015 = vand.u32 %v3014, 4294901760
      %3016 = vmatprep.subr.mxu0 %v3015
      %v3017 = vand.u32 %v2106, 4294901760
      %v3018 = vsub.f32 %v2106, %v3017
      %v3019 = vand.u32 %v3018, 4294901760
      %3020 = vmatpush1.msra.mxu0 %v3019
      %v3021 = vand.u32 %v2116, 4294901760
      %v3022 = vsub.f32 %v2116, %v3021
      %v3023 = vand.u32 %v3022, 4294901760
      %3024 = vmatprep.subr.mxu0 %v3023
      %v3025 = vand.u32 %v2114, 4294901760
      %v3026 = vsub.f32 %v2114, %v3025
      %v3027 = vand.u32 %v3026, 4294901760
      %3028 = vmatpush1.msra.mxu0 %v3027
      %v3029 = vand.u32 %v2124, 4294901760
      %v3030 = vsub.f32 %v2124, %v3029
      %v3031 = vand.u32 %v3030, 4294901760
      %3032 = vmatprep.subr.mxu0 %v3031
      %v3033 = vand.u32 %v2122, 4294901760
      %v3034 = vsub.f32 %v2122, %v3033
      %v3035 = vand.u32 %v3034, 4294901760
      %3036 = vmatpush1.msra.mxu0 %v3035
      %v3037 = vand.u32 %v2132, 4294901760
      %v3038 = vsub.f32 %v2132, %v3037
      %v3039 = vand.u32 %v3038, 4294901760
      %3040 = vmatprep.subr.mxu0 %v3039
      %v3041 = vand.u32 %v2130, 4294901760
      %v3042 = vsub.f32 %v2130, %v3041
      %v3043 = vand.u32 %v3042, 4294901760
      %3044 = vmatpush1.msra.mxu0 %v3043
      %v3045 = vand.u32 %v2140, 4294901760
      %v3046 = vsub.f32 %v2140, %v3045
      %v3047 = vand.u32 %v3046, 4294901760
      %3048 = vmatprep.subr.mxu0 %v3047
      %v3049 = vand.u32 %v2138, 4294901760
      %v3050 = vsub.f32 %v2138, %v3049
      %v3051 = vand.u32 %v3050, 4294901760
      %3052 = vmatpush1.msra.mxu0 %v3051
      %3053 = vmatprep.subr.mxu0 0.0
      %3054 = vmatpush1.msra.mxu0 0.0
      %3055 = vmatprep.subr.mxu0 0.0
      %3056 = vmatpush1.msra.mxu0 0.0
      %3057 = vmatprep.subr.mxu0 0.0
      %3058 = vmatpush1.msra.mxu0 0.0
      %3059 = vmatprep.subr.mxu0 0.0
      %3060 = vmatpush1.msra.mxu0 0.0
      %3061 = vmatprep.subr.mxu0 0.0
      %3062 = vmatpush1.msra.mxu0 0.0
      %3063 = vmatprep.subr.mxu0 0.0
      %3064 = vmatpush1.msra.mxu0 0.0
      %3065 = vmatprep.subr.mxu0 0.0
      %3066 = vmatpush1.msra.mxu0 0.0
      %3067 = vmatprep.subr.mxu0 0.0
      %3068 = vmatpush1.msra.mxu0 0.0
      %3069 = vmatprep.subr.mxu0 0.0
      %3070 = vmatpush1.msra.mxu0 0.0
      %3071 = vmatprep.subr.mxu0 0.0
      %3072 = vmatpush1.msra.mxu0 0.0
      %3073 = vmatprep.subr.mxu0 0.0
      %3074 = vmatpush1.msra.mxu0 0.0
      %3075 = vmatprep.subr.mxu0 0.0
      %3076 = vmatpush1.msra.mxu0 0.0
      %3077 = vmatprep.subr.mxu0 0.0
      %3078 = vmatpush1.msra.mxu0 0.0
      %3079 = vmatprep.subr.mxu0 0.0
      %3080 = vmatpush1.msra.mxu0 0.0
      %3081 = vmatprep.subr.mxu0 0.0
      %3082 = vmatpush1.msra.mxu0 0.0
      %3083 = vmatprep.subr.mxu0 0.0
      %3084 = vmatpush1.msra.mxu0 0.0
      %3085 = vmatprep.subr.mxu0 0.0
      %3086 = vmatpush1.msra.mxu0 0.0
      %3087 = vmatprep.subr.mxu0 0.0
      %3088 = vmatpush1.msra.mxu0 0.0
      %3089 = vmatprep.subr.mxu0 0.0
      %3090 = vmatpush1.msra.mxu0 0.0
      %3091 = vmatprep.subr.mxu0 0.0
      %3092 = vmatpush1.msra.mxu0 0.0
      %3093 = vmatprep.subr.mxu0 0.0
      %3094 = vmatpush1.msra.mxu0 0.0
      %3095 = vmatprep.subr.mxu0 0.0
      %3096 = vmatpush1.msra.mxu0 0.0
      %3097 = vmatprep.mubr.f32.mxu0 0.0
      %v3098 = vand.u32 %v2154, 4294901760
      %3099 = vmatmul.mubr.f32.gmra.mrb[0].mxu0 %v3098
      %v3100 = vpop.f32.mrb[0].mxu0
      %v3101 = vadd.f32 %v2888, %v3100
      %v3102 = vpop.f32.mrb[0].mxu0
      %v3103 = vadd.f32 %v2890, %v3102
      %3104 = vmatprep.mubr.f32.mxu0 0.0
      %v3105 = vand.u32 %v2157, 4294901760
      %3106 = vmatmul.mubr.f32.gmra.mrb[0].mxu0 %v3105
      %v3107 = vpop.f32.mrb[0].mxu0
      %v3108 = vadd.f32 %v2897, %v3107
      %v3109 = vpop.f32.mrb[0].mxu0
      %v3110 = vadd.f32 %v2899, %v3109
      %3111 = vmatprep.mubr.f32.mxu0 0.0
      %v3112 = vand.u32 %v2160, 4294901760
      %3113 = vmatmul.mubr.f32.gmra.mrb[0].mxu0 %v3112
      %v3114 = vpop.f32.mrb[0].mxu0
      %v3115 = vadd.f32 %v2906, %v3114
      %v3116 = vpop.f32.mrb[0].mxu0
      %v3117 = vadd.f32 %v2908, %v3116
      %3118 = vmatprep.mubr.f32.mxu0 0.0
      %v3119 = vand.u32 %v2163, 4294901760
      %3120 = vmatmul.mubr.f32.gmra.mrb[0].mxu0 %v3119
      %v3121 = vpop.f32.mrb[0].mxu0
      %v3122 = vadd.f32 %v2915, %v3121
      %v3123 = vpop.f32.mrb[0].mxu0
      %v3124 = vadd.f32 %v2917, %v3123
      %3125 = vmatprep.mubr.f32.mxu0 0.0
      %v3126 = vand.u32 %v2166, 4294901760
      %3127 = vmatmul.mubr.f32.gmra.mrb[0].mxu0 %v3126
      %v3128 = vpop.f32.mrb[0].mxu0
      %v3129 = vadd.f32 %v2924, %v3128
      %v3130 = vpop.f32.mrb[0].mxu0
      %v3131 = vadd.f32 %v2926, %v3130
      %3132 = vmatprep.mubr.f32.mxu0 0.0
      %v3133 = vand.u32 %v2169, 4294901760
      %3134 = vmatmul.mubr.f32.gmra.mrb[0].mxu0 %v3133
      %v3135 = vpop.f32.mrb[0].mxu0
      %v3136 = vadd.f32 %v2933, %v3135
      %v3137 = vpop.f32.mrb[0].mxu0
      %v3138 = vadd.f32 %v2935, %v3137
      %3139 = vmatprep.mubr.f32.mxu0 0.0
      %v3140 = vand.u32 %v2172, 4294901760
      %3141 = vmatmul.mubr.f32.gmra.mrb[0].mxu0 %v3140
      %v3142 = vpop.f32.mrb[0].mxu0
      %v3143 = vadd.f32 %v2942, %v3142
      %v3144 = vpop.f32.mrb[0].mxu0
      %v3145 = vadd.f32 %v2944, %v3144
      %3146 = vmatprep.mubr.f32.mxu0 0.0
      %v3147 = vand.u32 %v2175, 4294901760
      %3148 = vmatmul.mubr.f32.gmra.mrb[0].mxu0 %v3147
      %v3149 = vpop.f32.mrb[0].mxu0
      %v3150 = vadd.f32 %v2951, %v3149
      %v3151 = vpop.f32.mrb[0].mxu0
      %v3152 = vadd.f32 %v2953, %v3151
      %3153 = vmatprep.mubr.f32.mxu0 0.0
      %v3154 = vand.u32 %v2178, 4294901760
      %3155 = vmatmul.mubr.f32.gmra.mrb[0].mxu0 %v3154
      %v3156 = vpop.f32.mrb[0].mxu0
      %v3157 = vadd.f32 %v2960, %v3156
      %v3158 = vpop.f32.mrb[0].mxu0
      %v3159 = vadd.f32 %v2962, %v3158
      %3160 = vmatprep.mubr.f32.mxu0 0.0
      %v3161 = vand.u32 %v2181, 4294901760
      %3162 = vmatmul.mubr.f32.gmra.mrb[0].mxu0 %v3161
      %v3163 = vpop.f32.mrb[0].mxu0
      %v3164 = vadd.f32 %v2969, %v3163
      %v3165 = vpop.f32.mrb[0].mxu0
      %v3166 = vadd.f32 %v2971, %v3165
      %3167 = vdwg.mxu0
      %v3168 = vand.u32 %v2068, 4294901760
      %3169 = vmatprep.subr.mxu0 %v3168
      %v3170 = vand.u32 %v2066, 4294901760
      %3171 = vmatpush1.msra.mxu0 %v3170
      %v3172 = vand.u32 %v2076, 4294901760
      %3173 = vmatprep.subr.mxu0 %v3172
      %v3174 = vand.u32 %v2074, 4294901760
      %3175 = vmatpush1.msra.mxu0 %v3174
      %v3176 = vand.u32 %v2084, 4294901760
      %3177 = vmatprep.subr.mxu0 %v3176
      %v3178 = vand.u32 %v2082, 4294901760
      %3179 = vmatpush1.msra.mxu0 %v3178
      %v3180 = vand.u32 %v2092, 4294901760
      %3181 = vmatprep.subr.mxu0 %v3180
      %v3182 = vand.u32 %v2090, 4294901760
      %3183 = vmatpush1.msra.mxu0 %v3182
      %v3184 = vand.u32 %v2100, 4294901760
      %3185 = vmatprep.subr.mxu0 %v3184
      %v3186 = vand.u32 %v2098, 4294901760
      %3187 = vmatpush1.msra.mxu0 %v3186
      %v3188 = vand.u32 %v2108, 4294901760
      %3189 = vmatprep.subr.mxu0 %v3188
      %v3190 = vand.u32 %v2106, 4294901760
      %3191 = vmatpush1.msra.mxu0 %v3190
      %v3192 = vand.u32 %v2116, 4294901760
      %3193 = vmatprep.subr.mxu0 %v3192
      %v3194 = vand.u32 %v2114, 4294901760
      %3195 = vmatpush1.msra.mxu0 %v3194
      %v3196 = vand.u32 %v2124, 4294901760
      %3197 = vmatprep.subr.mxu0 %v3196
      %v3198 = vand.u32 %v2122, 4294901760
      %3199 = vmatpush1.msra.mxu0 %v3198
      %v3200 = vand.u32 %v2132, 4294901760
      %3201 = vmatprep.subr.mxu0 %v3200
      %v3202 = vand.u32 %v2130, 4294901760
      %3203 = vmatpush1.msra.mxu0 %v3202
      %v3204 = vand.u32 %v2140, 4294901760
      %3205 = vmatprep.subr.mxu0 %v3204
      %v3206 = vand.u32 %v2138, 4294901760
      %3207 = vmatpush1.msra.mxu0 %v3206
      %3208 = vmatprep.subr.mxu0 0.0
      %3209 = vmatpush1.msra.mxu0 0.0
      %3210 = vmatprep.subr.mxu0 0.0
      %3211 = vmatpush1.msra.mxu0 0.0
      %3212 = vmatprep.subr.mxu0 0.0
      %3213 = vmatpush1.msra.mxu0 0.0
      %3214 = vmatprep.subr.mxu0 0.0
      %3215 = vmatpush1.msra.mxu0 0.0
      %3216 = vmatprep.subr.mxu0 0.0
      %3217 = vmatpush1.msra.mxu0 0.0
      %3218 = vmatprep.subr.mxu0 0.0
      %3219 = vmatpush1.msra.mxu0 0.0
      %3220 = vmatprep.subr.mxu0 0.0
      %3221 = vmatpush1.msra.mxu0 0.0
      %3222 = vmatprep.subr.mxu0 0.0
      %3223 = vmatpush1.msra.mxu0 0.0
      %3224 = vmatprep.subr.mxu0 0.0
      %3225 = vmatpush1.msra.mxu0 0.0
      %3226 = vmatprep.subr.mxu0 0.0
      %3227 = vmatpush1.msra.mxu0 0.0
      %3228 = vmatprep.subr.mxu0 0.0
      %3229 = vmatpush1.msra.mxu0 0.0
      %3230 = vmatprep.subr.mxu0 0.0
      %3231 = vmatpush1.msra.mxu0 0.0
      %3232 = vmatprep.subr.mxu0 0.0
      %3233 = vmatpush1.msra.mxu0 0.0
      %3234 = vmatprep.subr.mxu0 0.0
      %3235 = vmatpush1.msra.mxu0 0.0
      %3236 = vmatprep.subr.mxu0 0.0
      %3237 = vmatpush1.msra.mxu0 0.0
      %3238 = vmatprep.subr.mxu0 0.0
      %3239 = vmatpush1.msra.mxu0 0.0
      %3240 = vmatprep.subr.mxu0 0.0
      %3241 = vmatpush1.msra.mxu0 0.0
      %3242 = vmatprep.subr.mxu0 0.0
      %3243 = vmatpush1.msra.mxu0 0.0
      %3244 = vmatprep.subr.mxu0 0.0
      %3245 = vmatpush1.msra.mxu0 0.0
      %3246 = vmatprep.subr.mxu0 0.0
      %3247 = vmatpush1.msra.mxu0 0.0
      %3248 = vmatprep.subr.mxu0 0.0
      %3249 = vmatpush1.msra.mxu0 0.0
      %3250 = vmatprep.subr.mxu0 0.0
      %3251 = vmatpush1.msra.mxu0 0.0
      %3252 = vmatprep.mubr.f32.mxu0 0.0
      %v3253 = vand.u32 %v2154, 4294901760
      %3254 = vmatmul.mubr.f32.gmra.mrb[0].mxu0 %v3253
      %v3255 = vpop.f32.mrb[0].mxu0
      %v3256 = vadd.f32 %v3101, %v3255
      %v3257 = vpop.f32.mrb[0].mxu0
      %v3258 = vadd.f32 %v3103, %v3257
      %3259 = vmatprep.mubr.f32.mxu0 0.0
      %v3260 = vand.u32 %v2157, 4294901760
      %3261 = vmatmul.mubr.f32.gmra.mrb[0].mxu0 %v3260
      %v3262 = vpop.f32.mrb[0].mxu0
      %v3263 = vadd.f32 %v3108, %v3262
      %v3264 = vpop.f32.mrb[0].mxu0
      %v3265 = vadd.f32 %v3110, %v3264
      %3266 = vmatprep.mubr.f32.mxu0 0.0
      %v3267 = vand.u32 %v2160, 4294901760
      %3268 = vmatmul.mubr.f32.gmra.mrb[0].mxu0 %v3267
      %v3269 = vpop.f32.mrb[0].mxu0
      %v3270 = vadd.f32 %v3115, %v3269
      %v3271 = vpop.f32.mrb[0].mxu0
      %v3272 = vadd.f32 %v3117, %v3271
      %3273 = vmatprep.mubr.f32.mxu0 0.0
      %v3274 = vand.u32 %v2163, 4294901760
      %3275 = vmatmul.mubr.f32.gmra.mrb[0].mxu0 %v3274
      %v3276 = vpop.f32.mrb[0].mxu0
      %v3277 = vadd.f32 %v3122, %v3276
      %v3278 = vpop.f32.mrb[0].mxu0
      %v3279 = vadd.f32 %v3124, %v3278
      %3280 = vmatprep.mubr.f32.mxu0 0.0
      %v3281 = vand.u32 %v2166, 4294901760
      %3282 = vmatmul.mubr.f32.gmra.mrb[0].mxu0 %v3281
      %v3283 = vpop.f32.mrb[0].mxu0
      %v3284 = vadd.f32 %v3129, %v3283
      %v3285 = vpop.f32.mrb[0].mxu0
      %v3286 = vadd.f32 %v3131, %v3285
      %3287 = vmatprep.mubr.f32.mxu0 0.0
      %v3288 = vand.u32 %v2169, 4294901760
      %3289 = vmatmul.mubr.f32.gmra.mrb[0].mxu0 %v3288
      %v3290 = vpop.f32.mrb[0].mxu0
      %v3291 = vadd.f32 %v3136, %v3290
      %v3292 = vpop.f32.mrb[0].mxu0
      %v3293 = vadd.f32 %v3138, %v3292
      %3294 = vmatprep.mubr.f32.mxu0 0.0
      %v3295 = vand.u32 %v2172, 4294901760
      %3296 = vmatmul.mubr.f32.gmra.mrb[0].mxu0 %v3295
      %v3297 = vpop.f32.mrb[0].mxu0
      %v3298 = vadd.f32 %v3143, %v3297
      %v3299 = vpop.f32.mrb[0].mxu0
      %v3300 = vadd.f32 %v3145, %v3299
      %3301 = vmatprep.mubr.f32.mxu0 0.0
      %v3302 = vand.u32 %v2175, 4294901760
      %3303 = vmatmul.mubr.f32.gmra.mrb[0].mxu0 %v3302
      %v3304 = vpop.f32.mrb[0].mxu0
      %v3305 = vadd.f32 %v3150, %v3304
      %v3306 = vpop.f32.mrb[0].mxu0
      %v3307 = vadd.f32 %v3152, %v3306
      %3308 = vmatprep.mubr.f32.mxu0 0.0
      %v3309 = vand.u32 %v2178, 4294901760
      %3310 = vmatmul.mubr.f32.gmra.mrb[0].mxu0 %v3309
      %v3311 = vpop.f32.mrb[0].mxu0
      %v3312 = vadd.f32 %v3157, %v3311
      %v3313 = vpop.f32.mrb[0].mxu0
      %v3314 = vadd.f32 %v3159, %v3313
      %3315 = vmatprep.mubr.f32.mxu0 0.0
      %v3316 = vand.u32 %v2181, 4294901760
      %3317 = vmatmul.mubr.f32.gmra.mrb[0].mxu0 %v3316
      %v3318 = vpop.f32.mrb[0].mxu0
      %v3319 = vadd.f32 %v3164, %v3318
      %v3320 = vpop.f32.mrb[0].mxu0
      %v3321 = vadd.f32 %v3166, %v3320
      %3322 = vdwg.mxu0
      %v3323 = vmul.f32 %v3256, %v3256
      %v3324 = vmul.f32 %v3258, %v3258
      %v3325 = vmul.f32 %v3263, %v3263
      %v3326 = vmul.f32 %v3265, %v3265
      %v3327 = vmul.f32 %v3270, %v3270
      %v3328 = vmul.f32 %v3272, %v3272
      %v3329 = vmul.f32 %v3277, %v3277
      %v3330 = vmul.f32 %v3279, %v3279
      %v3331 = vmul.f32 %v3256, %v3270
      %v3332 = vmul.f32 %v3258, %v3272
      %v3333 = vmul.f32 %v3263, %v3277
      %v3334 = vmul.f32 %v3265, %v3279
      %v3335 = vsub.f32 %v3284, %v3323
      %v3336 = vsub.f32 %v3286, %v3324
      %v3337 = vsub.f32 %v3291, %v3325
      %v3338 = vsub.f32 %v3293, %v3326
      %v3339 = vsub.f32 %v3298, %v3327
      %v3340 = vsub.f32 %v3300, %v3328
      %v3341 = vsub.f32 %v3305, %v3329
      %v3342 = vsub.f32 %v3307, %v3330
      %v3343 = vsub.f32 %v3312, %v3331
      %v3344 = vsub.f32 %v3314, %v3332
      %v3345 = vsub.f32 %v3319, %v3333
      %v3346 = vsub.f32 %v3321, %v3334
      %v3347 = vmul.f32 %v3331, 2.0
      %v3348 = vmul.f32 %v3332, 2.0
      %v3349 = vmul.f32 %v3333, 2.0
      %v3350 = vmul.f32 %v3334, 2.0
      %v3351 = vadd.f32 %v3347, 0.0001
      %v3352 = vadd.f32 %v3348, 0.0001
      %v3353 = vadd.f32 %v3349, 0.0001
      %v3354 = vadd.f32 %v3350, 0.0001
      %v3355 = vmul.f32 %v3343, 2.0
      %v3356 = vmul.f32 %v3344, 2.0
      %v3357 = vmul.f32 %v3345, 2.0
      %v3358 = vmul.f32 %v3346, 2.0
      %v3359 = vadd.f32 %v3355, 0.0009
      %v3360 = vadd.f32 %v3356, 0.0009
      %v3361 = vadd.f32 %v3357, 0.0009
      %v3362 = vadd.f32 %v3358, 0.0009
      %v3363 = vmul.f32 %v3351, %v3359
      %v3364 = vmul.f32 %v3352, %v3360
      %v3365 = vmul.f32 %v3353, %v3361
      %v3366 = vmul.f32 %v3354, %v3362
      %v3367 = vadd.f32 %v3323, %v3327
      %v3368 = vadd.f32 %v3324, %v3328
      %v3369 = vadd.f32 %v3325, %v3329
      %v3370 = vadd.f32 %v3326, %v3330
      %v3371 = vadd.f32 %v3367, 0.0001
      %v3372 = vadd.f32 %v3368, 0.0001
      %v3373 = vadd.f32 %v3369, 0.0001
      %v3374 = vadd.f32 %v3370, 0.0001
      %v3375 = vadd.f32 %v3335, %v3339
      %v3376 = vadd.f32 %v3336, %v3340
      %v3377 = vadd.f32 %v3337, %v3341
      %v3378 = vadd.f32 %v3338, %v3342
      %v3379 = vadd.f32 %v3375, 0.0009
      %v3380 = vadd.f32 %v3376, 0.0009
      %v3381 = vadd.f32 %v3377, 0.0009
      %v3382 = vadd.f32 %v3378, 0.0009
      %v3383 = vmul.f32 %v3371, %v3379
      %v3384 = vmul.f32 %v3372, %v3380
      %v3385 = vmul.f32 %v3373, %v3381
      %v3386 = vmul.f32 %v3374, %v3382
      %v3387 = vrcp.pop %v3383
      %v3388 = vmul.f32 %v3363, %v3387
      %v3389 = vrcp.pop %v3384
      %v3390 = vmul.f32 %v3364, %v3389
      %v3391 = vrcp.pop %v3385
      %v3392 = vmul.f32 %v3365, %v3391
      %v3393 = vrcp.pop %v3386
      %v3394 = vmul.f32 %v3366, %v3393
      %v3395 = vadd.f32 %v3388, %v3390
      %v3396 = vadd.f32 %v3395, %v3392
      %v3397 = vadd.f32 %v3396, %v3394
      %3398 = vadd.xlane.f32.xlu0 %v3397
      %v3399 = vpop.xlane.xlu0 %3398
      %v3400 = vrot.slane %v3399, 4
      %v3401 = vadd.f32 %v3399, %v3400
      %v3402 = vrot.slane %v3401, 2
      %v3403 = vadd.f32 %v3401, %v3402
      %v3404 = vrot.slane %v3403, 1
      %v3405 = vadd.f32 %v3403, %v3404
      %s3406 = vtos %v3405
      %v3407 = vstv %s3406
      %3408 = vst [vmem:[%s215] sm:$0xff] %v3407
      %p3409 = scmp.lt.s32.totalorder %s15, 1
      %s3410 = scalar_select %p3409, %s15, 1
      %s3411 = smul.addr %s3410, 8
      %s3412 = scalar_lea.vmem %s4, %s3411
      // Predicated region
      $region37: #{_lambda_.1} parent=35 // pred_check
        %p3413 = pneg %p127
      $region38: #{_lambda_.1} parent=35 // pred_check_branch
        %3415 = sbr.rel (%p3413) target = $region40
      $region39: #{_lambda_.1} parent=35 // pred_region
        _
      $region40: #{_lambda_.1} parent=35 // pred_fallthru
        _
    $region36: #{_lambda_.1} parent=5 // pred_fallthru
      _
    %p3416 = scmp.le.s32.totalorder 2, %s10
    // Predicated region
    $region41: #{_lambda_.1} parent=5 // pred_check
      %p3417 = pneg %p3416
    $region42: #{_lambda_.1} parent=5 // pred_check_branch
      %3419 = sbr.rel (%p3417) target = $region44
    $region43: #{_lambda_.1} parent=5 // pred_region
      %s3420 = ssub.s32 %s10, 2
      // Predicated region
      $region45: #{_lambda_.1} parent=43 // pred_check
        %p3421 = pneg %p133
      $region46: #{_lambda_.1} parent=43 // pred_check_branch
        %3423 = sbr.rel (%p3421) target = $region48
      $region47: #{_lambda_.1} parent=43 // pred_region
        %p3424 = scmp.lt.s32.totalorder %s16, 1
        %s3425 = scalar_select %p3424, %s16, 1
        %s3426 = smul.addr %s3425, 8
        %s3427 = scalar_lea.vmem %s4, %s3426
      $region48: #{_lambda_.1} parent=43 // pred_fallthru
        _
    $region44: #{_lambda_.1} parent=5 // pred_fallthru
      _
  $region6: #{_lambda_.1} parent=0 // loop_footer
    %s14 = sadd.s32 1, %s10
  $region7: #{_lambda_.1} parent=0 // loop_footer_branch
    %9 = sbr.rel target = $region3
  $region8: #{_lambda_.1} parent=0 // loop_exit
    _

</llo_original>
